<compile_context>
chip_gen: v6e
topology: v6e:2x2x1
jax: 0.10.0
libtpu: 0.0.40
codegen_flags: <defaults>
</compile_context>

<pallas_src>
import functools

import jax
import jax.numpy as jnp
from jax import lax
from jax.experimental import pallas as pl
from jax.experimental.pallas import tpu as pltpu

# -------------------- model hyper-parameters (from __init__) ----------------
NUM_INPUTS = 16
NUM_HIDDEN = 32
NUM_OUTPUTS = 4
NUM_LAYERS = 4            # => 4 hidden (Linear -> Leaky) blocks + 1 output block
BETA_LIF = 0.8
THRESHOLD = 1.0

BATCH = 8
TIMESTEPS = 8


def _leaky_step(x, mem, beta, thr):
    """snn.Leaky step (subtract reset). Reset uses PREVIOUS mem, spike the new."""
    reset = (mem > thr).astype(jnp.float32)
    mem_new = beta * mem + x - reset * thr
    spk = (mem_new > thr).astype(jnp.float32)
    return spk, mem_new


def _kernel(timesteps, num_hidden_layers,
            data_ref,
            w0_ref, b0_ref, w1_ref, b1_ref, w2_ref, b2_ref,
            w3_ref, b3_ref, w4_ref, b4_ref,
            beta_h_ref, thr_h_ref, beta_o_ref, thr_o_ref,
            spk_out_ref):
    """Single-invocation kernel: all timesteps, everything resident in VMEM."""
    # ---- hoist all parameters out of the time loop (read once into vregs) ----
    w_refs = (w0_ref, w1_ref, w2_ref, w3_ref)
    b_refs = (b0_ref, b1_ref, b2_ref, b3_ref)
    hidden = []
    for li in range(num_hidden_layers):
        hidden.append((
            w_refs[li][...],                          # (in, H)
            b_refs[li][...],                          # (1, H)
            jnp.clip(beta_h_ref[li], 0.0, 1.0),       # (1, H)  snntorch clamps beta
            thr_h_ref[li],                            # (1, H)
        ))
    w_out = w4_ref[...]                               # (H, No)
    b_out = b4_ref[...]                               # (1, No)
    beta_o = jnp.clip(beta_o_ref[...], 0.0, 1.0)      # (1, No)
    thr_o = thr_o_ref[...]                            # (1, No)

    batch = data_ref.shape[1]
    hid = w_out.shape[0]
    n_out = w_out.shape[1]

    # init_leaky(): zero membrane potentials, carried as values (registers).
    mem_h0 = tuple(jnp.zeros((batch, hid), jnp.float32)
                   for _ in range(num_hidden_layers))
    mem_o0 = jnp.zeros((batch, n_out), jnp.float32)

    def step(t, carry):
        mem_h, mem_o = carry
        x = data_ref[t]                               # (B, num_inputs)
        new_mem_h = []
        for li in range(num_hidden_layers):           # static layer loop
            w, b, beta, thr = hidden[li]
            z = jnp.dot(x, w, preferred_element_type=jnp.float32) + b
            x, m = _leaky_step(z, mem_h[li], beta, thr)
            new_mem_h.append(m)
        z = jnp.dot(x, w_out, preferred_element_type=jnp.float32) + b_out
        spk, mem_o = _leaky_step(z, mem_o, beta_o, thr_o)
        spk_out_ref[t] = spk                          # (B, num_outputs)
        return tuple(new_mem_h), mem_o

    # Fully unrolled in-kernel time loop (T = 8): state carry over time is a
    # true dependence, but cross-timestep ILP across layers is exposed.
    lax.fori_loop(0, timesteps, step, (mem_h0, mem_o0), unroll=True)


def rdl_snn_forward(data, params):
    """data: (T, B, num_inputs) f32; params dict. Returns (T, B, num_outputs)."""
    T, B, _ = data.shape
    No = params["w4"].shape[1]

    vmem = pl.BlockSpec(memory_space=pltpu.MemorySpace.VMEM)
    kernel = functools.partial(_kernel, T, NUM_LAYERS)

    return pl.pallas_call(
        kernel,
        out_shape=jax.ShapeDtypeStruct((T, B, No), jnp.float32),
        in_specs=[vmem] * 15,
        out_specs=vmem,
    )(data,
      params["w0"], params["b0"], params["w1"], params["b1"],
      params["w2"], params["b2"], params["w3"], params["b3"],
      params["w4"], params["b4"],
      params["beta_h"], params["thr_h"], params["beta_o"], params["thr_o"])


def reference_forward(data, params):
    """Pure-JAX reference mirroring the PyTorch forward, for validation."""
    T, B, _ = data.shape
    H = params["w0"].shape[1]
    No = params["w4"].shape[1]
    ws = [params[f"w{i}"] for i in range(NUM_LAYERS + 1)]
    bs = [params[f"b{i}"] for i in range(NUM_LAYERS + 1)]
    mem_h = [jnp.zeros((B, H), jnp.float32) for _ in range(NUM_LAYERS)]
    mem_o = jnp.zeros((B, No), jnp.float32)
    spk_rec = []
    for t in range(T):
        x = data[t]
        for li in range(NUM_LAYERS):
            z = x @ ws[li] + bs[li]
            beta = jnp.clip(params["beta_h"][li], 0.0, 1.0)
            x, mem_h[li] = _leaky_step(z, mem_h[li], beta, params["thr_h"][li])
        z = x @ ws[NUM_LAYERS] + bs[NUM_LAYERS]
        beta_o = jnp.clip(params["beta_o"], 0.0, 1.0)
        x, mem_o = _leaky_step(z, mem_o, beta_o, params["thr_o"])
        spk_rec.append(x)
    return jnp.stack(spk_rec)


def init_params(key):
    """Deterministic synthetic parameters (shapes from the module __init__)."""
    keys = jax.random.split(key, 10)
    dims = [(NUM_INPUTS, NUM_HIDDEN)] \
         + [(NUM_HIDDEN, NUM_HIDDEN)] * (NUM_LAYERS - 1) \
         + [(NUM_HIDDEN, NUM_OUTPUTS)]
    params = {}
    for i, (fan_in, fan_out) in enumerate(dims):
        scale = 1.0 / jnp.sqrt(jnp.float32(fan_in))
        params[f"w{i}"] = (jax.random.normal(keys[2 * i], (fan_in, fan_out),
                                             jnp.float32) * scale)
        params[f"b{i}"] = (jax.random.normal(keys[2 * i + 1], (1, fan_out),
                                             jnp.float32) * 0.1)
    # random_learning=False => constant per-neuron beta / threshold vectors
    # (one learnable vector per Leaky layer; all initialized identically).
    params["beta_h"] = jnp.full((NUM_LAYERS, 1, NUM_HIDDEN), BETA_LIF, jnp.float32)
    params["thr_h"] = jnp.full((NUM_LAYERS, 1, NUM_HIDDEN), THRESHOLD, jnp.float32)
    params["beta_o"] = jnp.full((1, NUM_OUTPUTS), BETA_LIF, jnp.float32)
    params["thr_o"] = jnp.full((1, NUM_OUTPUTS), THRESHOLD, jnp.float32)
    return params


if __name__ == "__main__":
    key = jax.random.PRNGKey(0)
    k_data, k_param = jax.random.split(key)

    # Scale input up so some neurons actually spike.
    data = jax.random.normal(
        k_data, (TIMESTEPS, BATCH, NUM_INPUTS), jnp.float32) * 2.0
    params = init_params(k_param)

    spk = rdl_snn_forward(data, params)
    spk = jax.block_until_ready(spk)

    ref = reference_forward(data, params)
    assert spk.shape == (TIMESTEPS, BATCH, NUM_OUTPUTS)
    assert jnp.allclose(spk, ref, atol=1e-5), "mismatch vs pure-JAX reference"

    print("KERNEL_OK")
</pallas_src>

<mosaic_0001>
module attributes {stable_mosaic.version = 11 : i64} {
  func.func @_kernel(%arg0: memref<8x8x16xf32, #tpu.memory_space<vmem>>, %arg1: memref<16x32xf32, #tpu.memory_space<vmem>>, %arg2: memref<1x32xf32, #tpu.memory_space<vmem>>, %arg3: memref<32x32xf32, #tpu.memory_space<vmem>>, %arg4: memref<1x32xf32, #tpu.memory_space<vmem>>, %arg5: memref<32x32xf32, #tpu.memory_space<vmem>>, %arg6: memref<1x32xf32, #tpu.memory_space<vmem>>, %arg7: memref<32x32xf32, #tpu.memory_space<vmem>>, %arg8: memref<1x32xf32, #tpu.memory_space<vmem>>, %arg9: memref<32x4xf32, #tpu.memory_space<vmem>>, %arg10: memref<1x4xf32, #tpu.memory_space<vmem>>, %arg11: memref<4x1x32xf32, #tpu.memory_space<vmem>>, %arg12: memref<4x1x32xf32, #tpu.memory_space<vmem>>, %arg13: memref<1x4xf32, #tpu.memory_space<vmem>>, %arg14: memref<1x4xf32, #tpu.memory_space<vmem>>, %arg15: memref<8x8x4xf32, #tpu.memory_space<vmem>>) attributes {dimension_semantics = [], scalar_prefetch = 0 : i64, scratch_operands = 0 : i64, tpu.core_type = #tpu.core_type<tc>} {
    %c0 = arith.constant 0 : index
    %c0_0 = arith.constant 0 : index
    %0 = vector.load %arg1[%c0, %c0_0] : memref<16x32xf32, #tpu.memory_space<vmem>>, vector<16x32xf32>
    %c0_1 = arith.constant 0 : index
    %c0_2 = arith.constant 0 : index
    %1 = vector.load %arg2[%c0_1, %c0_2] : memref<1x32xf32, #tpu.memory_space<vmem>>, vector<1x32xf32>
    %c0_3 = arith.constant 0 : index
    %c0_4 = arith.constant 0 : index
    %c0_5 = arith.constant 0 : index
    %2 = vector.load %arg11[%c0_3, %c0_4, %c0_5] : memref<4x1x32xf32, #tpu.memory_space<vmem>>, vector<1x1x32xf32>
    %3 = vector.shape_cast %2 : vector<1x1x32xf32> to vector<1x32xf32>
    %cst = arith.constant 0.000000e+00 : f32
    %cst_6 = arith.constant 1.000000e+00 : f32
    %4 = vector.broadcast %cst : f32 to vector<1x32xf32>
    %5 = arith.maximumf %4, %3 : vector<1x32xf32>
    %6 = vector.broadcast %cst_6 : f32 to vector<1x32xf32>
    %7 = arith.minimumf %6, %5 : vector<1x32xf32>
    %c0_7 = arith.constant 0 : index
    %c0_8 = arith.constant 0 : index
    %c0_9 = arith.constant 0 : index
    %8 = vector.load %arg12[%c0_7, %c0_8, %c0_9] : memref<4x1x32xf32, #tpu.memory_space<vmem>>, vector<1x1x32xf32>
    %9 = vector.shape_cast %8 : vector<1x1x32xf32> to vector<1x32xf32>
    %c0_10 = arith.constant 0 : index
    %c0_11 = arith.constant 0 : index
    %10 = vector.load %arg3[%c0_10, %c0_11] : memref<32x32xf32, #tpu.memory_space<vmem>>, vector<32x32xf32>
    %c0_12 = arith.constant 0 : index
    %c0_13 = arith.constant 0 : index
    %11 = vector.load %arg4[%c0_12, %c0_13] : memref<1x32xf32, #tpu.memory_space<vmem>>, vector<1x32xf32>
    %c1 = arith.constant 1 : index
    %c0_14 = arith.constant 0 : index
    %c0_15 = arith.constant 0 : index
    %12 = vector.load %arg11[%c1, %c0_14, %c0_15] : memref<4x1x32xf32, #tpu.memory_space<vmem>>, vector<1x1x32xf32>
    %13 = vector.shape_cast %12 : vector<1x1x32xf32> to vector<1x32xf32>
    %cst_16 = arith.constant 0.000000e+00 : f32
    %cst_17 = arith.constant 1.000000e+00 : f32
    %14 = vector.broadcast %cst_16 : f32 to vector<1x32xf32>
    %15 = arith.maximumf %14, %13 : vector<1x32xf32>
    %16 = vector.broadcast %cst_17 : f32 to vector<1x32xf32>
    %17 = arith.minimumf %16, %15 : vector<1x32xf32>
    %c1_18 = arith.constant 1 : index
    %c0_19 = arith.constant 0 : index
    %c0_20 = arith.constant 0 : index
    %18 = vector.load %arg12[%c1_18, %c0_19, %c0_20] : memref<4x1x32xf32, #tpu.memory_space<vmem>>, vector<1x1x32xf32>
    %19 = vector.shape_cast %18 : vector<1x1x32xf32> to vector<1x32xf32>
    %c0_21 = arith.constant 0 : index
    %c0_22 = arith.constant 0 : index
    %20 = vector.load %arg5[%c0_21, %c0_22] : memref<32x32xf32, #tpu.memory_space<vmem>>, vector<32x32xf32>
    %c0_23 = arith.constant 0 : index
    %c0_24 = arith.constant 0 : index
    %21 = vector.load %arg6[%c0_23, %c0_24] : memref<1x32xf32, #tpu.memory_space<vmem>>, vector<1x32xf32>
    %c2 = arith.constant 2 : index
    %c0_25 = arith.constant 0 : index
    %c0_26 = arith.constant 0 : index
    %22 = vector.load %arg11[%c2, %c0_25, %c0_26] : memref<4x1x32xf32, #tpu.memory_space<vmem>>, vector<1x1x32xf32>
    %23 = vector.shape_cast %22 : vector<1x1x32xf32> to vector<1x32xf32>
    %cst_27 = arith.constant 0.000000e+00 : f32
    %cst_28 = arith.constant 1.000000e+00 : f32
    %24 = vector.broadcast %cst_27 : f32 to vector<1x32xf32>
    %25 = arith.maximumf %24, %23 : vector<1x32xf32>
    %26 = vector.broadcast %cst_28 : f32 to vector<1x32xf32>
    %27 = arith.minimumf %26, %25 : vector<1x32xf32>
    %c2_29 = arith.constant 2 : index
    %c0_30 = arith.constant 0 : index
    %c0_31 = arith.constant 0 : index
    %28 = vector.load %arg12[%c2_29, %c0_30, %c0_31] : memref<4x1x32xf32, #tpu.memory_space<vmem>>, vector<1x1x32xf32>
    %29 = vector.shape_cast %28 : vector<1x1x32xf32> to vector<1x32xf32>
    %c0_32 = arith.constant 0 : index
    %c0_33 = arith.constant 0 : index
    %30 = vector.load %arg7[%c0_32, %c0_33] : memref<32x32xf32, #tpu.memory_space<vmem>>, vector<32x32xf32>
    %c0_34 = arith.constant 0 : index
    %c0_35 = arith.constant 0 : index
    %31 = vector.load %arg8[%c0_34, %c0_35] : memref<1x32xf32, #tpu.memory_space<vmem>>, vector<1x32xf32>
    %c3 = arith.constant 3 : index
    %c0_36 = arith.constant 0 : index
    %c0_37 = arith.constant 0 : index
    %32 = vector.load %arg11[%c3, %c0_36, %c0_37] : memref<4x1x32xf32, #tpu.memory_space<vmem>>, vector<1x1x32xf32>
    %33 = vector.shape_cast %32 : vector<1x1x32xf32> to vector<1x32xf32>
    %cst_38 = arith.constant 0.000000e+00 : f32
    %cst_39 = arith.constant 1.000000e+00 : f32
    %34 = vector.broadcast %cst_38 : f32 to vector<1x32xf32>
    %35 = arith.maximumf %34, %33 : vector<1x32xf32>
    %36 = vector.broadcast %cst_39 : f32 to vector<1x32xf32>
    %37 = arith.minimumf %36, %35 : vector<1x32xf32>
    %c3_40 = arith.constant 3 : index
    %c0_41 = arith.constant 0 : index
    %c0_42 = arith.constant 0 : index
    %38 = vector.load %arg12[%c3_40, %c0_41, %c0_42] : memref<4x1x32xf32, #tpu.memory_space<vmem>>, vector<1x1x32xf32>
    %39 = vector.shape_cast %38 : vector<1x1x32xf32> to vector<1x32xf32>
    %c0_43 = arith.constant 0 : index
    %c0_44 = arith.constant 0 : index
    %40 = vector.load %arg9[%c0_43, %c0_44] : memref<32x4xf32, #tpu.memory_space<vmem>>, vector<32x4xf32>
    %c0_45 = arith.constant 0 : index
    %c0_46 = arith.constant 0 : index
    %41 = vector.load %arg10[%c0_45, %c0_46] : memref<1x4xf32, #tpu.memory_space<vmem>>, vector<1x4xf32>
    %c0_47 = arith.constant 0 : index
    %c0_48 = arith.constant 0 : index
    %42 = vector.load %arg13[%c0_47, %c0_48] : memref<1x4xf32, #tpu.memory_space<vmem>>, vector<1x4xf32>
    %cst_49 = arith.constant 0.000000e+00 : f32
    %cst_50 = arith.constant 1.000000e+00 : f32
    %43 = vector.broadcast %cst_49 : f32 to vector<1x4xf32>
    %44 = arith.maximumf %43, %42 : vector<1x4xf32>
    %45 = vector.broadcast %cst_50 : f32 to vector<1x4xf32>
    %46 = arith.minimumf %45, %44 : vector<1x4xf32>
    %c0_51 = arith.constant 0 : index
    %c0_52 = arith.constant 0 : index
    %47 = vector.load %arg14[%c0_51, %c0_52] : memref<1x4xf32, #tpu.memory_space<vmem>>, vector<1x4xf32>
    %cst_53 = arith.constant 0.000000e+00 : f32
    %48 = vector.broadcast %cst_53 : f32 to vector<8x32xf32>
    %cst_54 = arith.constant 0.000000e+00 : f32
    %49 = vector.broadcast %cst_54 : f32 to vector<8x32xf32>
    %cst_55 = arith.constant 0.000000e+00 : f32
    %50 = vector.broadcast %cst_55 : f32 to vector<8x32xf32>
    %cst_56 = arith.constant 0.000000e+00 : f32
    %51 = vector.broadcast %cst_56 : f32 to vector<8x32xf32>
    %cst_57 = arith.constant 0.000000e+00 : f32
    %52 = vector.broadcast %cst_57 : f32 to vector<8x4xf32>
    %c0_i32 = arith.constant 0 : i32
    %53 = arith.index_cast %c0_i32 : i32 to index
    %c0_58 = arith.constant 0 : index
    %c0_59 = arith.constant 0 : index
    %54 = vector.load %arg0[%53, %c0_58, %c0_59] : memref<8x8x16xf32, #tpu.memory_space<vmem>>, vector<1x8x16xf32>
    %55 = vector.shape_cast %54 : vector<1x8x16xf32> to vector<8x16xf32>
    %cst_60 = arith.constant dense<0.000000e+00> : vector<8x32xf32>
    %56 = tpu.matmul %55, %0, %cst_60 {dimension_numbers = #tpu.dot_dimension_numbers<[1], [0], [0], [1], [0, 0, 1, 1], [], []>} : vector<8x16xf32>, vector<16x32xf32>, vector<8x32xf32> -> vector<8x32xf32>
    %57 = vector.broadcast %1 : vector<1x32xf32> to vector<8x32xf32>
    %58 = arith.addf %56, %57 : vector<8x32xf32>
    %59 = vector.broadcast %9 : vector<1x32xf32> to vector<8x32xf32>
    %60 = arith.cmpf ogt, %48, %59 : vector<8x32xf32>
    %61 = arith.extui %60 : vector<8x32xi1> to vector<8x32xi32>
    %62 = arith.sitofp %61 : vector<8x32xi32> to vector<8x32xf32>
    %63 = vector.broadcast %7 : vector<1x32xf32> to vector<8x32xf32>
    %64 = arith.mulf %63, %48 : vector<8x32xf32>
    %65 = arith.addf %64, %58 : vector<8x32xf32>
    %66 = vector.broadcast %9 : vector<1x32xf32> to vector<8x32xf32>
    %67 = arith.mulf %62, %66 : vector<8x32xf32>
    %68 = arith.subf %65, %67 : vector<8x32xf32>
    %69 = vector.broadcast %9 : vector<1x32xf32> to vector<8x32xf32>
    %70 = arith.cmpf ogt, %68, %69 : vector<8x32xf32>
    %71 = arith.extui %70 : vector<8x32xi1> to vector<8x32xi32>
    %72 = arith.sitofp %71 : vector<8x32xi32> to vector<8x32xf32>
    %cst_61 = arith.constant dense<0.000000e+00> : vector<8x32xf32>
    %73 = tpu.matmul %72, %10, %cst_61 {dimension_numbers = #tpu.dot_dimension_numbers<[1], [0], [0], [1], [0, 0, 1, 1], [], []>} : vector<8x32xf32>, vector<32x32xf32>, vector<8x32xf32> -> vector<8x32xf32>
    %74 = vector.broadcast %11 : vector<1x32xf32> to vector<8x32xf32>
    %75 = arith.addf %73, %74 : vector<8x32xf32>
    %76 = vector.broadcast %19 : vector<1x32xf32> to vector<8x32xf32>
    %77 = arith.cmpf ogt, %49, %76 : vector<8x32xf32>
    %78 = arith.extui %77 : vector<8x32xi1> to vector<8x32xi32>
    %79 = arith.sitofp %78 : vector<8x32xi32> to vector<8x32xf32>
    %80 = vector.broadcast %17 : vector<1x32xf32> to vector<8x32xf32>
    %81 = arith.mulf %80, %49 : vector<8x32xf32>
    %82 = arith.addf %81, %75 : vector<8x32xf32>
    %83 = vector.broadcast %19 : vector<1x32xf32> to vector<8x32xf32>
    %84 = arith.mulf %79, %83 : vector<8x32xf32>
    %85 = arith.subf %82, %84 : vector<8x32xf32>
    %86 = vector.broadcast %19 : vector<1x32xf32> to vector<8x32xf32>
    %87 = arith.cmpf ogt, %85, %86 : vector<8x32xf32>
    %88 = arith.extui %87 : vector<8x32xi1> to vector<8x32xi32>
    %89 = arith.sitofp %88 : vector<8x32xi32> to vector<8x32xf32>
    %cst_62 = arith.constant dense<0.000000e+00> : vector<8x32xf32>
    %90 = tpu.matmul %89, %20, %cst_62 {dimension_numbers = #tpu.dot_dimension_numbers<[1], [0], [0], [1], [0, 0, 1, 1], [], []>} : vector<8x32xf32>, vector<32x32xf32>, vector<8x32xf32> -> vector<8x32xf32>
    %91 = vector.broadcast %21 : vector<1x32xf32> to vector<8x32xf32>
    %92 = arith.addf %90, %91 : vector<8x32xf32>
    %93 = vector.broadcast %29 : vector<1x32xf32> to vector<8x32xf32>
    %94 = arith.cmpf ogt, %50, %93 : vector<8x32xf32>
    %95 = arith.extui %94 : vector<8x32xi1> to vector<8x32xi32>
    %96 = arith.sitofp %95 : vector<8x32xi32> to vector<8x32xf32>
    %97 = vector.broadcast %27 : vector<1x32xf32> to vector<8x32xf32>
    %98 = arith.mulf %97, %50 : vector<8x32xf32>
    %99 = arith.addf %98, %92 : vector<8x32xf32>
    %100 = vector.broadcast %29 : vector<1x32xf32> to vector<8x32xf32>
    %101 = arith.mulf %96, %100 : vector<8x32xf32>
    %102 = arith.subf %99, %101 : vector<8x32xf32>
    %103 = vector.broadcast %29 : vector<1x32xf32> to vector<8x32xf32>
    %104 = arith.cmpf ogt, %102, %103 : vector<8x32xf32>
    %105 = arith.extui %104 : vector<8x32xi1> to vector<8x32xi32>
    %106 = arith.sitofp %105 : vector<8x32xi32> to vector<8x32xf32>
    %cst_63 = arith.constant dense<0.000000e+00> : vector<8x32xf32>
    %107 = tpu.matmul %106, %30, %cst_63 {dimension_numbers = #tpu.dot_dimension_numbers<[1], [0], [0], [1], [0, 0, 1, 1], [], []>} : vector<8x32xf32>, vector<32x32xf32>, vector<8x32xf32> -> vector<8x32xf32>
    %108 = vector.broadcast %31 : vector<1x32xf32> to vector<8x32xf32>
    %109 = arith.addf %107, %108 : vector<8x32xf32>
    %110 = vector.broadcast %39 : vector<1x32xf32> to vector<8x32xf32>
    %111 = arith.cmpf ogt, %51, %110 : vector<8x32xf32>
    %112 = arith.extui %111 : vector<8x32xi1> to vector<8x32xi32>
    %113 = arith.sitofp %112 : vector<8x32xi32> to vector<8x32xf32>
    %114 = vector.broadcast %37 : vector<1x32xf32> to vector<8x32xf32>
    %115 = arith.mulf %114, %51 : vector<8x32xf32>
    %116 = arith.addf %115, %109 : vector<8x32xf32>
    %117 = vector.broadcast %39 : vector<1x32xf32> to vector<8x32xf32>
    %118 = arith.mulf %113, %117 : vector<8x32xf32>
    %119 = arith.subf %116, %118 : vector<8x32xf32>
    %120 = vector.broadcast %39 : vector<1x32xf32> to vector<8x32xf32>
    %121 = arith.cmpf ogt, %119, %120 : vector<8x32xf32>
    %122 = arith.extui %121 : vector<8x32xi1> to vector<8x32xi32>
    %123 = arith.sitofp %122 : vector<8x32xi32> to vector<8x32xf32>
    %cst_64 = arith.constant dense<0.000000e+00> : vector<8x4xf32>
    %124 = tpu.matmul %123, %40, %cst_64 {dimension_numbers = #tpu.dot_dimension_numbers<[1], [0], [0], [1], [0, 0, 1, 1], [], []>} : vector<8x32xf32>, vector<32x4xf32>, vector<8x4xf32> -> vector<8x4xf32>
    %125 = vector.broadcast %41 : vector<1x4xf32> to vector<8x4xf32>
    %126 = arith.addf %124, %125 : vector<8x4xf32>
    %127 = vector.broadcast %47 : vector<1x4xf32> to vector<8x4xf32>
    %128 = arith.cmpf ogt, %52, %127 : vector<8x4xf32>
    %129 = arith.extui %128 : vector<8x4xi1> to vector<8x4xi32>
    %130 = arith.sitofp %129 : vector<8x4xi32> to vector<8x4xf32>
    %131 = vector.broadcast %46 : vector<1x4xf32> to vector<8x4xf32>
    %132 = arith.mulf %131, %52 : vector<8x4xf32>
    %133 = arith.addf %132, %126 : vector<8x4xf32>
    %134 = vector.broadcast %47 : vector<1x4xf32> to vector<8x4xf32>
    %135 = arith.mulf %130, %134 : vector<8x4xf32>
    %136 = arith.subf %133, %135 : vector<8x4xf32>
    %137 = vector.broadcast %47 : vector<1x4xf32> to vector<8x4xf32>
    %138 = arith.cmpf ogt, %136, %137 : vector<8x4xf32>
    %139 = arith.extui %138 : vector<8x4xi1> to vector<8x4xi32>
    %140 = arith.sitofp %139 : vector<8x4xi32> to vector<8x4xf32>
    %141 = arith.index_cast %c0_i32 : i32 to index
    %c0_65 = arith.constant 0 : index
    %c0_66 = arith.constant 0 : index
    %142 = vector.load %arg15[%141, %c0_65, %c0_66] : memref<8x8x4xf32, #tpu.memory_space<vmem>>, vector<1x8x4xf32>
    %143 = vector.shape_cast %142 : vector<1x8x4xf32> to vector<8x4xf32>
    %144 = vector.shape_cast %140 : vector<8x4xf32> to vector<1x8x4xf32>
    tpu.vector_store %arg15[%141, %c0_65, %c0_66], %144 {strides = array<i32>} : memref<8x8x4xf32, #tpu.memory_space<vmem>>, vector<1x8x4xf32>,
    %c1_i32 = arith.constant 1 : i32
    %145 = arith.index_cast %c1_i32 : i32 to index
    %c0_67 = arith.constant 0 : index
    %c0_68 = arith.constant 0 : index
    %146 = vector.load %arg0[%145, %c0_67, %c0_68] : memref<8x8x16xf32, #tpu.memory_space<vmem>>, vector<1x8x16xf32>
    %147 = vector.shape_cast %146 : vector<1x8x16xf32> to vector<8x16xf32>
    %cst_69 = arith.constant dense<0.000000e+00> : vector<8x32xf32>
    %148 = tpu.matmul %147, %0, %cst_69 {dimension_numbers = #tpu.dot_dimension_numbers<[1], [0], [0], [1], [0, 0, 1, 1], [], []>} : vector<8x16xf32>, vector<16x32xf32>, vector<8x32xf32> -> vector<8x32xf32>
    %149 = vector.broadcast %1 : vector<1x32xf32> to vector<8x32xf32>
    %150 = arith.addf %148, %149 : vector<8x32xf32>
    %151 = vector.broadcast %9 : vector<1x32xf32> to vector<8x32xf32>
    %152 = arith.cmpf ogt, %68, %151 : vector<8x32xf32>
    %153 = arith.extui %152 : vector<8x32xi1> to vector<8x32xi32>
    %154 = arith.sitofp %153 : vector<8x32xi32> to vector<8x32xf32>
    %155 = vector.broadcast %7 : vector<1x32xf32> to vector<8x32xf32>
    %156 = arith.mulf %155, %68 : vector<8x32xf32>
    %157 = arith.addf %156, %150 : vector<8x32xf32>
    %158 = vector.broadcast %9 : vector<1x32xf32> to vector<8x32xf32>
    %159 = arith.mulf %154, %158 : vector<8x32xf32>
    %160 = arith.subf %157, %159 : vector<8x32xf32>
    %161 = vector.broadcast %9 : vector<1x32xf32> to vector<8x32xf32>
    %162 = arith.cmpf ogt, %160, %161 : vector<8x32xf32>
    %163 = arith.extui %162 : vector<8x32xi1> to vector<8x32xi32>
    %164 = arith.sitofp %163 : vector<8x32xi32> to vector<8x32xf32>
    %cst_70 = arith.constant dense<0.000000e+00> : vector<8x32xf32>
    %165 = tpu.matmul %164, %10, %cst_70 {dimension_numbers = #tpu.dot_dimension_numbers<[1], [0], [0], [1], [0, 0, 1, 1], [], []>} : vector<8x32xf32>, vector<32x32xf32>, vector<8x32xf32> -> vector<8x32xf32>
    %166 = vector.broadcast %11 : vector<1x32xf32> to vector<8x32xf32>
    %167 = arith.addf %165, %166 : vector<8x32xf32>
    %168 = vector.broadcast %19 : vector<1x32xf32> to vector<8x32xf32>
    %169 = arith.cmpf ogt, %85, %168 : vector<8x32xf32>
    %170 = arith.extui %169 : vector<8x32xi1> to vector<8x32xi32>
    %171 = arith.sitofp %170 : vector<8x32xi32> to vector<8x32xf32>
    %172 = vector.broadcast %17 : vector<1x32xf32> to vector<8x32xf32>
    %173 = arith.mulf %172, %85 : vector<8x32xf32>
    %174 = arith.addf %173, %167 : vector<8x32xf32>
    %175 = vector.broadcast %19 : vector<1x32xf32> to vector<8x32xf32>
    %176 = arith.mulf %171, %175 : vector<8x32xf32>
    %177 = arith.subf %174, %176 : vector<8x32xf32>
    %178 = vector.broadcast %19 : vector<1x32xf32> to vector<8x32xf32>
    %179 = arith.cmpf ogt, %177, %178 : vector<8x32xf32>
    %180 = arith.extui %179 : vector<8x32xi1> to vector<8x32xi32>
    %181 = arith.sitofp %180 : vector<8x32xi32> to vector<8x32xf32>
    %cst_71 = arith.constant dense<0.000000e+00> : vector<8x32xf32>
    %182 = tpu.matmul %181, %20, %cst_71 {dimension_numbers = #tpu.dot_dimension_numbers<[1], [0], [0], [1], [0, 0, 1, 1], [], []>} : vector<8x32xf32>, vector<32x32xf32>, vector<8x32xf32> -> vector<8x32xf32>
    %183 = vector.broadcast %21 : vector<1x32xf32> to vector<8x32xf32>
    %184 = arith.addf %182, %183 : vector<8x32xf32>
    %185 = vector.broadcast %29 : vector<1x32xf32> to vector<8x32xf32>
    %186 = arith.cmpf ogt, %102, %185 : vector<8x32xf32>
    %187 = arith.extui %186 : vector<8x32xi1> to vector<8x32xi32>
    %188 = arith.sitofp %187 : vector<8x32xi32> to vector<8x32xf32>
    %189 = vector.broadcast %27 : vector<1x32xf32> to vector<8x32xf32>
    %190 = arith.mulf %189, %102 : vector<8x32xf32>
    %191 = arith.addf %190, %184 : vector<8x32xf32>
    %192 = vector.broadcast %29 : vector<1x32xf32> to vector<8x32xf32>
    %193 = arith.mulf %188, %192 : vector<8x32xf32>
    %194 = arith.subf %191, %193 : vector<8x32xf32>
    %195 = vector.broadcast %29 : vector<1x32xf32> to vector<8x32xf32>
    %196 = arith.cmpf ogt, %194, %195 : vector<8x32xf32>
    %197 = arith.extui %196 : vector<8x32xi1> to vector<8x32xi32>
    %198 = arith.sitofp %197 : vector<8x32xi32> to vector<8x32xf32>
    %cst_72 = arith.constant dense<0.000000e+00> : vector<8x32xf32>
    %199 = tpu.matmul %198, %30, %cst_72 {dimension_numbers = #tpu.dot_dimension_numbers<[1], [0], [0], [1], [0, 0, 1, 1], [], []>} : vector<8x32xf32>, vector<32x32xf32>, vector<8x32xf32> -> vector<8x32xf32>
    %200 = vector.broadcast %31 : vector<1x32xf32> to vector<8x32xf32>
    %201 = arith.addf %199, %200 : vector<8x32xf32>
    %202 = vector.broadcast %39 : vector<1x32xf32> to vector<8x32xf32>
    %203 = arith.cmpf ogt, %119, %202 : vector<8x32xf32>
    %204 = arith.extui %203 : vector<8x32xi1> to vector<8x32xi32>
    %205 = arith.sitofp %204 : vector<8x32xi32> to vector<8x32xf32>
    %206 = vector.broadcast %37 : vector<1x32xf32> to vector<8x32xf32>
    %207 = arith.mulf %206, %119 : vector<8x32xf32>
    %208 = arith.addf %207, %201 : vector<8x32xf32>
    %209 = vector.broadcast %39 : vector<1x32xf32> to vector<8x32xf32>
    %210 = arith.mulf %205, %209 : vector<8x32xf32>
    %211 = arith.subf %208, %210 : vector<8x32xf32>
    %212 = vector.broadcast %39 : vector<1x32xf32> to vector<8x32xf32>
    %213 = arith.cmpf ogt, %211, %212 : vector<8x32xf32>
    %214 = arith.extui %213 : vector<8x32xi1> to vector<8x32xi32>
    %215 = arith.sitofp %214 : vector<8x32xi32> to vector<8x32xf32>
    %cst_73 = arith.constant dense<0.000000e+00> : vector<8x4xf32>
    %216 = tpu.matmul %215, %40, %cst_73 {dimension_numbers = #tpu.dot_dimension_numbers<[1], [0], [0], [1], [0, 0, 1, 1], [], []>} : vector<8x32xf32>, vector<32x4xf32>, vector<8x4xf32> -> vector<8x4xf32>
    %217 = vector.broadcast %41 : vector<1x4xf32> to vector<8x4xf32>
    %218 = arith.addf %216, %217 : vector<8x4xf32>
    %219 = vector.broadcast %47 : vector<1x4xf32> to vector<8x4xf32>
    %220 = arith.cmpf ogt, %136, %219 : vector<8x4xf32>
    %221 = arith.extui %220 : vector<8x4xi1> to vector<8x4xi32>
    %222 = arith.sitofp %221 : vector<8x4xi32> to vector<8x4xf32>
    %223 = vector.broadcast %46 : vector<1x4xf32> to vector<8x4xf32>
    %224 = arith.mulf %223, %136 : vector<8x4xf32>
    %225 = arith.addf %224, %218 : vector<8x4xf32>
    %226 = vector.broadcast %47 : vector<1x4xf32> to vector<8x4xf32>
    %227 = arith.mulf %222, %226 : vector<8x4xf32>
    %228 = arith.subf %225, %227 : vector<8x4xf32>
    %229 = vector.broadcast %47 : vector<1x4xf32> to vector<8x4xf32>
    %230 = arith.cmpf ogt, %228, %229 : vector<8x4xf32>
    %231 = arith.extui %230 : vector<8x4xi1> to vector<8x4xi32>
    %232 = arith.sitofp %231 : vector<8x4xi32> to vector<8x4xf32>
    %233 = arith.index_cast %c1_i32 : i32 to index
    %c0_74 = arith.constant 0 : index
    %c0_75 = arith.constant 0 : index
    %234 = vector.load %arg15[%233, %c0_74, %c0_75] : memref<8x8x4xf32, #tpu.memory_space<vmem>>, vector<1x8x4xf32>
    %235 = vector.shape_cast %234 : vector<1x8x4xf32> to vector<8x4xf32>
    %236 = vector.shape_cast %232 : vector<8x4xf32> to vector<1x8x4xf32>
    tpu.vector_store %arg15[%233, %c0_74, %c0_75], %236 {strides = array<i32>} : memref<8x8x4xf32, #tpu.memory_space<vmem>>, vector<1x8x4xf32>,
    %c2_i32 = arith.constant 2 : i32
    %237 = arith.index_cast %c2_i32 : i32 to index
    %c0_76 = arith.constant 0 : index
    %c0_77 = arith.constant 0 : index
    %238 = vector.load %arg0[%237, %c0_76, %c0_77] : memref<8x8x16xf32, #tpu.memory_space<vmem>>, vector<1x8x16xf32>
    %239 = vector.shape_cast %238 : vector<1x8x16xf32> to vector<8x16xf32>
    %cst_78 = arith.constant dense<0.000000e+00> : vector<8x32xf32>
    %240 = tpu.matmul %239, %0, %cst_78 {dimension_numbers = #tpu.dot_dimension_numbers<[1], [0], [0], [1], [0, 0, 1, 1], [], []>} : vector<8x16xf32>, vector<16x32xf32>, vector<8x32xf32> -> vector<8x32xf32>
    %241 = vector.broadcast %1 : vector<1x32xf32> to vector<8x32xf32>
    %242 = arith.addf %240, %241 : vector<8x32xf32>
    %243 = vector.broadcast %9 : vector<1x32xf32> to vector<8x32xf32>
    %244 = arith.cmpf ogt, %160, %243 : vector<8x32xf32>
    %245 = arith.extui %244 : vector<8x32xi1> to vector<8x32xi32>
    %246 = arith.sitofp %245 : vector<8x32xi32> to vector<8x32xf32>
    %247 = vector.broadcast %7 : vector<1x32xf32> to vector<8x32xf32>
    %248 = arith.mulf %247, %160 : vector<8x32xf32>
    %249 = arith.addf %248, %242 : vector<8x32xf32>
    %250 = vector.broadcast %9 : vector<1x32xf32> to vector<8x32xf32>
    %251 = arith.mulf %246, %250 : vector<8x32xf32>
    %252 = arith.subf %249, %251 : vector<8x32xf32>
    %253 = vector.broadcast %9 : vector<1x32xf32> to vector<8x32xf32>
    %254 = arith.cmpf ogt, %252, %253 : vector<8x32xf32>
    %255 = arith.extui %254 : vector<8x32xi1> to vector<8x32xi32>
    %256 = arith.sitofp %255 : vector<8x32xi32> to vector<8x32xf32>
    %cst_79 = arith.constant dense<0.000000e+00> : vector<8x32xf32>
    %257 = tpu.matmul %256, %10, %cst_79 {dimension_numbers = #tpu.dot_dimension_numbers<[1], [0], [0], [1], [0, 0, 1, 1], [], []>} : vector<8x32xf32>, vector<32x32xf32>, vector<8x32xf32> -> vector<8x32xf32>
    %258 = vector.broadcast %11 : vector<1x32xf32> to vector<8x32xf32>
    %259 = arith.addf %257, %258 : vector<8x32xf32>
    %260 = vector.broadcast %19 : vector<1x32xf32> to vector<8x32xf32>
    %261 = arith.cmpf ogt, %177, %260 : vector<8x32xf32>
    %262 = arith.extui %261 : vector<8x32xi1> to vector<8x32xi32>
    %263 = arith.sitofp %262 : vector<8x32xi32> to vector<8x32xf32>
    %264 = vector.broadcast %17 : vector<1x32xf32> to vector<8x32xf32>
    %265 = arith.mulf %264, %177 : vector<8x32xf32>
    %266 = arith.addf %265, %259 : vector<8x32xf32>
    %267 = vector.broadcast %19 : vector<1x32xf32> to vector<8x32xf32>
    %268 = arith.mulf %263, %267 : vector<8x32xf32>
    %269 = arith.subf %266, %268 : vector<8x32xf32>
    %270 = vector.broadcast %19 : vector<1x32xf32> to vector<8x32xf32>
    %271 = arith.cmpf ogt, %269, %270 : vector<8x32xf32>
    %272 = arith.extui %271 : vector<8x32xi1> to vector<8x32xi32>
    %273 = arith.sitofp %272 : vector<8x32xi32> to vector<8x32xf32>
    %cst_80 = arith.constant dense<0.000000e+00> : vector<8x32xf32>
    %274 = tpu.matmul %273, %20, %cst_80 {dimension_numbers = #tpu.dot_dimension_numbers<[1], [0], [0], [1], [0, 0, 1, 1], [], []>} : vector<8x32xf32>, vector<32x32xf32>, vector<8x32xf32> -> vector<8x32xf32>
    %275 = vector.broadcast %21 : vector<1x32xf32> to vector<8x32xf32>
    %276 = arith.addf %274, %275 : vector<8x32xf32>
    %277 = vector.broadcast %29 : vector<1x32xf32> to vector<8x32xf32>
    %278 = arith.cmpf ogt, %194, %277 : vector<8x32xf32>
    %279 = arith.extui %278 : vector<8x32xi1> to vector<8x32xi32>
    %280 = arith.sitofp %279 : vector<8x32xi32> to vector<8x32xf32>
    %281 = vector.broadcast %27 : vector<1x32xf32> to vector<8x32xf32>
    %282 = arith.mulf %281, %194 : vector<8x32xf32>
    %283 = arith.addf %282, %276 : vector<8x32xf32>
    %284 = vector.broadcast %29 : vector<1x32xf32> to vector<8x32xf32>
    %285 = arith.mulf %280, %284 : vector<8x32xf32>
    %286 = arith.subf %283, %285 : vector<8x32xf32>
    %287 = vector.broadcast %29 : vector<1x32xf32> to vector<8x32xf32>
    %288 = arith.cmpf ogt, %286, %287 : vector<8x32xf32>
    %289 = arith.extui %288 : vector<8x32xi1> to vector<8x32xi32>
    %290 = arith.sitofp %289 : vector<8x32xi32> to vector<8x32xf32>
    %cst_81 = arith.constant dense<0.000000e+00> : vector<8x32xf32>
    %291 = tpu.matmul %290, %30, %cst_81 {dimension_numbers = #tpu.dot_dimension_numbers<[1], [0], [0], [1], [0, 0, 1, 1], [], []>} : vector<8x32xf32>, vector<32x32xf32>, vector<8x32xf32> -> vector<8x32xf32>
    %292 = vector.broadcast %31 : vector<1x32xf32> to vector<8x32xf32>
    %293 = arith.addf %291, %292 : vector<8x32xf32>
    %294 = vector.broadcast %39 : vector<1x32xf32> to vector<8x32xf32>
    %295 = arith.cmpf ogt, %211, %294 : vector<8x32xf32>
    %296 = arith.extui %295 : vector<8x32xi1> to vector<8x32xi32>
    %297 = arith.sitofp %296 : vector<8x32xi32> to vector<8x32xf32>
    %298 = vector.broadcast %37 : vector<1x32xf32> to vector<8x32xf32>
    %299 = arith.mulf %298, %211 : vector<8x32xf32>
    %300 = arith.addf %299, %293 : vector<8x32xf32>
    %301 = vector.broadcast %39 : vector<1x32xf32> to vector<8x32xf32>
    %302 = arith.mulf %297, %301 : vector<8x32xf32>
    %303 = arith.subf %300, %302 : vector<8x32xf32>
    %304 = vector.broadcast %39 : vector<1x32xf32> to vector<8x32xf32>
    %305 = arith.cmpf ogt, %303, %304 : vector<8x32xf32>
    %306 = arith.extui %305 : vector<8x32xi1> to vector<8x32xi32>
    %307 = arith.sitofp %306 : vector<8x32xi32> to vector<8x32xf32>
    %cst_82 = arith.constant dense<0.000000e+00> : vector<8x4xf32>
    %308 = tpu.matmul %307, %40, %cst_82 {dimension_numbers = #tpu.dot_dimension_numbers<[1], [0], [0], [1], [0, 0, 1, 1], [], []>} : vector<8x32xf32>, vector<32x4xf32>, vector<8x4xf32> -> vector<8x4xf32>
    %309 = vector.broadcast %41 : vector<1x4xf32> to vector<8x4xf32>
    %310 = arith.addf %308, %309 : vector<8x4xf32>
    %311 = vector.broadcast %47 : vector<1x4xf32> to vector<8x4xf32>
    %312 = arith.cmpf ogt, %228, %311 : vector<8x4xf32>
    %313 = arith.extui %312 : vector<8x4xi1> to vector<8x4xi32>
    %314 = arith.sitofp %313 : vector<8x4xi32> to vector<8x4xf32>
    %315 = vector.broadcast %46 : vector<1x4xf32> to vector<8x4xf32>
    %316 = arith.mulf %315, %228 : vector<8x4xf32>
    %317 = arith.addf %316, %310 : vector<8x4xf32>
    %318 = vector.broadcast %47 : vector<1x4xf32> to vector<8x4xf32>
    %319 = arith.mulf %314, %318 : vector<8x4xf32>
    %320 = arith.subf %317, %319 : vector<8x4xf32>
    %321 = vector.broadcast %47 : vector<1x4xf32> to vector<8x4xf32>
    %322 = arith.cmpf ogt, %320, %321 : vector<8x4xf32>
    %323 = arith.extui %322 : vector<8x4xi1> to vector<8x4xi32>
    %324 = arith.sitofp %323 : vector<8x4xi32> to vector<8x4xf32>
    %325 = arith.index_cast %c2_i32 : i32 to index
    %c0_83 = arith.constant 0 : index
    %c0_84 = arith.constant 0 : index
    %326 = vector.load %arg15[%325, %c0_83, %c0_84] : memref<8x8x4xf32, #tpu.memory_space<vmem>>, vector<1x8x4xf32>
    %327 = vector.shape_cast %326 : vector<1x8x4xf32> to vector<8x4xf32>
    %328 = vector.shape_cast %324 : vector<8x4xf32> to vector<1x8x4xf32>
    tpu.vector_store %arg15[%325, %c0_83, %c0_84], %328 {strides = array<i32>} : memref<8x8x4xf32, #tpu.memory_space<vmem>>, vector<1x8x4xf32>,
    %c3_i32 = arith.constant 3 : i32
    %329 = arith.index_cast %c3_i32 : i32 to index
    %c0_85 = arith.constant 0 : index
    %c0_86 = arith.constant 0 : index
    %330 = vector.load %arg0[%329, %c0_85, %c0_86] : memref<8x8x16xf32, #tpu.memory_space<vmem>>, vector<1x8x16xf32>
    %331 = vector.shape_cast %330 : vector<1x8x16xf32> to vector<8x16xf32>
    %cst_87 = arith.constant dense<0.000000e+00> : vector<8x32xf32>
    %332 = tpu.matmul %331, %0, %cst_87 {dimension_numbers = #tpu.dot_dimension_numbers<[1], [0], [0], [1], [0, 0, 1, 1], [], []>} : vector<8x16xf32>, vector<16x32xf32>, vector<8x32xf32> -> vector<8x32xf32>
    %333 = vector.broadcast %1 : vector<1x32xf32> to vector<8x32xf32>
    %334 = arith.addf %332, %333 : vector<8x32xf32>
    %335 = vector.broadcast %9 : vector<1x32xf32> to vector<8x32xf32>
    %336 = arith.cmpf ogt, %252, %335 : vector<8x32xf32>
    %337 = arith.extui %336 : vector<8x32xi1> to vector<8x32xi32>
    %338 = arith.sitofp %337 : vector<8x32xi32> to vector<8x32xf32>
    %339 = vector.broadcast %7 : vector<1x32xf32> to vector<8x32xf32>
    %340 = arith.mulf %339, %252 : vector<8x32xf32>
    %341 = arith.addf %340, %334 : vector<8x32xf32>
    %342 = vector.broadcast %9 : vector<1x32xf32> to vector<8x32xf32>
    %343 = arith.mulf %338, %342 : vector<8x32xf32>
    %344 = arith.subf %341, %343 : vector<8x32xf32>
    %345 = vector.broadcast %9 : vector<1x32xf32> to vector<8x32xf32>
    %346 = arith.cmpf ogt, %344, %345 : vector<8x32xf32>
    %347 = arith.extui %346 : vector<8x32xi1> to vector<8x32xi32>
    %348 = arith.sitofp %347 : vector<8x32xi32> to vector<8x32xf32>
    %cst_88 = arith.constant dense<0.000000e+00> : vector<8x32xf32>
    %349 = tpu.matmul %348, %10, %cst_88 {dimension_numbers = #tpu.dot_dimension_numbers<[1], [0], [0], [1], [0, 0, 1, 1], [], []>} : vector<8x32xf32>, vector<32x32xf32>, vector<8x32xf32> -> vector<8x32xf32>
    %350 = vector.broadcast %11 : vector<1x32xf32> to vector<8x32xf32>
    %351 = arith.addf %349, %350 : vector<8x32xf32>
    %352 = vector.broadcast %19 : vector<1x32xf32> to vector<8x32xf32>
    %353 = arith.cmpf ogt, %269, %352 : vector<8x32xf32>
    %354 = arith.extui %353 : vector<8x32xi1> to vector<8x32xi32>
    %355 = arith.sitofp %354 : vector<8x32xi32> to vector<8x32xf32>
    %356 = vector.broadcast %17 : vector<1x32xf32> to vector<8x32xf32>
    %357 = arith.mulf %356, %269 : vector<8x32xf32>
    %358 = arith.addf %357, %351 : vector<8x32xf32>
    %359 = vector.broadcast %19 : vector<1x32xf32> to vector<8x32xf32>
    %360 = arith.mulf %355, %359 : vector<8x32xf32>
    %361 = arith.subf %358, %360 : vector<8x32xf32>
    %362 = vector.broadcast %19 : vector<1x32xf32> to vector<8x32xf32>
    %363 = arith.cmpf ogt, %361, %362 : vector<8x32xf32>
    %364 = arith.extui %363 : vector<8x32xi1> to vector<8x32xi32>
    %365 = arith.sitofp %364 : vector<8x32xi32> to vector<8x32xf32>
    %cst_89 = arith.constant dense<0.000000e+00> : vector<8x32xf32>
    %366 = tpu.matmul %365, %20, %cst_89 {dimension_numbers = #tpu.dot_dimension_numbers<[1], [0], [0], [1], [0, 0, 1, 1], [], []>} : vector<8x32xf32>, vector<32x32xf32>, vector<8x32xf32> -> vector<8x32xf32>
    %367 = vector.broadcast %21 : vector<1x32xf32> to vector<8x32xf32>
    %368 = arith.addf %366, %367 : vector<8x32xf32>
    %369 = vector.broadcast %29 : vector<1x32xf32> to vector<8x32xf32>
    %370 = arith.cmpf ogt, %286, %369 : vector<8x32xf32>
    %371 = arith.extui %370 : vector<8x32xi1> to vector<8x32xi32>
    %372 = arith.sitofp %371 : vector<8x32xi32> to vector<8x32xf32>
    %373 = vector.broadcast %27 : vector<1x32xf32> to vector<8x32xf32>
    %374 = arith.mulf %373, %286 : vector<8x32xf32>
    %375 = arith.addf %374, %368 : vector<8x32xf32>
    %376 = vector.broadcast %29 : vector<1x32xf32> to vector<8x32xf32>
    %377 = arith.mulf %372, %376 : vector<8x32xf32>
    %378 = arith.subf %375, %377 : vector<8x32xf32>
    %379 = vector.broadcast %29 : vector<1x32xf32> to vector<8x32xf32>
    %380 = arith.cmpf ogt, %378, %379 : vector<8x32xf32>
    %381 = arith.extui %380 : vector<8x32xi1> to vector<8x32xi32>
    %382 = arith.sitofp %381 : vector<8x32xi32> to vector<8x32xf32>
    %cst_90 = arith.constant dense<0.000000e+00> : vector<8x32xf32>
    %383 = tpu.matmul %382, %30, %cst_90 {dimension_numbers = #tpu.dot_dimension_numbers<[1], [0], [0], [1], [0, 0, 1, 1], [], []>} : vector<8x32xf32>, vector<32x32xf32>, vector<8x32xf32> -> vector<8x32xf32>
    %384 = vector.broadcast %31 : vector<1x32xf32> to vector<8x32xf32>
    %385 = arith.addf %383, %384 : vector<8x32xf32>
    %386 = vector.broadcast %39 : vector<1x32xf32> to vector<8x32xf32>
    %387 = arith.cmpf ogt, %303, %386 : vector<8x32xf32>
    %388 = arith.extui %387 : vector<8x32xi1> to vector<8x32xi32>
    %389 = arith.sitofp %388 : vector<8x32xi32> to vector<8x32xf32>
    %390 = vector.broadcast %37 : vector<1x32xf32> to vector<8x32xf32>
    %391 = arith.mulf %390, %303 : vector<8x32xf32>
    %392 = arith.addf %391, %385 : vector<8x32xf32>
    %393 = vector.broadcast %39 : vector<1x32xf32> to vector<8x32xf32>
    %394 = arith.mulf %389, %393 : vector<8x32xf32>
    %395 = arith.subf %392, %394 : vector<8x32xf32>
    %396 = vector.broadcast %39 : vector<1x32xf32> to vector<8x32xf32>
    %397 = arith.cmpf ogt, %395, %396 : vector<8x32xf32>
    %398 = arith.extui %397 : vector<8x32xi1> to vector<8x32xi32>
    %399 = arith.sitofp %398 : vector<8x32xi32> to vector<8x32xf32>
    %cst_91 = arith.constant dense<0.000000e+00> : vector<8x4xf32>
    %400 = tpu.matmul %399, %40, %cst_91 {dimension_numbers = #tpu.dot_dimension_numbers<[1], [0], [0], [1], [0, 0, 1, 1], [], []>} : vector<8x32xf32>, vector<32x4xf32>, vector<8x4xf32> -> vector<8x4xf32>
    %401 = vector.broadcast %41 : vector<1x4xf32> to vector<8x4xf32>
    %402 = arith.addf %400, %401 : vector<8x4xf32>
    %403 = vector.broadcast %47 : vector<1x4xf32> to vector<8x4xf32>
    %404 = arith.cmpf ogt, %320, %403 : vector<8x4xf32>
    %405 = arith.extui %404 : vector<8x4xi1> to vector<8x4xi32>
    %406 = arith.sitofp %405 : vector<8x4xi32> to vector<8x4xf32>
    %407 = vector.broadcast %46 : vector<1x4xf32> to vector<8x4xf32>
    %408 = arith.mulf %407, %320 : vector<8x4xf32>
    %409 = arith.addf %408, %402 : vector<8x4xf32>
    %410 = vector.broadcast %47 : vector<1x4xf32> to vector<8x4xf32>
    %411 = arith.mulf %406, %410 : vector<8x4xf32>
    %412 = arith.subf %409, %411 : vector<8x4xf32>
    %413 = vector.broadcast %47 : vector<1x4xf32> to vector<8x4xf32>
    %414 = arith.cmpf ogt, %412, %413 : vector<8x4xf32>
    %415 = arith.extui %414 : vector<8x4xi1> to vector<8x4xi32>
    %416 = arith.sitofp %415 : vector<8x4xi32> to vector<8x4xf32>
    %417 = arith.index_cast %c3_i32 : i32 to index
    %c0_92 = arith.constant 0 : index
    %c0_93 = arith.constant 0 : index
    %418 = vector.load %arg15[%417, %c0_92, %c0_93] : memref<8x8x4xf32, #tpu.memory_space<vmem>>, vector<1x8x4xf32>
    %419 = vector.shape_cast %418 : vector<1x8x4xf32> to vector<8x4xf32>
    %420 = vector.shape_cast %416 : vector<8x4xf32> to vector<1x8x4xf32>
    tpu.vector_store %arg15[%417, %c0_92, %c0_93], %420 {strides = array<i32>} : memref<8x8x4xf32, #tpu.memory_space<vmem>>, vector<1x8x4xf32>,
    %c4_i32 = arith.constant 4 : i32
    %421 = arith.index_cast %c4_i32 : i32 to index
    %c0_94 = arith.constant 0 : index
    %c0_95 = arith.constant 0 : index
    %422 = vector.load %arg0[%421, %c0_94, %c0_95] : memref<8x8x16xf32, #tpu.memory_space<vmem>>, vector<1x8x16xf32>
    %423 = vector.shape_cast %422 : vector<1x8x16xf32> to vector<8x16xf32>
    %cst_96 = arith.constant dense<0.000000e+00> : vector<8x32xf32>
    %424 = tpu.matmul %423, %0, %cst_96 {dimension_numbers = #tpu.dot_dimension_numbers<[1], [0], [0], [1], [0, 0, 1, 1], [], []>} : vector<8x16xf32>, vector<16x32xf32>, vector<8x32xf32> -> vector<8x32xf32>
    %425 = vector.broadcast %1 : vector<1x32xf32> to vector<8x32xf32>
    %426 = arith.addf %424, %425 : vector<8x32xf32>
    %427 = vector.broadcast %9 : vector<1x32xf32> to vector<8x32xf32>
    %428 = arith.cmpf ogt, %344, %427 : vector<8x32xf32>
    %429 = arith.extui %428 : vector<8x32xi1> to vector<8x32xi32>
    %430 = arith.sitofp %429 : vector<8x32xi32> to vector<8x32xf32>
    %431 = vector.broadcast %7 : vector<1x32xf32> to vector<8x32xf32>
    %432 = arith.mulf %431, %344 : vector<8x32xf32>
    %433 = arith.addf %432, %426 : vector<8x32xf32>
    %434 = vector.broadcast %9 : vector<1x32xf32> to vector<8x32xf32>
    %435 = arith.mulf %430, %434 : vector<8x32xf32>
    %436 = arith.subf %433, %435 : vector<8x32xf32>
    %437 = vector.broadcast %9 : vector<1x32xf32> to vector<8x32xf32>
    %438 = arith.cmpf ogt, %436, %437 : vector<8x32xf32>
    %439 = arith.extui %438 : vector<8x32xi1> to vector<8x32xi32>
    %440 = arith.sitofp %439 : vector<8x32xi32> to vector<8x32xf32>
    %cst_97 = arith.constant dense<0.000000e+00> : vector<8x32xf32>
    %441 = tpu.matmul %440, %10, %cst_97 {dimension_numbers = #tpu.dot_dimension_numbers<[1], [0], [0], [1], [0, 0, 1, 1], [], []>} : vector<8x32xf32>, vector<32x32xf32>, vector<8x32xf32> -> vector<8x32xf32>
    %442 = vector.broadcast %11 : vector<1x32xf32> to vector<8x32xf32>
    %443 = arith.addf %441, %442 : vector<8x32xf32>
    %444 = vector.broadcast %19 : vector<1x32xf32> to vector<8x32xf32>
    %445 = arith.cmpf ogt, %361, %444 : vector<8x32xf32>
    %446 = arith.extui %445 : vector<8x32xi1> to vector<8x32xi32>
    %447 = arith.sitofp %446 : vector<8x32xi32> to vector<8x32xf32>
    %448 = vector.broadcast %17 : vector<1x32xf32> to vector<8x32xf32>
    %449 = arith.mulf %448, %361 : vector<8x32xf32>
    %450 = arith.addf %449, %443 : vector<8x32xf32>
    %451 = vector.broadcast %19 : vector<1x32xf32> to vector<8x32xf32>
    %452 = arith.mulf %447, %451 : vector<8x32xf32>
    %453 = arith.subf %450, %452 : vector<8x32xf32>
    %454 = vector.broadcast %19 : vector<1x32xf32> to vector<8x32xf32>
    %455 = arith.cmpf ogt, %453, %454 : vector<8x32xf32>
    %456 = arith.extui %455 : vector<8x32xi1> to vector<8x32xi32>
    %457 = arith.sitofp %456 : vector<8x32xi32> to vector<8x32xf32>
    %cst_98 = arith.constant dense<0.000000e+00> : vector<8x32xf32>
    %458 = tpu.matmul %457, %20, %cst_98 {dimension_numbers = #tpu.dot_dimension_numbers<[1], [0], [0], [1], [0, 0, 1, 1], [], []>} : vector<8x32xf32>, vector<32x32xf32>, vector<8x32xf32> -> vector<8x32xf32>
    %459 = vector.broadcast %21 : vector<1x32xf32> to vector<8x32xf32>
    %460 = arith.addf %458, %459 : vector<8x32xf32>
    %461 = vector.broadcast %29 : vector<1x32xf32> to vector<8x32xf32>
    %462 = arith.cmpf ogt, %378, %461 : vector<8x32xf32>
    %463 = arith.extui %462 : vector<8x32xi1> to vector<8x32xi32>
    %464 = arith.sitofp %463 : vector<8x32xi32> to vector<8x32xf32>
    %465 = vector.broadcast %27 : vector<1x32xf32> to vector<8x32xf32>
    %466 = arith.mulf %465, %378 : vector<8x32xf32>
    %467 = arith.addf %466, %460 : vector<8x32xf32>
    %468 = vector.broadcast %29 : vector<1x32xf32> to vector<8x32xf32>
    %469 = arith.mulf %464, %468 : vector<8x32xf32>
    %470 = arith.subf %467, %469 : vector<8x32xf32>
    %471 = vector.broadcast %29 : vector<1x32xf32> to vector<8x32xf32>
    %472 = arith.cmpf ogt, %470, %471 : vector<8x32xf32>
    %473 = arith.extui %472 : vector<8x32xi1> to vector<8x32xi32>
    %474 = arith.sitofp %473 : vector<8x32xi32> to vector<8x32xf32>
    %cst_99 = arith.constant dense<0.000000e+00> : vector<8x32xf32>
    %475 = tpu.matmul %474, %30, %cst_99 {dimension_numbers = #tpu.dot_dimension_numbers<[1], [0], [0], [1], [0, 0, 1, 1], [], []>} : vector<8x32xf32>, vector<32x32xf32>, vector<8x32xf32> -> vector<8x32xf32>
    %476 = vector.broadcast %31 : vector<1x32xf32> to vector<8x32xf32>
    %477 = arith.addf %475, %476 : vector<8x32xf32>
    %478 = vector.broadcast %39 : vector<1x32xf32> to vector<8x32xf32>
    %479 = arith.cmpf ogt, %395, %478 : vector<8x32xf32>
    %480 = arith.extui %479 : vector<8x32xi1> to vector<8x32xi32>
    %481 = arith.sitofp %480 : vector<8x32xi32> to vector<8x32xf32>
    %482 = vector.broadcast %37 : vector<1x32xf32> to vector<8x32xf32>
    %483 = arith.mulf %482, %395 : vector<8x32xf32>
    %484 = arith.addf %483, %477 : vector<8x32xf32>
    %485 = vector.broadcast %39 : vector<1x32xf32> to vector<8x32xf32>
    %486 = arith.mulf %481, %485 : vector<8x32xf32>
    %487 = arith.subf %484, %486 : vector<8x32xf32>
    %488 = vector.broadcast %39 : vector<1x32xf32> to vector<8x32xf32>
    %489 = arith.cmpf ogt, %487, %488 : vector<8x32xf32>
    %490 = arith.extui %489 : vector<8x32xi1> to vector<8x32xi32>
    %491 = arith.sitofp %490 : vector<8x32xi32> to vector<8x32xf32>
    %cst_100 = arith.constant dense<0.000000e+00> : vector<8x4xf32>
    %492 = tpu.matmul %491, %40, %cst_100 {dimension_numbers = #tpu.dot_dimension_numbers<[1], [0], [0], [1], [0, 0, 1, 1], [], []>} : vector<8x32xf32>, vector<32x4xf32>, vector<8x4xf32> -> vector<8x4xf32>
    %493 = vector.broadcast %41 : vector<1x4xf32> to vector<8x4xf32>
    %494 = arith.addf %492, %493 : vector<8x4xf32>
    %495 = vector.broadcast %47 : vector<1x4xf32> to vector<8x4xf32>
    %496 = arith.cmpf ogt, %412, %495 : vector<8x4xf32>
    %497 = arith.extui %496 : vector<8x4xi1> to vector<8x4xi32>
    %498 = arith.sitofp %497 : vector<8x4xi32> to vector<8x4xf32>
    %499 = vector.broadcast %46 : vector<1x4xf32> to vector<8x4xf32>
    %500 = arith.mulf %499, %412 : vector<8x4xf32>
    %501 = arith.addf %500, %494 : vector<8x4xf32>
    %502 = vector.broadcast %47 : vector<1x4xf32> to vector<8x4xf32>
    %503 = arith.mulf %498, %502 : vector<8x4xf32>
    %504 = arith.subf %501, %503 : vector<8x4xf32>
    %505 = vector.broadcast %47 : vector<1x4xf32> to vector<8x4xf32>
    %506 = arith.cmpf ogt, %504, %505 : vector<8x4xf32>
    %507 = arith.extui %506 : vector<8x4xi1> to vector<8x4xi32>
    %508 = arith.sitofp %507 : vector<8x4xi32> to vector<8x4xf32>
    %509 = arith.index_cast %c4_i32 : i32 to index
    %c0_101 = arith.constant 0 : index
    %c0_102 = arith.constant 0 : index
    %510 = vector.load %arg15[%509, %c0_101, %c0_102] : memref<8x8x4xf32, #tpu.memory_space<vmem>>, vector<1x8x4xf32>
    %511 = vector.shape_cast %510 : vector<1x8x4xf32> to vector<8x4xf32>
    %512 = vector.shape_cast %508 : vector<8x4xf32> to vector<1x8x4xf32>
    tpu.vector_store %arg15[%509, %c0_101, %c0_102], %512 {strides = array<i32>} : memref<8x8x4xf32, #tpu.memory_space<vmem>>, vector<1x8x4xf32>,
    %c5_i32 = arith.constant 5 : i32
    %513 = arith.index_cast %c5_i32 : i32 to index
    %c0_103 = arith.constant 0 : index
    %c0_104 = arith.constant 0 : index
    %514 = vector.load %arg0[%513, %c0_103, %c0_104] : memref<8x8x16xf32, #tpu.memory_space<vmem>>, vector<1x8x16xf32>
    %515 = vector.shape_cast %514 : vector<1x8x16xf32> to vector<8x16xf32>
    %cst_105 = arith.constant dense<0.000000e+00> : vector<8x32xf32>
    %516 = tpu.matmul %515, %0, %cst_105 {dimension_numbers = #tpu.dot_dimension_numbers<[1], [0], [0], [1], [0, 0, 1, 1], [], []>} : vector<8x16xf32>, vector<16x32xf32>, vector<8x32xf32> -> vector<8x32xf32>
    %517 = vector.broadcast %1 : vector<1x32xf32> to vector<8x32xf32>
    %518 = arith.addf %516, %517 : vector<8x32xf32>
    %519 = vector.broadcast %9 : vector<1x32xf32> to vector<8x32xf32>
    %520 = arith.cmpf ogt, %436, %519 : vector<8x32xf32>
    %521 = arith.extui %520 : vector<8x32xi1> to vector<8x32xi32>
    %522 = arith.sitofp %521 : vector<8x32xi32> to vector<8x32xf32>
    %523 = vector.broadcast %7 : vector<1x32xf32> to vector<8x32xf32>
    %524 = arith.mulf %523, %436 : vector<8x32xf32>
    %525 = arith.addf %524, %518 : vector<8x32xf32>
    %526 = vector.broadcast %9 : vector<1x32xf32> to vector<8x32xf32>
    %527 = arith.mulf %522, %526 : vector<8x32xf32>
    %528 = arith.subf %525, %527 : vector<8x32xf32>
    %529 = vector.broadcast %9 : vector<1x32xf32> to vector<8x32xf32>
    %530 = arith.cmpf ogt, %528, %529 : vector<8x32xf32>
    %531 = arith.extui %530 : vector<8x32xi1> to vector<8x32xi32>
    %532 = arith.sitofp %531 : vector<8x32xi32> to vector<8x32xf32>
    %cst_106 = arith.constant dense<0.000000e+00> : vector<8x32xf32>
    %533 = tpu.matmul %532, %10, %cst_106 {dimension_numbers = #tpu.dot_dimension_numbers<[1], [0], [0], [1], [0, 0, 1, 1], [], []>} : vector<8x32xf32>, vector<32x32xf32>, vector<8x32xf32> -> vector<8x32xf32>
    %534 = vector.broadcast %11 : vector<1x32xf32> to vector<8x32xf32>
    %535 = arith.addf %533, %534 : vector<8x32xf32>
    %536 = vector.broadcast %19 : vector<1x32xf32> to vector<8x32xf32>
    %537 = arith.cmpf ogt, %453, %536 : vector<8x32xf32>
    %538 = arith.extui %537 : vector<8x32xi1> to vector<8x32xi32>
    %539 = arith.sitofp %538 : vector<8x32xi32> to vector<8x32xf32>
    %540 = vector.broadcast %17 : vector<1x32xf32> to vector<8x32xf32>
    %541 = arith.mulf %540, %453 : vector<8x32xf32>
    %542 = arith.addf %541, %535 : vector<8x32xf32>
    %543 = vector.broadcast %19 : vector<1x32xf32> to vector<8x32xf32>
    %544 = arith.mulf %539, %543 : vector<8x32xf32>
    %545 = arith.subf %542, %544 : vector<8x32xf32>
    %546 = vector.broadcast %19 : vector<1x32xf32> to vector<8x32xf32>
    %547 = arith.cmpf ogt, %545, %546 : vector<8x32xf32>
    %548 = arith.extui %547 : vector<8x32xi1> to vector<8x32xi32>
    %549 = arith.sitofp %548 : vector<8x32xi32> to vector<8x32xf32>
    %cst_107 = arith.constant dense<0.000000e+00> : vector<8x32xf32>
    %550 = tpu.matmul %549, %20, %cst_107 {dimension_numbers = #tpu.dot_dimension_numbers<[1], [0], [0], [1], [0, 0, 1, 1], [], []>} : vector<8x32xf32>, vector<32x32xf32>, vector<8x32xf32> -> vector<8x32xf32>
    %551 = vector.broadcast %21 : vector<1x32xf32> to vector<8x32xf32>
    %552 = arith.addf %550, %551 : vector<8x32xf32>
    %553 = vector.broadcast %29 : vector<1x32xf32> to vector<8x32xf32>
    %554 = arith.cmpf ogt, %470, %553 : vector<8x32xf32>
    %555 = arith.extui %554 : vector<8x32xi1> to vector<8x32xi32>
    %556 = arith.sitofp %555 : vector<8x32xi32> to vector<8x32xf32>
    %557 = vector.broadcast %27 : vector<1x32xf32> to vector<8x32xf32>
    %558 = arith.mulf %557, %470 : vector<8x32xf32>
    %559 = arith.addf %558, %552 : vector<8x32xf32>
    %560 = vector.broadcast %29 : vector<1x32xf32> to vector<8x32xf32>
    %561 = arith.mulf %556, %560 : vector<8x32xf32>
    %562 = arith.subf %559, %561 : vector<8x32xf32>
    %563 = vector.broadcast %29 : vector<1x32xf32> to vector<8x32xf32>
    %564 = arith.cmpf ogt, %562, %563 : vector<8x32xf32>
    %565 = arith.extui %564 : vector<8x32xi1> to vector<8x32xi32>
    %566 = arith.sitofp %565 : vector<8x32xi32> to vector<8x32xf32>
    %cst_108 = arith.constant dense<0.000000e+00> : vector<8x32xf32>
    %567 = tpu.matmul %566, %30, %cst_108 {dimension_numbers = #tpu.dot_dimension_numbers<[1], [0], [0], [1], [0, 0, 1, 1], [], []>} : vector<8x32xf32>, vector<32x32xf32>, vector<8x32xf32> -> vector<8x32xf32>
    %568 = vector.broadcast %31 : vector<1x32xf32> to vector<8x32xf32>
    %569 = arith.addf %567, %568 : vector<8x32xf32>
    %570 = vector.broadcast %39 : vector<1x32xf32> to vector<8x32xf32>
    %571 = arith.cmpf ogt, %487, %570 : vector<8x32xf32>
    %572 = arith.extui %571 : vector<8x32xi1> to vector<8x32xi32>
    %573 = arith.sitofp %572 : vector<8x32xi32> to vector<8x32xf32>
    %574 = vector.broadcast %37 : vector<1x32xf32> to vector<8x32xf32>
    %575 = arith.mulf %574, %487 : vector<8x32xf32>
    %576 = arith.addf %575, %569 : vector<8x32xf32>
    %577 = vector.broadcast %39 : vector<1x32xf32> to vector<8x32xf32>
    %578 = arith.mulf %573, %577 : vector<8x32xf32>
    %579 = arith.subf %576, %578 : vector<8x32xf32>
    %580 = vector.broadcast %39 : vector<1x32xf32> to vector<8x32xf32>
    %581 = arith.cmpf ogt, %579, %580 : vector<8x32xf32>
    %582 = arith.extui %581 : vector<8x32xi1> to vector<8x32xi32>
    %583 = arith.sitofp %582 : vector<8x32xi32> to vector<8x32xf32>
    %cst_109 = arith.constant dense<0.000000e+00> : vector<8x4xf32>
    %584 = tpu.matmul %583, %40, %cst_109 {dimension_numbers = #tpu.dot_dimension_numbers<[1], [0], [0], [1], [0, 0, 1, 1], [], []>} : vector<8x32xf32>, vector<32x4xf32>, vector<8x4xf32> -> vector<8x4xf32>
    %585 = vector.broadcast %41 : vector<1x4xf32> to vector<8x4xf32>
    %586 = arith.addf %584, %585 : vector<8x4xf32>
    %587 = vector.broadcast %47 : vector<1x4xf32> to vector<8x4xf32>
    %588 = arith.cmpf ogt, %504, %587 : vector<8x4xf32>
    %589 = arith.extui %588 : vector<8x4xi1> to vector<8x4xi32>
    %590 = arith.sitofp %589 : vector<8x4xi32> to vector<8x4xf32>
    %591 = vector.broadcast %46 : vector<1x4xf32> to vector<8x4xf32>
    %592 = arith.mulf %591, %504 : vector<8x4xf32>
    %593 = arith.addf %592, %586 : vector<8x4xf32>
    %594 = vector.broadcast %47 : vector<1x4xf32> to vector<8x4xf32>
    %595 = arith.mulf %590, %594 : vector<8x4xf32>
    %596 = arith.subf %593, %595 : vector<8x4xf32>
    %597 = vector.broadcast %47 : vector<1x4xf32> to vector<8x4xf32>
    %598 = arith.cmpf ogt, %596, %597 : vector<8x4xf32>
    %599 = arith.extui %598 : vector<8x4xi1> to vector<8x4xi32>
    %600 = arith.sitofp %599 : vector<8x4xi32> to vector<8x4xf32>
    %601 = arith.index_cast %c5_i32 : i32 to index
    %c0_110 = arith.constant 0 : index
    %c0_111 = arith.constant 0 : index
    %602 = vector.load %arg15[%601, %c0_110, %c0_111] : memref<8x8x4xf32, #tpu.memory_space<vmem>>, vector<1x8x4xf32>
    %603 = vector.shape_cast %602 : vector<1x8x4xf32> to vector<8x4xf32>
    %604 = vector.shape_cast %600 : vector<8x4xf32> to vector<1x8x4xf32>
    tpu.vector_store %arg15[%601, %c0_110, %c0_111], %604 {strides = array<i32>} : memref<8x8x4xf32, #tpu.memory_space<vmem>>, vector<1x8x4xf32>,
    %c6_i32 = arith.constant 6 : i32
    %605 = arith.index_cast %c6_i32 : i32 to index
    %c0_112 = arith.constant 0 : index
    %c0_113 = arith.constant 0 : index
    %606 = vector.load %arg0[%605, %c0_112, %c0_113] : memref<8x8x16xf32, #tpu.memory_space<vmem>>, vector<1x8x16xf32>
    %607 = vector.shape_cast %606 : vector<1x8x16xf32> to vector<8x16xf32>
    %cst_114 = arith.constant dense<0.000000e+00> : vector<8x32xf32>
    %608 = tpu.matmul %607, %0, %cst_114 {dimension_numbers = #tpu.dot_dimension_numbers<[1], [0], [0], [1], [0, 0, 1, 1], [], []>} : vector<8x16xf32>, vector<16x32xf32>, vector<8x32xf32> -> vector<8x32xf32>
    %609 = vector.broadcast %1 : vector<1x32xf32> to vector<8x32xf32>
    %610 = arith.addf %608, %609 : vector<8x32xf32>
    %611 = vector.broadcast %9 : vector<1x32xf32> to vector<8x32xf32>
    %612 = arith.cmpf ogt, %528, %611 : vector<8x32xf32>
    %613 = arith.extui %612 : vector<8x32xi1> to vector<8x32xi32>
    %614 = arith.sitofp %613 : vector<8x32xi32> to vector<8x32xf32>
    %615 = vector.broadcast %7 : vector<1x32xf32> to vector<8x32xf32>
    %616 = arith.mulf %615, %528 : vector<8x32xf32>
    %617 = arith.addf %616, %610 : vector<8x32xf32>
    %618 = vector.broadcast %9 : vector<1x32xf32> to vector<8x32xf32>
    %619 = arith.mulf %614, %618 : vector<8x32xf32>
    %620 = arith.subf %617, %619 : vector<8x32xf32>
    %621 = vector.broadcast %9 : vector<1x32xf32> to vector<8x32xf32>
    %622 = arith.cmpf ogt, %620, %621 : vector<8x32xf32>
    %623 = arith.extui %622 : vector<8x32xi1> to vector<8x32xi32>
    %624 = arith.sitofp %623 : vector<8x32xi32> to vector<8x32xf32>
    %cst_115 = arith.constant dense<0.000000e+00> : vector<8x32xf32>
    %625 = tpu.matmul %624, %10, %cst_115 {dimension_numbers = #tpu.dot_dimension_numbers<[1], [0], [0], [1], [0, 0, 1, 1], [], []>} : vector<8x32xf32>, vector<32x32xf32>, vector<8x32xf32> -> vector<8x32xf32>
    %626 = vector.broadcast %11 : vector<1x32xf32> to vector<8x32xf32>
    %627 = arith.addf %625, %626 : vector<8x32xf32>
    %628 = vector.broadcast %19 : vector<1x32xf32> to vector<8x32xf32>
    %629 = arith.cmpf ogt, %545, %628 : vector<8x32xf32>
    %630 = arith.extui %629 : vector<8x32xi1> to vector<8x32xi32>
    %631 = arith.sitofp %630 : vector<8x32xi32> to vector<8x32xf32>
    %632 = vector.broadcast %17 : vector<1x32xf32> to vector<8x32xf32>
    %633 = arith.mulf %632, %545 : vector<8x32xf32>
    %634 = arith.addf %633, %627 : vector<8x32xf32>
    %635 = vector.broadcast %19 : vector<1x32xf32> to vector<8x32xf32>
    %636 = arith.mulf %631, %635 : vector<8x32xf32>
    %637 = arith.subf %634, %636 : vector<8x32xf32>
    %638 = vector.broadcast %19 : vector<1x32xf32> to vector<8x32xf32>
    %639 = arith.cmpf ogt, %637, %638 : vector<8x32xf32>
    %640 = arith.extui %639 : vector<8x32xi1> to vector<8x32xi32>
    %641 = arith.sitofp %640 : vector<8x32xi32> to vector<8x32xf32>
    %cst_116 = arith.constant dense<0.000000e+00> : vector<8x32xf32>
    %642 = tpu.matmul %641, %20, %cst_116 {dimension_numbers = #tpu.dot_dimension_numbers<[1], [0], [0], [1], [0, 0, 1, 1], [], []>} : vector<8x32xf32>, vector<32x32xf32>, vector<8x32xf32> -> vector<8x32xf32>
    %643 = vector.broadcast %21 : vector<1x32xf32> to vector<8x32xf32>
    %644 = arith.addf %642, %643 : vector<8x32xf32>
    %645 = vector.broadcast %29 : vector<1x32xf32> to vector<8x32xf32>
    %646 = arith.cmpf ogt, %562, %645 : vector<8x32xf32>
    %647 = arith.extui %646 : vector<8x32xi1> to vector<8x32xi32>
    %648 = arith.sitofp %647 : vector<8x32xi32> to vector<8x32xf32>
    %649 = vector.broadcast %27 : vector<1x32xf32> to vector<8x32xf32>
    %650 = arith.mulf %649, %562 : vector<8x32xf32>
    %651 = arith.addf %650, %644 : vector<8x32xf32>
    %652 = vector.broadcast %29 : vector<1x32xf32> to vector<8x32xf32>
    %653 = arith.mulf %648, %652 : vector<8x32xf32>
    %654 = arith.subf %651, %653 : vector<8x32xf32>
    %655 = vector.broadcast %29 : vector<1x32xf32> to vector<8x32xf32>
    %656 = arith.cmpf ogt, %654, %655 : vector<8x32xf32>
    %657 = arith.extui %656 : vector<8x32xi1> to vector<8x32xi32>
    %658 = arith.sitofp %657 : vector<8x32xi32> to vector<8x32xf32>
    %cst_117 = arith.constant dense<0.000000e+00> : vector<8x32xf32>
    %659 = tpu.matmul %658, %30, %cst_117 {dimension_numbers = #tpu.dot_dimension_numbers<[1], [0], [0], [1], [0, 0, 1, 1], [], []>} : vector<8x32xf32>, vector<32x32xf32>, vector<8x32xf32> -> vector<8x32xf32>
    %660 = vector.broadcast %31 : vector<1x32xf32> to vector<8x32xf32>
    %661 = arith.addf %659, %660 : vector<8x32xf32>
    %662 = vector.broadcast %39 : vector<1x32xf32> to vector<8x32xf32>
    %663 = arith.cmpf ogt, %579, %662 : vector<8x32xf32>
    %664 = arith.extui %663 : vector<8x32xi1> to vector<8x32xi32>
    %665 = arith.sitofp %664 : vector<8x32xi32> to vector<8x32xf32>
    %666 = vector.broadcast %37 : vector<1x32xf32> to vector<8x32xf32>
    %667 = arith.mulf %666, %579 : vector<8x32xf32>
    %668 = arith.addf %667, %661 : vector<8x32xf32>
    %669 = vector.broadcast %39 : vector<1x32xf32> to vector<8x32xf32>
    %670 = arith.mulf %665, %669 : vector<8x32xf32>
    %671 = arith.subf %668, %670 : vector<8x32xf32>
    %672 = vector.broadcast %39 : vector<1x32xf32> to vector<8x32xf32>
    %673 = arith.cmpf ogt, %671, %672 : vector<8x32xf32>
    %674 = arith.extui %673 : vector<8x32xi1> to vector<8x32xi32>
    %675 = arith.sitofp %674 : vector<8x32xi32> to vector<8x32xf32>
    %cst_118 = arith.constant dense<0.000000e+00> : vector<8x4xf32>
    %676 = tpu.matmul %675, %40, %cst_118 {dimension_numbers = #tpu.dot_dimension_numbers<[1], [0], [0], [1], [0, 0, 1, 1], [], []>} : vector<8x32xf32>, vector<32x4xf32>, vector<8x4xf32> -> vector<8x4xf32>
    %677 = vector.broadcast %41 : vector<1x4xf32> to vector<8x4xf32>
    %678 = arith.addf %676, %677 : vector<8x4xf32>
    %679 = vector.broadcast %47 : vector<1x4xf32> to vector<8x4xf32>
    %680 = arith.cmpf ogt, %596, %679 : vector<8x4xf32>
    %681 = arith.extui %680 : vector<8x4xi1> to vector<8x4xi32>
    %682 = arith.sitofp %681 : vector<8x4xi32> to vector<8x4xf32>
    %683 = vector.broadcast %46 : vector<1x4xf32> to vector<8x4xf32>
    %684 = arith.mulf %683, %596 : vector<8x4xf32>
    %685 = arith.addf %684, %678 : vector<8x4xf32>
    %686 = vector.broadcast %47 : vector<1x4xf32> to vector<8x4xf32>
    %687 = arith.mulf %682, %686 : vector<8x4xf32>
    %688 = arith.subf %685, %687 : vector<8x4xf32>
    %689 = vector.broadcast %47 : vector<1x4xf32> to vector<8x4xf32>
    %690 = arith.cmpf ogt, %688, %689 : vector<8x4xf32>
    %691 = arith.extui %690 : vector<8x4xi1> to vector<8x4xi32>
    %692 = arith.sitofp %691 : vector<8x4xi32> to vector<8x4xf32>
    %693 = arith.index_cast %c6_i32 : i32 to index
    %c0_119 = arith.constant 0 : index
    %c0_120 = arith.constant 0 : index
    %694 = vector.load %arg15[%693, %c0_119, %c0_120] : memref<8x8x4xf32, #tpu.memory_space<vmem>>, vector<1x8x4xf32>
    %695 = vector.shape_cast %694 : vector<1x8x4xf32> to vector<8x4xf32>
    %696 = vector.shape_cast %692 : vector<8x4xf32> to vector<1x8x4xf32>
    tpu.vector_store %arg15[%693, %c0_119, %c0_120], %696 {strides = array<i32>} : memref<8x8x4xf32, #tpu.memory_space<vmem>>, vector<1x8x4xf32>,
    %c7_i32 = arith.constant 7 : i32
    %697 = arith.index_cast %c7_i32 : i32 to index
    %c0_121 = arith.constant 0 : index
    %c0_122 = arith.constant 0 : index
    %698 = vector.load %arg0[%697, %c0_121, %c0_122] : memref<8x8x16xf32, #tpu.memory_space<vmem>>, vector<1x8x16xf32>
    %699 = vector.shape_cast %698 : vector<1x8x16xf32> to vector<8x16xf32>
    %cst_123 = arith.constant dense<0.000000e+00> : vector<8x32xf32>
    %700 = tpu.matmul %699, %0, %cst_123 {dimension_numbers = #tpu.dot_dimension_numbers<[1], [0], [0], [1], [0, 0, 1, 1], [], []>} : vector<8x16xf32>, vector<16x32xf32>, vector<8x32xf32> -> vector<8x32xf32>
    %701 = vector.broadcast %1 : vector<1x32xf32> to vector<8x32xf32>
    %702 = arith.addf %700, %701 : vector<8x32xf32>
    %703 = vector.broadcast %9 : vector<1x32xf32> to vector<8x32xf32>
    %704 = arith.cmpf ogt, %620, %703 : vector<8x32xf32>
    %705 = arith.extui %704 : vector<8x32xi1> to vector<8x32xi32>
    %706 = arith.sitofp %705 : vector<8x32xi32> to vector<8x32xf32>
    %707 = vector.broadcast %7 : vector<1x32xf32> to vector<8x32xf32>
    %708 = arith.mulf %707, %620 : vector<8x32xf32>
    %709 = arith.addf %708, %702 : vector<8x32xf32>
    %710 = vector.broadcast %9 : vector<1x32xf32> to vector<8x32xf32>
    %711 = arith.mulf %706, %710 : vector<8x32xf32>
    %712 = arith.subf %709, %711 : vector<8x32xf32>
    %713 = vector.broadcast %9 : vector<1x32xf32> to vector<8x32xf32>
    %714 = arith.cmpf ogt, %712, %713 : vector<8x32xf32>
    %715 = arith.extui %714 : vector<8x32xi1> to vector<8x32xi32>
    %716 = arith.sitofp %715 : vector<8x32xi32> to vector<8x32xf32>
    %cst_124 = arith.constant dense<0.000000e+00> : vector<8x32xf32>
    %717 = tpu.matmul %716, %10, %cst_124 {dimension_numbers = #tpu.dot_dimension_numbers<[1], [0], [0], [1], [0, 0, 1, 1], [], []>} : vector<8x32xf32>, vector<32x32xf32>, vector<8x32xf32> -> vector<8x32xf32>
    %718 = vector.broadcast %11 : vector<1x32xf32> to vector<8x32xf32>
    %719 = arith.addf %717, %718 : vector<8x32xf32>
    %720 = vector.broadcast %19 : vector<1x32xf32> to vector<8x32xf32>
    %721 = arith.cmpf ogt, %637, %720 : vector<8x32xf32>
    %722 = arith.extui %721 : vector<8x32xi1> to vector<8x32xi32>
    %723 = arith.sitofp %722 : vector<8x32xi32> to vector<8x32xf32>
    %724 = vector.broadcast %17 : vector<1x32xf32> to vector<8x32xf32>
    %725 = arith.mulf %724, %637 : vector<8x32xf32>
    %726 = arith.addf %725, %719 : vector<8x32xf32>
    %727 = vector.broadcast %19 : vector<1x32xf32> to vector<8x32xf32>
    %728 = arith.mulf %723, %727 : vector<8x32xf32>
    %729 = arith.subf %726, %728 : vector<8x32xf32>
    %730 = vector.broadcast %19 : vector<1x32xf32> to vector<8x32xf32>
    %731 = arith.cmpf ogt, %729, %730 : vector<8x32xf32>
    %732 = arith.extui %731 : vector<8x32xi1> to vector<8x32xi32>
    %733 = arith.sitofp %732 : vector<8x32xi32> to vector<8x32xf32>
    %cst_125 = arith.constant dense<0.000000e+00> : vector<8x32xf32>
    %734 = tpu.matmul %733, %20, %cst_125 {dimension_numbers = #tpu.dot_dimension_numbers<[1], [0], [0], [1], [0, 0, 1, 1], [], []>} : vector<8x32xf32>, vector<32x32xf32>, vector<8x32xf32> -> vector<8x32xf32>
    %735 = vector.broadcast %21 : vector<1x32xf32> to vector<8x32xf32>
    %736 = arith.addf %734, %735 : vector<8x32xf32>
    %737 = vector.broadcast %29 : vector<1x32xf32> to vector<8x32xf32>
    %738 = arith.cmpf ogt, %654, %737 : vector<8x32xf32>
    %739 = arith.extui %738 : vector<8x32xi1> to vector<8x32xi32>
    %740 = arith.sitofp %739 : vector<8x32xi32> to vector<8x32xf32>
    %741 = vector.broadcast %27 : vector<1x32xf32> to vector<8x32xf32>
    %742 = arith.mulf %741, %654 : vector<8x32xf32>
    %743 = arith.addf %742, %736 : vector<8x32xf32>
    %744 = vector.broadcast %29 : vector<1x32xf32> to vector<8x32xf32>
    %745 = arith.mulf %740, %744 : vector<8x32xf32>
    %746 = arith.subf %743, %745 : vector<8x32xf32>
    %747 = vector.broadcast %29 : vector<1x32xf32> to vector<8x32xf32>
    %748 = arith.cmpf ogt, %746, %747 : vector<8x32xf32>
    %749 = arith.extui %748 : vector<8x32xi1> to vector<8x32xi32>
    %750 = arith.sitofp %749 : vector<8x32xi32> to vector<8x32xf32>
    %cst_126 = arith.constant dense<0.000000e+00> : vector<8x32xf32>
    %751 = tpu.matmul %750, %30, %cst_126 {dimension_numbers = #tpu.dot_dimension_numbers<[1], [0], [0], [1], [0, 0, 1, 1], [], []>} : vector<8x32xf32>, vector<32x32xf32>, vector<8x32xf32> -> vector<8x32xf32>
    %752 = vector.broadcast %31 : vector<1x32xf32> to vector<8x32xf32>
    %753 = arith.addf %751, %752 : vector<8x32xf32>
    %754 = vector.broadcast %39 : vector<1x32xf32> to vector<8x32xf32>
    %755 = arith.cmpf ogt, %671, %754 : vector<8x32xf32>
    %756 = arith.extui %755 : vector<8x32xi1> to vector<8x32xi32>
    %757 = arith.sitofp %756 : vector<8x32xi32> to vector<8x32xf32>
    %758 = vector.broadcast %37 : vector<1x32xf32> to vector<8x32xf32>
    %759 = arith.mulf %758, %671 : vector<8x32xf32>
    %760 = arith.addf %759, %753 : vector<8x32xf32>
    %761 = vector.broadcast %39 : vector<1x32xf32> to vector<8x32xf32>
    %762 = arith.mulf %757, %761 : vector<8x32xf32>
    %763 = arith.subf %760, %762 : vector<8x32xf32>
    %764 = vector.broadcast %39 : vector<1x32xf32> to vector<8x32xf32>
    %765 = arith.cmpf ogt, %763, %764 : vector<8x32xf32>
    %766 = arith.extui %765 : vector<8x32xi1> to vector<8x32xi32>
    %767 = arith.sitofp %766 : vector<8x32xi32> to vector<8x32xf32>
    %cst_127 = arith.constant dense<0.000000e+00> : vector<8x4xf32>
    %768 = tpu.matmul %767, %40, %cst_127 {dimension_numbers = #tpu.dot_dimension_numbers<[1], [0], [0], [1], [0, 0, 1, 1], [], []>} : vector<8x32xf32>, vector<32x4xf32>, vector<8x4xf32> -> vector<8x4xf32>
    %769 = vector.broadcast %41 : vector<1x4xf32> to vector<8x4xf32>
    %770 = arith.addf %768, %769 : vector<8x4xf32>
    %771 = vector.broadcast %47 : vector<1x4xf32> to vector<8x4xf32>
    %772 = arith.cmpf ogt, %688, %771 : vector<8x4xf32>
    %773 = arith.extui %772 : vector<8x4xi1> to vector<8x4xi32>
    %774 = arith.sitofp %773 : vector<8x4xi32> to vector<8x4xf32>
    %775 = vector.broadcast %46 : vector<1x4xf32> to vector<8x4xf32>
    %776 = arith.mulf %775, %688 : vector<8x4xf32>
    %777 = arith.addf %776, %770 : vector<8x4xf32>
    %778 = vector.broadcast %47 : vector<1x4xf32> to vector<8x4xf32>
    %779 = arith.mulf %774, %778 : vector<8x4xf32>
    %780 = arith.subf %777, %779 : vector<8x4xf32>
    %781 = vector.broadcast %47 : vector<1x4xf32> to vector<8x4xf32>
    %782 = arith.cmpf ogt, %780, %781 : vector<8x4xf32>
    %783 = arith.extui %782 : vector<8x4xi1> to vector<8x4xi32>
    %784 = arith.sitofp %783 : vector<8x4xi32> to vector<8x4xf32>
    %785 = arith.index_cast %c7_i32 : i32 to index
    %c0_128 = arith.constant 0 : index
    %c0_129 = arith.constant 0 : index
    %786 = vector.load %arg15[%785, %c0_128, %c0_129] : memref<8x8x4xf32, #tpu.memory_space<vmem>>, vector<1x8x4xf32>
    %787 = vector.shape_cast %786 : vector<1x8x4xf32> to vector<8x4xf32>
    %788 = vector.shape_cast %784 : vector<8x4xf32> to vector<1x8x4xf32>
    tpu.vector_store %arg15[%785, %c0_128, %c0_129], %788 {strides = array<i32>} : memref<8x8x4xf32, #tpu.memory_space<vmem>>, vector<1x8x4xf32>,
    %c8_i32 = arith.constant 8 : i32
    return
  }
}

</mosaic_0001>

<llo_original>
// kernel: tpu_custom_call.1
$region0: #{tpu_custom_call.1}
  #allocation0 [shape = 'u32[]', space=smem, size = 0x4, offset = 0x4, fixed_abs, tag = 'smem constant byte address 0x4 - core index']
  #allocation1 [shape = 'u32[144,128]{1,0:T(1,128)}', space=vmem, size = 0x12000, scoped, tag = 'internal scratch']
  %s0 = inlined_call_operand.hbm [shape: f32[8,8,16], index: 0, kind: input, shape index: {}]
  %s1 = inlined_call_operand.hbm [shape: f32[16,32], index: 1, kind: input, shape index: {}]
  %s2 = inlined_call_operand.vmem [shape: f32[1,32], index: 2, kind: input, shape index: {}]
  %s3 = inlined_call_operand.vmem [shape: f32[32,32], index: 3, kind: input, shape index: {}]
  %s4 = inlined_call_operand.hbm [shape: f32[1,32], index: 4, kind: input, shape index: {}]
  %s5 = inlined_call_operand.hbm [shape: f32[32,32], index: 5, kind: input, shape index: {}]
  %s6 = inlined_call_operand.vmem [shape: f32[1,32], index: 6, kind: input, shape index: {}]
  %s7 = inlined_call_operand.hbm [shape: f32[32,32], index: 7, kind: input, shape index: {}]
  %s8 = inlined_call_operand.vmem [shape: f32[1,32], index: 8, kind: input, shape index: {}]
  %s9 = inlined_call_operand.vmem [shape: f32[32,4], index: 9, kind: input, shape index: {}]
  %s10 = inlined_call_operand.vmem [shape: f32[1,4], index: 10, kind: input, shape index: {}]
  %s11 = inlined_call_operand.vmem [shape: f32[4,1,32], index: 11, kind: input, shape index: {}]
  %s12 = inlined_call_operand.vmem [shape: f32[4,1,32], index: 12, kind: input, shape index: {}]
  %s13 = inlined_call_operand.vmem [shape: f32[1,4], index: 13, kind: input, shape index: {}]
  %s14 = inlined_call_operand.vmem [shape: f32[1,4], index: 14, kind: input, shape index: {}]
  %s15 = inlined_call_operand.vmem [shape: f32[8,8,4], index: 15, kind: output, shape index: {}]
  %s16 = sld [smem:[#allocation0]]
  $region90: #{tpu_custom_call.1} parent=0
    _
  %s18 = ssub.s32 1, %s16
  %s19 = scalar_select 0, %s18, %s16
  $region1: #{tpu_custom_call.1} parent=0
    #allocation2 [shape = 'u8[32768]{0}', space=vmem, size = 0x8000, scoped, tag = 'input window, operand 0, single buffered']
    #allocation3 [shape = 's32[1]{0}', space=sflag, size = 0x4, scoped, tag = 'scoped memory for tpu_custom_call.1']
    #allocation4 [shape = 'u8[8192]{0}', space=vmem, size = 0x2000, scoped, tag = 'input window, operand 1, single buffered']
    #allocation5 [shape = 's32[1]{0}', space=sflag, size = 0x4, scoped, tag = 'scoped memory for tpu_custom_call.1']
    #allocation6 [shape = 'u8[512]{0}', space=vmem, size = 0x400, scoped, tag = 'input window, operand 4, single buffered']
    #allocation7 [shape = 'u8[16384]{0}', space=vmem, size = 0x4000, scoped, tag = 'input window, operand 5, single buffered']
    #allocation8 [shape = 's32[1]{0}', space=sflag, size = 0x4, scoped, tag = 'scoped memory for tpu_custom_call.1']
    #allocation9 [shape = 'u8[16384]{0}', space=vmem, size = 0x4000, scoped, tag = 'input window, operand 7, single buffered']
    %20 = vsyncpa [#allocation3], 0
    %21 = vsyncpa [#allocation5], 0
    %22 = vsyncpa [#allocation8], 0
    // Predicated region
    $region2: #{tpu_custom_call.1} parent=1 // pred_check
      _
    $region3: #{tpu_custom_call.1} parent=1 // pred_check_branch
      %24 = sbr.rel (0) target = $region5
    $region4: #{tpu_custom_call.1} parent=1 // pred_region
      %s26 = ssub.s32 1024, 1024
      %27 = vsyncadd [#allocation3], %s26
      %s28 = sshll.u32 [#allocation2], 4
      %s29 = int_to_ptr.vmem [resolvable:$true] %s28
      %34 = dma.hbm_to_vmem [thread:$0]  %s0, 1024, %s29, [#allocation3], 128, 128, 8
    $region5: #{tpu_custom_call.1} parent=1 // pred_fallthru
      _
    // Predicated region
    $region6: #{tpu_custom_call.1} parent=1 // pred_check
      _
    $region7: #{tpu_custom_call.1} parent=1 // pred_check_branch
      %36 = sbr.rel (0) target = $region9
    $region8: #{tpu_custom_call.1} parent=1 // pred_region
      %s38 = ssub.s32 256, 256
      %39 = vsyncadd [#allocation5], %s38
      %s40 = sshll.u32 [#allocation4], 4
      %s41 = int_to_ptr.vmem [resolvable:$true] %s40
      %46 = dma.hbm_to_vmem [thread:$0]  %s1, 256, %s41, [#allocation5], 128, 128, 8
    $region9: #{tpu_custom_call.1} parent=1 // pred_fallthru
      _
    // Predicated region
    $region10: #{tpu_custom_call.1} parent=1 // pred_check
      _
    $region11: #{tpu_custom_call.1} parent=1 // pred_check_branch
      %48 = sbr.rel (0) target = $region13
    $region12: #{tpu_custom_call.1} parent=1 // pred_region
      _
    $region13: #{tpu_custom_call.1} parent=1 // pred_fallthru
      _
    // Predicated region
    $region14: #{tpu_custom_call.1} parent=1 // pred_check
      _
    $region15: #{tpu_custom_call.1} parent=1 // pred_check_branch
      %50 = sbr.rel (0) target = $region17
    $region16: #{tpu_custom_call.1} parent=1 // pred_region
      _
    $region17: #{tpu_custom_call.1} parent=1 // pred_fallthru
      _
    // Predicated region
    $region18: #{tpu_custom_call.1} parent=1 // pred_check
      _
    $region19: #{tpu_custom_call.1} parent=1 // pred_check_branch
      %52 = sbr.rel (0) target = $region21
    $region20: #{tpu_custom_call.1} parent=1 // pred_region
      %s54 = ssub.s32 16, 16
      %55 = vsyncadd [#allocation5], %s54
      %s57 = sshll.u32 [#allocation6], 4
      %s58 = int_to_ptr.vmem [resolvable:$true] %s57
      %60 = dma.hbm_to_vmem [thread:$0]  %s4, 16, %s58, [#allocation5]
    $region21: #{tpu_custom_call.1} parent=1 // pred_fallthru
      _
    // Predicated region
    $region22: #{tpu_custom_call.1} parent=1 // pred_check
      _
    $region23: #{tpu_custom_call.1} parent=1 // pred_check_branch
      %62 = sbr.rel (0) target = $region25
    $region24: #{tpu_custom_call.1} parent=1 // pred_region
      %s64 = ssub.s32 512, 512
      %65 = vsyncadd [#allocation8], %s64
      %s66 = sshll.u32 [#allocation7], 4
      %s67 = int_to_ptr.vmem [resolvable:$true] %s66
      %72 = dma.hbm_to_vmem [thread:$0]  %s5, 512, %s67, [#allocation8], 128, 128, 8
    $region25: #{tpu_custom_call.1} parent=1 // pred_fallthru
      _
    // Predicated region
    $region26: #{tpu_custom_call.1} parent=1 // pred_check
      _
    $region27: #{tpu_custom_call.1} parent=1 // pred_check_branch
      %74 = sbr.rel (0) target = $region29
    $region28: #{tpu_custom_call.1} parent=1 // pred_region
      _
    $region29: #{tpu_custom_call.1} parent=1 // pred_fallthru
      _
    // Predicated region
    $region30: #{tpu_custom_call.1} parent=1 // pred_check
      _
    $region31: #{tpu_custom_call.1} parent=1 // pred_check_branch
      %76 = sbr.rel (0) target = $region33
    $region32: #{tpu_custom_call.1} parent=1 // pred_region
      %s78 = ssub.s32 512, 512
      %79 = vsyncadd [#allocation8], %s78
      %s80 = sshll.u32 [#allocation9], 4
      %s81 = int_to_ptr.vmem [resolvable:$true] %s80
      %86 = dma.hbm_to_vmem [thread:$0]  %s7, 512, %s81, [#allocation8], 128, 128, 8
    $region33: #{tpu_custom_call.1} parent=1 // pred_fallthru
      _
    // Predicated region
    $region34: #{tpu_custom_call.1} parent=1 // pred_check
      _
    $region35: #{tpu_custom_call.1} parent=1 // pred_check_branch
      %88 = sbr.rel (0) target = $region37
    $region36: #{tpu_custom_call.1} parent=1 // pred_region
      _
    $region37: #{tpu_custom_call.1} parent=1 // pred_fallthru
      _
    // Predicated region
    $region38: #{tpu_custom_call.1} parent=1 // pred_check
      _
    $region39: #{tpu_custom_call.1} parent=1 // pred_check_branch
      %90 = sbr.rel (0) target = $region41
    $region40: #{tpu_custom_call.1} parent=1 // pred_region
      _
    $region41: #{tpu_custom_call.1} parent=1 // pred_fallthru
      _
    // Predicated region
    $region42: #{tpu_custom_call.1} parent=1 // pred_check
      _
    $region43: #{tpu_custom_call.1} parent=1 // pred_check_branch
      %92 = sbr.rel (0) target = $region45
    $region44: #{tpu_custom_call.1} parent=1 // pred_region
      _
    $region45: #{tpu_custom_call.1} parent=1 // pred_fallthru
      _
    // Predicated region
    $region46: #{tpu_custom_call.1} parent=1 // pred_check
      _
    $region47: #{tpu_custom_call.1} parent=1 // pred_check_branch
      %94 = sbr.rel (0) target = $region49
    $region48: #{tpu_custom_call.1} parent=1 // pred_region
      _
    $region49: #{tpu_custom_call.1} parent=1 // pred_fallthru
      _
    // Predicated region
    $region50: #{tpu_custom_call.1} parent=1 // pred_check
      _
    $region51: #{tpu_custom_call.1} parent=1 // pred_check_branch
      %96 = sbr.rel (0) target = $region53
    $region52: #{tpu_custom_call.1} parent=1 // pred_region
      _
    $region53: #{tpu_custom_call.1} parent=1 // pred_fallthru
      _
    // Predicated region
    $region54: #{tpu_custom_call.1} parent=1 // pred_check
      _
    $region55: #{tpu_custom_call.1} parent=1 // pred_check_branch
      %98 = sbr.rel (0) target = $region57
    $region56: #{tpu_custom_call.1} parent=1 // pred_region
      _
    $region57: #{tpu_custom_call.1} parent=1 // pred_fallthru
      _
    // Predicated region
    $region58: #{tpu_custom_call.1} parent=1 // pred_check
      _
    $region59: #{tpu_custom_call.1} parent=1 // pred_check_branch
      %100 = sbr.rel (0) target = $region61
    $region60: #{tpu_custom_call.1} parent=1 // pred_region
      _
    $region61: #{tpu_custom_call.1} parent=1 // pred_fallthru
      _
    // Predicated region
    $region62: #{tpu_custom_call.1} parent=1 // pred_check
      _
    $region63: #{tpu_custom_call.1} parent=1 // pred_check_branch
      %102 = sbr.rel (0) target = $region65
    $region64: #{tpu_custom_call.1} parent=1 // pred_region
      %103 = dma.done [#allocation3], 1024
    $region65: #{tpu_custom_call.1} parent=1 // pred_fallthru
      _
    // Predicated region
    $region66: #{tpu_custom_call.1} parent=1 // pred_check
      _
    $region67: #{tpu_custom_call.1} parent=1 // pred_check_branch
      %105 = sbr.rel (0) target = $region69
    $region68: #{tpu_custom_call.1} parent=1 // pred_region
      %106 = dma.done [#allocation5], 256
    $region69: #{tpu_custom_call.1} parent=1 // pred_fallthru
      _
    // Predicated region
    $region70: #{tpu_custom_call.1} parent=1 // pred_check
      _
    $region71: #{tpu_custom_call.1} parent=1 // pred_check_branch
      %108 = sbr.rel (0) target = $region73
    $region72: #{tpu_custom_call.1} parent=1 // pred_region
      %109 = dma.done [#allocation5], 16
    $region73: #{tpu_custom_call.1} parent=1 // pred_fallthru
      _
    // Predicated region
    $region74: #{tpu_custom_call.1} parent=1 // pred_check
      _
    $region75: #{tpu_custom_call.1} parent=1 // pred_check_branch
      %111 = sbr.rel (0) target = $region77
    $region76: #{tpu_custom_call.1} parent=1 // pred_region
      %112 = dma.done [#allocation8], 512
    $region77: #{tpu_custom_call.1} parent=1 // pred_fallthru
      _
    // Predicated region
    $region78: #{tpu_custom_call.1} parent=1 // pred_check
      _
    $region79: #{tpu_custom_call.1} parent=1 // pred_check_branch
      %114 = sbr.rel (0) target = $region81
    $region80: #{tpu_custom_call.1} parent=1 // pred_region
      %115 = dma.done [#allocation8], 512
    $region81: #{tpu_custom_call.1} parent=1 // pred_fallthru
      _
    %v116 = vld [vmem:[#allocation4] sm:$0xff]
    %v117 = vld [vmem:[#allocation4 + $0x8] sm:$0xff]
    %v118 = vld [vmem:[%s2] sm:$0x1]
    %v119 = vld [vmem:[%s11] sm:$0x1]
    %v120 = vmax.f32 %v119, 0.0
    %v121 = vmin.f32 %v120, 1.0
    %v122 = vld [vmem:[%s12] sm:$0x1]
    %v123 = vld [vmem:[%s3] sm:$0xff]
    %v124 = vld [vmem:[%s3 + $0x8] sm:$0xff]
    %v125 = vld [vmem:[%s3 + $0x10] sm:$0xff]
    %v126 = vld [vmem:[%s3 + $0x18] sm:$0xff]
    %v127 = vld [vmem:[#allocation6] sm:$0x1]
    %s128 = scalar_lea.vmem %s11, 1
    %v129 = vld [vmem:[%s128] sm:$0x1]
    %v130 = vmax.f32 %v129, 0.0
    %v131 = vmin.f32 %v130, 1.0
    %s132 = scalar_lea.vmem %s12, 1
    %v133 = vld [vmem:[%s132] sm:$0x1]
    %v134 = vld [vmem:[#allocation7] sm:$0xff]
    %v135 = vld [vmem:[#allocation7 + $0x8] sm:$0xff]
    %v136 = vld [vmem:[#allocation7 + $0x10] sm:$0xff]
    %v137 = vld [vmem:[#allocation7 + $0x18] sm:$0xff]
    %v138 = vld [vmem:[%s6] sm:$0x1]
    %s139 = scalar_lea.vmem %s11, 2
    %v140 = vld [vmem:[%s139] sm:$0x1]
    %v141 = vmax.f32 %v140, 0.0
    %v142 = vmin.f32 %v141, 1.0
    %s143 = scalar_lea.vmem %s12, 2
    %v144 = vld [vmem:[%s143] sm:$0x1]
    %v145 = vld [vmem:[#allocation9] sm:$0xff]
    %v146 = vld [vmem:[#allocation9 + $0x8] sm:$0xff]
    %v147 = vld [vmem:[#allocation9 + $0x10] sm:$0xff]
    %v148 = vld [vmem:[#allocation9 + $0x18] sm:$0xff]
    %v149 = vld [vmem:[%s8] sm:$0x1]
    %s150 = scalar_lea.vmem %s11, 3
    %v151 = vld [vmem:[%s150] sm:$0x1]
    %v152 = vmax.f32 %v151, 0.0
    %v153 = vmin.f32 %v152, 1.0
    %s154 = scalar_lea.vmem %s12, 3
    %v155 = vld [vmem:[%s154] sm:$0x1]
    %v156 = vld [vmem:[%s9] sm:$0xff]
    %v157 = vld [vmem:[%s9 + $0x8] sm:$0xff]
    %v158 = vld [vmem:[%s9 + $0x10] sm:$0xff]
    %v159 = vld [vmem:[%s9 + $0x18] sm:$0xff]
    %v160 = vld [vmem:[%s10] sm:$0x1]
    %v161 = vld [vmem:[%s13] sm:$0x1]
    %v162 = vmax.f32 %v161, 0.0
    %v163 = vmin.f32 %v162, 1.0
    %v164 = vld [vmem:[%s14] sm:$0x1]
    %v165 = vld [vmem:[#allocation2] sm:$0xff]
    %v167 = vlaneseq
    %v168 = vshrl.u32 %v167, 7
    %v169 = vsub.s32 0, %v168
    %v170 = vrot.slane %v118, %v169
    %vm172 = vcmask 130048
    %v174 = vsel %vm172, %v165, 0
    %176 = vmatprep.subr.mxu0 0.0
    %177 = vmatpush1.msra.mxu0 0.0
    %178 = vmatprep.subr.mxu0 0.0
    %179 = vmatpush1.msra.mxu0 0.0
    %180 = vmatprep.subr.mxu0 0.0
    %181 = vmatpush1.msra.mxu0 0.0
    %182 = vmatprep.subr.mxu0 0.0
    %183 = vmatpush1.msra.mxu0 0.0
    %184 = vmatprep.subr.mxu0 0.0
    %185 = vmatpush1.msra.mxu0 0.0
    %186 = vmatprep.subr.mxu0 0.0
    %187 = vmatpush1.msra.mxu0 0.0
    %188 = vmatprep.subr.mxu0 0.0
    %189 = vmatpush1.msra.mxu0 0.0
    %190 = vmatprep.subr.mxu0 0.0
    %191 = vmatpush1.msra.mxu0 0.0
    %192 = vmatprep.subr.mxu0 0.0
    %193 = vmatpush1.msra.mxu0 0.0
    %194 = vmatprep.subr.mxu0 0.0
    %195 = vmatpush1.msra.mxu0 0.0
    %196 = vmatprep.subr.mxu0 0.0
    %197 = vmatpush1.msra.mxu0 0.0
    %198 = vmatprep.subr.mxu0 0.0
    %199 = vmatpush1.msra.mxu0 0.0
    %200 = vmatprep.subr.mxu0 0.0
    %201 = vmatpush1.msra.mxu0 0.0
    %202 = vmatprep.subr.mxu0 0.0
    %203 = vmatpush1.msra.mxu0 0.0
    %204 = vmatprep.subr.mxu0 0.0
    %205 = vmatpush1.msra.mxu0 %v117
    %206 = vmatprep.subr.mxu0 0.0
    %207 = vmatpush1.msra.mxu0 %v116
    %208 = vmatprep.subr.mxu0 0.0
    %209 = vmatpush2.msra.mxu0 0.0
    %210 = vmatprep.subr.mxu0 0.0
    %211 = vmatpush2.msra.mxu0 0.0
    %212 = vmatprep.subr.mxu0 0.0
    %213 = vmatpush2.msra.mxu0 0.0
    %214 = vmatprep.subr.mxu0 0.0
    %215 = vmatpush2.msra.mxu0 0.0
    %216 = vmatprep.subr.mxu0 0.0
    %217 = vmatpush2.msra.mxu0 0.0
    %218 = vmatprep.subr.mxu0 0.0
    %219 = vmatpush2.msra.mxu0 0.0
    %220 = vmatprep.subr.mxu0 0.0
    %221 = vmatpush2.msra.mxu0 0.0
    %222 = vmatprep.subr.mxu0 0.0
    %223 = vmatpush2.msra.mxu0 0.0
    %224 = vmatprep.subr.mxu0 0.0
    %225 = vmatpush2.msra.mxu0 0.0
    %226 = vmatprep.subr.mxu0 0.0
    %227 = vmatpush2.msra.mxu0 0.0
    %228 = vmatprep.subr.mxu0 0.0
    %229 = vmatpush2.msra.mxu0 0.0
    %230 = vmatprep.subr.mxu0 0.0
    %231 = vmatpush2.msra.mxu0 0.0
    %232 = vmatprep.subr.mxu0 0.0
    %233 = vmatpush2.msra.mxu0 0.0
    %234 = vmatprep.subr.mxu0 0.0
    %235 = vmatpush2.msra.mxu0 0.0
    %236 = vmatprep.subr.mxu0 0.0
    %237 = vmatpush2.msra.mxu0 0.0
    %238 = vmatprep.subr.mxu0 0.0
    %239 = vmatpush2.msra.mxu0 0.0
    %240 = vmatprep.mubr.f32.mxu0 0.0
    %241 = vmatmul.mubr.f32.gmra.mxu0 %v174
    %v242 = vpop.f32.mrf.mxu0
    %v243 = vadd.f32 %v170, %v242
    %v244 = vpop.f32.mrf.mxu0
    %245 = vdwg.mxu0
    %v247 = vlaneseq
    %v248 = vshrl.u32 %v247, 7
    %v249 = vsub.s32 0, %v248
    %v250 = vrot.slane %v122, %v249
    %vm252 = vcmp.gt.f32.partialorder 0.0, %v250
    %v253 = vsel %vm252, 1, 0
    %v254 = vcvt.s32.f32 %v253
    %v256 = vlaneseq
    %v257 = vshrl.u32 %v256, 7
    %v258 = vsub.s32 0, %v257
    %v259 = vrot.slane %v121, %v258
    %v261 = vmul.f32 %v259, 0.0
    %v262 = vadd.f32 %v261, %v243
    %v263 = vmul.f32 %v254, %v250
    %v264 = vsub.f32 %v262, %v263
    %vm265 = vcmp.gt.f32.partialorder %v264, %v250
    %v266 = vsel %vm265, 1, 0
    %v267 = vcvt.s32.f32 %v266
    %v269 = vlaneseq
    %v270 = vshrl.u32 %v269, 7
    %v271 = vsub.s32 0, %v270
    %v272 = vrot.slane %v127, %v271
    %vm274 = vcmask 261120
    %v276 = vsel %vm274, %v267, 0
    %278 = vmatprep.subr.mxu0 0.0
    %279 = vmatpush1.msra.mxu0 0.0
    %280 = vmatprep.subr.mxu0 0.0
    %281 = vmatpush1.msra.mxu0 0.0
    %282 = vmatprep.subr.mxu0 0.0
    %283 = vmatpush1.msra.mxu0 0.0
    %284 = vmatprep.subr.mxu0 0.0
    %285 = vmatpush1.msra.mxu0 0.0
    %286 = vmatprep.subr.mxu0 0.0
    %287 = vmatpush1.msra.mxu0 0.0
    %288 = vmatprep.subr.mxu0 0.0
    %289 = vmatpush1.msra.mxu0 0.0
    %290 = vmatprep.subr.mxu0 0.0
    %291 = vmatpush1.msra.mxu0 0.0
    %292 = vmatprep.subr.mxu0 0.0
    %293 = vmatpush1.msra.mxu0 0.0
    %294 = vmatprep.subr.mxu0 0.0
    %295 = vmatpush1.msra.mxu0 0.0
    %296 = vmatprep.subr.mxu0 0.0
    %297 = vmatpush1.msra.mxu0 0.0
    %298 = vmatprep.subr.mxu0 0.0
    %299 = vmatpush1.msra.mxu0 0.0
    %300 = vmatprep.subr.mxu0 0.0
    %301 = vmatpush1.msra.mxu0 0.0
    %302 = vmatprep.subr.mxu0 0.0
    %303 = vmatpush1.msra.mxu0 %v126
    %304 = vmatprep.subr.mxu0 0.0
    %305 = vmatpush1.msra.mxu0 %v125
    %306 = vmatprep.subr.mxu0 0.0
    %307 = vmatpush1.msra.mxu0 %v124
    %308 = vmatprep.subr.mxu0 0.0
    %309 = vmatpush1.msra.mxu0 %v123
    %310 = vmatprep.subr.mxu0 0.0
    %311 = vmatpush2.msra.mxu0 0.0
    %312 = vmatprep.subr.mxu0 0.0
    %313 = vmatpush2.msra.mxu0 0.0
    %314 = vmatprep.subr.mxu0 0.0
    %315 = vmatpush2.msra.mxu0 0.0
    %316 = vmatprep.subr.mxu0 0.0
    %317 = vmatpush2.msra.mxu0 0.0
    %318 = vmatprep.subr.mxu0 0.0
    %319 = vmatpush2.msra.mxu0 0.0
    %320 = vmatprep.subr.mxu0 0.0
    %321 = vmatpush2.msra.mxu0 0.0
    %322 = vmatprep.subr.mxu0 0.0
    %323 = vmatpush2.msra.mxu0 0.0
    %324 = vmatprep.subr.mxu0 0.0
    %325 = vmatpush2.msra.mxu0 0.0
    %326 = vmatprep.subr.mxu0 0.0
    %327 = vmatpush2.msra.mxu0 0.0
    %328 = vmatprep.subr.mxu0 0.0
    %329 = vmatpush2.msra.mxu0 0.0
    %330 = vmatprep.subr.mxu0 0.0
    %331 = vmatpush2.msra.mxu0 0.0
    %332 = vmatprep.subr.mxu0 0.0
    %333 = vmatpush2.msra.mxu0 0.0
    %334 = vmatprep.subr.mxu0 0.0
    %335 = vmatpush2.msra.mxu0 0.0
    %336 = vmatprep.subr.mxu0 0.0
    %337 = vmatpush2.msra.mxu0 0.0
    %338 = vmatprep.subr.mxu0 0.0
    %339 = vmatpush2.msra.mxu0 0.0
    %340 = vmatprep.subr.mxu0 0.0
    %341 = vmatpush2.msra.mxu0 0.0
    %342 = vmatprep.mubr.f32.mxu0 0.0
    %343 = vmatmul.mubr.f32.gmra.mxu0 %v276
    %v344 = vpop.f32.mrf.mxu0
    %v345 = vadd.f32 %v272, %v344
    %v346 = vpop.f32.mrf.mxu0
    %347 = vdwg.mxu0
    %v349 = vlaneseq
    %v350 = vshrl.u32 %v349, 7
    %v351 = vsub.s32 0, %v350
    %v352 = vrot.slane %v133, %v351
    %vm354 = vcmp.gt.f32.partialorder 0.0, %v352
    %v355 = vsel %vm354, 1, 0
    %v356 = vcvt.s32.f32 %v355
    %v358 = vlaneseq
    %v359 = vshrl.u32 %v358, 7
    %v360 = vsub.s32 0, %v359
    %v361 = vrot.slane %v131, %v360
    %v363 = vmul.f32 %v361, 0.0
    %v364 = vadd.f32 %v363, %v345
    %v365 = vmul.f32 %v356, %v352
    %v366 = vsub.f32 %v364, %v365
    %vm367 = vcmp.gt.f32.partialorder %v366, %v352
    %v368 = vsel %vm367, 1, 0
    %v369 = vcvt.s32.f32 %v368
    %v371 = vlaneseq
    %v372 = vshrl.u32 %v371, 7
    %v373 = vsub.s32 0, %v372
    %v374 = vrot.slane %v138, %v373
    %v377 = vsel %vm274, %v369, 0
    %379 = vmatprep.subr.mxu0 0.0
    %380 = vmatpush1.msra.mxu0 0.0
    %381 = vmatprep.subr.mxu0 0.0
    %382 = vmatpush1.msra.mxu0 0.0
    %383 = vmatprep.subr.mxu0 0.0
    %384 = vmatpush1.msra.mxu0 0.0
    %385 = vmatprep.subr.mxu0 0.0
    %386 = vmatpush1.msra.mxu0 0.0
    %387 = vmatprep.subr.mxu0 0.0
    %388 = vmatpush1.msra.mxu0 0.0
    %389 = vmatprep.subr.mxu0 0.0
    %390 = vmatpush1.msra.mxu0 0.0
    %391 = vmatprep.subr.mxu0 0.0
    %392 = vmatpush1.msra.mxu0 0.0
    %393 = vmatprep.subr.mxu0 0.0
    %394 = vmatpush1.msra.mxu0 0.0
    %395 = vmatprep.subr.mxu0 0.0
    %396 = vmatpush1.msra.mxu0 0.0
    %397 = vmatprep.subr.mxu0 0.0
    %398 = vmatpush1.msra.mxu0 0.0
    %399 = vmatprep.subr.mxu0 0.0
    %400 = vmatpush1.msra.mxu0 0.0
    %401 = vmatprep.subr.mxu0 0.0
    %402 = vmatpush1.msra.mxu0 0.0
    %403 = vmatprep.subr.mxu0 0.0
    %404 = vmatpush1.msra.mxu0 %v137
    %405 = vmatprep.subr.mxu0 0.0
    %406 = vmatpush1.msra.mxu0 %v136
    %407 = vmatprep.subr.mxu0 0.0
    %408 = vmatpush1.msra.mxu0 %v135
    %409 = vmatprep.subr.mxu0 0.0
    %410 = vmatpush1.msra.mxu0 %v134
    %411 = vmatprep.subr.mxu0 0.0
    %412 = vmatpush2.msra.mxu0 0.0
    %413 = vmatprep.subr.mxu0 0.0
    %414 = vmatpush2.msra.mxu0 0.0
    %415 = vmatprep.subr.mxu0 0.0
    %416 = vmatpush2.msra.mxu0 0.0
    %417 = vmatprep.subr.mxu0 0.0
    %418 = vmatpush2.msra.mxu0 0.0
    %419 = vmatprep.subr.mxu0 0.0
    %420 = vmatpush2.msra.mxu0 0.0
    %421 = vmatprep.subr.mxu0 0.0
    %422 = vmatpush2.msra.mxu0 0.0
    %423 = vmatprep.subr.mxu0 0.0
    %424 = vmatpush2.msra.mxu0 0.0
    %425 = vmatprep.subr.mxu0 0.0
    %426 = vmatpush2.msra.mxu0 0.0
    %427 = vmatprep.subr.mxu0 0.0
    %428 = vmatpush2.msra.mxu0 0.0
    %429 = vmatprep.subr.mxu0 0.0
    %430 = vmatpush2.msra.mxu0 0.0
    %431 = vmatprep.subr.mxu0 0.0
    %432 = vmatpush2.msra.mxu0 0.0
    %433 = vmatprep.subr.mxu0 0.0
    %434 = vmatpush2.msra.mxu0 0.0
    %435 = vmatprep.subr.mxu0 0.0
    %436 = vmatpush2.msra.mxu0 0.0
    %437 = vmatprep.subr.mxu0 0.0
    %438 = vmatpush2.msra.mxu0 0.0
    %439 = vmatprep.subr.mxu0 0.0
    %440 = vmatpush2.msra.mxu0 0.0
    %441 = vmatprep.subr.mxu0 0.0
    %442 = vmatpush2.msra.mxu0 0.0
    %443 = vmatprep.mubr.f32.mxu0 0.0
    %444 = vmatmul.mubr.f32.gmra.mxu0 %v377
    %v445 = vpop.f32.mrf.mxu0
    %v446 = vadd.f32 %v374, %v445
    %v447 = vpop.f32.mrf.mxu0
    %448 = vdwg.mxu0
    %v450 = vlaneseq
    %v451 = vshrl.u32 %v450, 7
    %v452 = vsub.s32 0, %v451
    %v453 = vrot.slane %v144, %v452
    %vm455 = vcmp.gt.f32.partialorder 0.0, %v453
    %v456 = vsel %vm455, 1, 0
    %v457 = vcvt.s32.f32 %v456
    %v459 = vlaneseq
    %v460 = vshrl.u32 %v459, 7
    %v461 = vsub.s32 0, %v460
    %v462 = vrot.slane %v142, %v461
    %v464 = vmul.f32 %v462, 0.0
    %v465 = vadd.f32 %v464, %v446
    %v466 = vmul.f32 %v457, %v453
    %v467 = vsub.f32 %v465, %v466
    %vm468 = vcmp.gt.f32.partialorder %v467, %v453
    %v469 = vsel %vm468, 1, 0
    %v470 = vcvt.s32.f32 %v469
    %v472 = vlaneseq
    %v473 = vshrl.u32 %v472, 7
    %v474 = vsub.s32 0, %v473
    %v475 = vrot.slane %v149, %v474
    %v478 = vsel %vm274, %v470, 0
    %480 = vmatprep.subr.mxu0 0.0
    %481 = vmatpush1.msra.mxu0 0.0
    %482 = vmatprep.subr.mxu0 0.0
    %483 = vmatpush1.msra.mxu0 0.0
    %484 = vmatprep.subr.mxu0 0.0
    %485 = vmatpush1.msra.mxu0 0.0
    %486 = vmatprep.subr.mxu0 0.0
    %487 = vmatpush1.msra.mxu0 0.0
    %488 = vmatprep.subr.mxu0 0.0
    %489 = vmatpush1.msra.mxu0 0.0
    %490 = vmatprep.subr.mxu0 0.0
    %491 = vmatpush1.msra.mxu0 0.0
    %492 = vmatprep.subr.mxu0 0.0
    %493 = vmatpush1.msra.mxu0 0.0
    %494 = vmatprep.subr.mxu0 0.0
    %495 = vmatpush1.msra.mxu0 0.0
    %496 = vmatprep.subr.mxu0 0.0
    %497 = vmatpush1.msra.mxu0 0.0
    %498 = vmatprep.subr.mxu0 0.0
    %499 = vmatpush1.msra.mxu0 0.0
    %500 = vmatprep.subr.mxu0 0.0
    %501 = vmatpush1.msra.mxu0 0.0
    %502 = vmatprep.subr.mxu0 0.0
    %503 = vmatpush1.msra.mxu0 0.0
    %504 = vmatprep.subr.mxu0 0.0
    %505 = vmatpush1.msra.mxu0 %v148
    %506 = vmatprep.subr.mxu0 0.0
    %507 = vmatpush1.msra.mxu0 %v147
    %508 = vmatprep.subr.mxu0 0.0
    %509 = vmatpush1.msra.mxu0 %v146
    %510 = vmatprep.subr.mxu0 0.0
    %511 = vmatpush1.msra.mxu0 %v145
    %512 = vmatprep.subr.mxu0 0.0
    %513 = vmatpush2.msra.mxu0 0.0
    %514 = vmatprep.subr.mxu0 0.0
    %515 = vmatpush2.msra.mxu0 0.0
    %516 = vmatprep.subr.mxu0 0.0
    %517 = vmatpush2.msra.mxu0 0.0
    %518 = vmatprep.subr.mxu0 0.0
    %519 = vmatpush2.msra.mxu0 0.0
    %520 = vmatprep.subr.mxu0 0.0
    %521 = vmatpush2.msra.mxu0 0.0
    %522 = vmatprep.subr.mxu0 0.0
    %523 = vmatpush2.msra.mxu0 0.0
    %524 = vmatprep.subr.mxu0 0.0
    %525 = vmatpush2.msra.mxu0 0.0
    %526 = vmatprep.subr.mxu0 0.0
    %527 = vmatpush2.msra.mxu0 0.0
    %528 = vmatprep.subr.mxu0 0.0
    %529 = vmatpush2.msra.mxu0 0.0
    %530 = vmatprep.subr.mxu0 0.0
    %531 = vmatpush2.msra.mxu0 0.0
    %532 = vmatprep.subr.mxu0 0.0
    %533 = vmatpush2.msra.mxu0 0.0
    %534 = vmatprep.subr.mxu0 0.0
    %535 = vmatpush2.msra.mxu0 0.0
    %536 = vmatprep.subr.mxu0 0.0
    %537 = vmatpush2.msra.mxu0 0.0
    %538 = vmatprep.subr.mxu0 0.0
    %539 = vmatpush2.msra.mxu0 0.0
    %540 = vmatprep.subr.mxu0 0.0
    %541 = vmatpush2.msra.mxu0 0.0
    %542 = vmatprep.subr.mxu0 0.0
    %543 = vmatpush2.msra.mxu0 0.0
    %544 = vmatprep.mubr.f32.mxu0 0.0
    %545 = vmatmul.mubr.f32.gmra.mxu0 %v478
    %v546 = vpop.f32.mrf.mxu0
    %v547 = vadd.f32 %v475, %v546
    %v548 = vpop.f32.mrf.mxu0
    %549 = vdwg.mxu0
    %v551 = vlaneseq
    %v552 = vshrl.u32 %v551, 7
    %v553 = vsub.s32 0, %v552
    %v554 = vrot.slane %v155, %v553
    %vm556 = vcmp.gt.f32.partialorder 0.0, %v554
    %v557 = vsel %vm556, 1, 0
    %v558 = vcvt.s32.f32 %v557
    %v560 = vlaneseq
    %v561 = vshrl.u32 %v560, 7
    %v562 = vsub.s32 0, %v561
    %v563 = vrot.slane %v153, %v562
    %v565 = vmul.f32 %v563, 0.0
    %v566 = vadd.f32 %v565, %v547
    %v567 = vmul.f32 %v558, %v554
    %v568 = vsub.f32 %v566, %v567
    %vm569 = vcmp.gt.f32.partialorder %v568, %v554
    %v570 = vsel %vm569, 1, 0
    %v571 = vcvt.s32.f32 %v570
    %v573 = vlaneseq
    %v574 = vshrl.u32 %v573, 7
    %v575 = vsub.s32 0, %v574
    %v576 = vrot.slane %v160, %v575
    %v579 = vsel %vm274, %v571, 0
    %581 = vmatprep.subr.mxu0 0.0
    %582 = vmatpush1.msra.mxu0 0.0
    %583 = vmatprep.subr.mxu0 0.0
    %584 = vmatpush1.msra.mxu0 0.0
    %585 = vmatprep.subr.mxu0 0.0
    %586 = vmatpush1.msra.mxu0 0.0
    %587 = vmatprep.subr.mxu0 0.0
    %588 = vmatpush1.msra.mxu0 0.0
    %589 = vmatprep.subr.mxu0 0.0
    %590 = vmatpush1.msra.mxu0 0.0
    %591 = vmatprep.subr.mxu0 0.0
    %592 = vmatpush1.msra.mxu0 0.0
    %593 = vmatprep.subr.mxu0 0.0
    %594 = vmatpush1.msra.mxu0 0.0
    %595 = vmatprep.subr.mxu0 0.0
    %596 = vmatpush1.msra.mxu0 0.0
    %597 = vmatprep.subr.mxu0 0.0
    %598 = vmatpush1.msra.mxu0 0.0
    %599 = vmatprep.subr.mxu0 0.0
    %600 = vmatpush1.msra.mxu0 0.0
    %601 = vmatprep.subr.mxu0 0.0
    %602 = vmatpush1.msra.mxu0 0.0
    %603 = vmatprep.subr.mxu0 0.0
    %604 = vmatpush1.msra.mxu0 0.0
    %605 = vmatprep.subr.mxu0 0.0
    %606 = vmatpush1.msra.mxu0 %v159
    %607 = vmatprep.subr.mxu0 0.0
    %608 = vmatpush1.msra.mxu0 %v158
    %609 = vmatprep.subr.mxu0 0.0
    %610 = vmatpush1.msra.mxu0 %v157
    %611 = vmatprep.subr.mxu0 0.0
    %612 = vmatpush1.msra.mxu0 %v156
    %613 = vmatprep.subr.mxu0 0.0
    %614 = vmatpush2.msra.mxu0 0.0
    %615 = vmatprep.subr.mxu0 0.0
    %616 = vmatpush2.msra.mxu0 0.0
    %617 = vmatprep.subr.mxu0 0.0
    %618 = vmatpush2.msra.mxu0 0.0
    %619 = vmatprep.subr.mxu0 0.0
    %620 = vmatpush2.msra.mxu0 0.0
    %621 = vmatprep.subr.mxu0 0.0
    %622 = vmatpush2.msra.mxu0 0.0
    %623 = vmatprep.subr.mxu0 0.0
    %624 = vmatpush2.msra.mxu0 0.0
    %625 = vmatprep.subr.mxu0 0.0
    %626 = vmatpush2.msra.mxu0 0.0
    %627 = vmatprep.subr.mxu0 0.0
    %628 = vmatpush2.msra.mxu0 0.0
    %629 = vmatprep.subr.mxu0 0.0
    %630 = vmatpush2.msra.mxu0 0.0
    %631 = vmatprep.subr.mxu0 0.0
    %632 = vmatpush2.msra.mxu0 0.0
    %633 = vmatprep.subr.mxu0 0.0
    %634 = vmatpush2.msra.mxu0 0.0
    %635 = vmatprep.subr.mxu0 0.0
    %636 = vmatpush2.msra.mxu0 0.0
    %637 = vmatprep.subr.mxu0 0.0
    %638 = vmatpush2.msra.mxu0 0.0
    %639 = vmatprep.subr.mxu0 0.0
    %640 = vmatpush2.msra.mxu0 0.0
    %641 = vmatprep.subr.mxu0 0.0
    %642 = vmatpush2.msra.mxu0 0.0
    %643 = vmatprep.subr.mxu0 0.0
    %644 = vmatpush2.msra.mxu0 0.0
    %645 = vmatprep.mubr.f32.mxu0 0.0
    %646 = vmatmul.mubr.f32.gmra.mxu0 %v579
    %v647 = vpop.f32.mrf.mxu0
    %v648 = vadd.f32 %v576, %v647
    %v649 = vpop.f32.mrf.mxu0
    %650 = vdwg.mxu0
    %v652 = vlaneseq
    %v653 = vshrl.u32 %v652, 7
    %v654 = vsub.s32 0, %v653
    %v655 = vrot.slane %v164, %v654
    %vm657 = vcmp.gt.f32.partialorder 0.0, %v655
    %v658 = vsel %vm657, 1, 0
    %v659 = vcvt.s32.f32 %v658
    %v661 = vlaneseq
    %v662 = vshrl.u32 %v661, 7
    %v663 = vsub.s32 0, %v662
    %v664 = vrot.slane %v163, %v663
    %v666 = vmul.f32 %v664, 0.0
    %v667 = vadd.f32 %v666, %v648
    %v668 = vmul.f32 %v659, %v655
    %v669 = vsub.f32 %v667, %v668
    %vm670 = vcmp.gt.f32.partialorder %v669, %v655
    %v671 = vsel %vm670, 1, 0
    %v672 = vcvt.s32.f32 %v671
    %vm673 = vcmask 31744
    %674 = vst.msk [vmem:[%s15] sm:$0xff] %vm673, %v672
    %s675 = scalar_lea.vmem [#allocation2], 8
    %v676 = vld [vmem:[%s675] sm:$0xff]
    %v678 = vsel %vm172, %v676, 0
    %680 = vmatprep.subr.mxu0 0.0
    %681 = vmatpush1.msra.mxu0 0.0
    %682 = vmatprep.subr.mxu0 0.0
    %683 = vmatpush1.msra.mxu0 0.0
    %684 = vmatprep.subr.mxu0 0.0
    %685 = vmatpush1.msra.mxu0 0.0
    %686 = vmatprep.subr.mxu0 0.0
    %687 = vmatpush1.msra.mxu0 0.0
    %688 = vmatprep.subr.mxu0 0.0
    %689 = vmatpush1.msra.mxu0 0.0
    %690 = vmatprep.subr.mxu0 0.0
    %691 = vmatpush1.msra.mxu0 0.0
    %692 = vmatprep.subr.mxu0 0.0
    %693 = vmatpush1.msra.mxu0 0.0
    %694 = vmatprep.subr.mxu0 0.0
    %695 = vmatpush1.msra.mxu0 0.0
    %696 = vmatprep.subr.mxu0 0.0
    %697 = vmatpush1.msra.mxu0 0.0
    %698 = vmatprep.subr.mxu0 0.0
    %699 = vmatpush1.msra.mxu0 0.0
    %700 = vmatprep.subr.mxu0 0.0
    %701 = vmatpush1.msra.mxu0 0.0
    %702 = vmatprep.subr.mxu0 0.0
    %703 = vmatpush1.msra.mxu0 0.0
    %704 = vmatprep.subr.mxu0 0.0
    %705 = vmatpush1.msra.mxu0 0.0
    %706 = vmatprep.subr.mxu0 0.0
    %707 = vmatpush1.msra.mxu0 0.0
    %708 = vmatprep.subr.mxu0 0.0
    %709 = vmatpush1.msra.mxu0 %v117
    %710 = vmatprep.subr.mxu0 0.0
    %711 = vmatpush1.msra.mxu0 %v116
    %712 = vmatprep.subr.mxu0 0.0
    %713 = vmatpush2.msra.mxu0 0.0
    %714 = vmatprep.subr.mxu0 0.0
    %715 = vmatpush2.msra.mxu0 0.0
    %716 = vmatprep.subr.mxu0 0.0
    %717 = vmatpush2.msra.mxu0 0.0
    %718 = vmatprep.subr.mxu0 0.0
    %719 = vmatpush2.msra.mxu0 0.0
    %720 = vmatprep.subr.mxu0 0.0
    %721 = vmatpush2.msra.mxu0 0.0
    %722 = vmatprep.subr.mxu0 0.0
    %723 = vmatpush2.msra.mxu0 0.0
    %724 = vmatprep.subr.mxu0 0.0
    %725 = vmatpush2.msra.mxu0 0.0
    %726 = vmatprep.subr.mxu0 0.0
    %727 = vmatpush2.msra.mxu0 0.0
    %728 = vmatprep.subr.mxu0 0.0
    %729 = vmatpush2.msra.mxu0 0.0
    %730 = vmatprep.subr.mxu0 0.0
    %731 = vmatpush2.msra.mxu0 0.0
    %732 = vmatprep.subr.mxu0 0.0
    %733 = vmatpush2.msra.mxu0 0.0
    %734 = vmatprep.subr.mxu0 0.0
    %735 = vmatpush2.msra.mxu0 0.0
    %736 = vmatprep.subr.mxu0 0.0
    %737 = vmatpush2.msra.mxu0 0.0
    %738 = vmatprep.subr.mxu0 0.0
    %739 = vmatpush2.msra.mxu0 0.0
    %740 = vmatprep.subr.mxu0 0.0
    %741 = vmatpush2.msra.mxu0 0.0
    %742 = vmatprep.subr.mxu0 0.0
    %743 = vmatpush2.msra.mxu0 0.0
    %744 = vmatprep.mubr.f32.mxu0 0.0
    %745 = vmatmul.mubr.f32.gmra.mxu0 %v678
    %v746 = vpop.f32.mrf.mxu0
    %v747 = vadd.f32 %v170, %v746
    %v748 = vpop.f32.mrf.mxu0
    %749 = vdwg.mxu0
    %v750 = vmul.f32 %v259, %v264
    %v751 = vadd.f32 %v750, %v747
    %v752 = vmul.f32 %v267, %v250
    %v753 = vsub.f32 %v751, %v752
    %vm754 = vcmp.gt.f32.partialorder %v753, %v250
    %v755 = vsel %vm754, 1, 0
    %v756 = vcvt.s32.f32 %v755
    %v758 = vsel %vm274, %v756, 0
    %760 = vmatprep.subr.mxu0 0.0
    %761 = vmatpush1.msra.mxu0 0.0
    %762 = vmatprep.subr.mxu0 0.0
    %763 = vmatpush1.msra.mxu0 0.0
    %764 = vmatprep.subr.mxu0 0.0
    %765 = vmatpush1.msra.mxu0 0.0
    %766 = vmatprep.subr.mxu0 0.0
    %767 = vmatpush1.msra.mxu0 0.0
    %768 = vmatprep.subr.mxu0 0.0
    %769 = vmatpush1.msra.mxu0 0.0
    %770 = vmatprep.subr.mxu0 0.0
    %771 = vmatpush1.msra.mxu0 0.0
    %772 = vmatprep.subr.mxu0 0.0
    %773 = vmatpush1.msra.mxu0 0.0
    %774 = vmatprep.subr.mxu0 0.0
    %775 = vmatpush1.msra.mxu0 0.0
    %776 = vmatprep.subr.mxu0 0.0
    %777 = vmatpush1.msra.mxu0 0.0
    %778 = vmatprep.subr.mxu0 0.0
    %779 = vmatpush1.msra.mxu0 0.0
    %780 = vmatprep.subr.mxu0 0.0
    %781 = vmatpush1.msra.mxu0 0.0
    %782 = vmatprep.subr.mxu0 0.0
    %783 = vmatpush1.msra.mxu0 0.0
    %784 = vmatprep.subr.mxu0 0.0
    %785 = vmatpush1.msra.mxu0 %v126
    %786 = vmatprep.subr.mxu0 0.0
    %787 = vmatpush1.msra.mxu0 %v125
    %788 = vmatprep.subr.mxu0 0.0
    %789 = vmatpush1.msra.mxu0 %v124
    %790 = vmatprep.subr.mxu0 0.0
    %791 = vmatpush1.msra.mxu0 %v123
    %792 = vmatprep.subr.mxu0 0.0
    %793 = vmatpush2.msra.mxu0 0.0
    %794 = vmatprep.subr.mxu0 0.0
    %795 = vmatpush2.msra.mxu0 0.0
    %796 = vmatprep.subr.mxu0 0.0
    %797 = vmatpush2.msra.mxu0 0.0
    %798 = vmatprep.subr.mxu0 0.0
    %799 = vmatpush2.msra.mxu0 0.0
    %800 = vmatprep.subr.mxu0 0.0
    %801 = vmatpush2.msra.mxu0 0.0
    %802 = vmatprep.subr.mxu0 0.0
    %803 = vmatpush2.msra.mxu0 0.0
    %804 = vmatprep.subr.mxu0 0.0
    %805 = vmatpush2.msra.mxu0 0.0
    %806 = vmatprep.subr.mxu0 0.0
    %807 = vmatpush2.msra.mxu0 0.0
    %808 = vmatprep.subr.mxu0 0.0
    %809 = vmatpush2.msra.mxu0 0.0
    %810 = vmatprep.subr.mxu0 0.0
    %811 = vmatpush2.msra.mxu0 0.0
    %812 = vmatprep.subr.mxu0 0.0
    %813 = vmatpush2.msra.mxu0 0.0
    %814 = vmatprep.subr.mxu0 0.0
    %815 = vmatpush2.msra.mxu0 0.0
    %816 = vmatprep.subr.mxu0 0.0
    %817 = vmatpush2.msra.mxu0 0.0
    %818 = vmatprep.subr.mxu0 0.0
    %819 = vmatpush2.msra.mxu0 0.0
    %820 = vmatprep.subr.mxu0 0.0
    %821 = vmatpush2.msra.mxu0 0.0
    %822 = vmatprep.subr.mxu0 0.0
    %823 = vmatpush2.msra.mxu0 0.0
    %824 = vmatprep.mubr.f32.mxu0 0.0
    %825 = vmatmul.mubr.f32.gmra.mxu0 %v758
    %v826 = vpop.f32.mrf.mxu0
    %v827 = vadd.f32 %v272, %v826
    %v828 = vpop.f32.mrf.mxu0
    %829 = vdwg.mxu0
    %v830 = vmul.f32 %v361, %v366
    %v831 = vadd.f32 %v830, %v827
    %v832 = vmul.f32 %v369, %v352
    %v833 = vsub.f32 %v831, %v832
    %vm834 = vcmp.gt.f32.partialorder %v833, %v352
    %v835 = vsel %vm834, 1, 0
    %v836 = vcvt.s32.f32 %v835
    %v838 = vsel %vm274, %v836, 0
    %840 = vmatprep.subr.mxu0 0.0
    %841 = vmatpush1.msra.mxu0 0.0
    %842 = vmatprep.subr.mxu0 0.0
    %843 = vmatpush1.msra.mxu0 0.0
    %844 = vmatprep.subr.mxu0 0.0
    %845 = vmatpush1.msra.mxu0 0.0
    %846 = vmatprep.subr.mxu0 0.0
    %847 = vmatpush1.msra.mxu0 0.0
    %848 = vmatprep.subr.mxu0 0.0
    %849 = vmatpush1.msra.mxu0 0.0
    %850 = vmatprep.subr.mxu0 0.0
    %851 = vmatpush1.msra.mxu0 0.0
    %852 = vmatprep.subr.mxu0 0.0
    %853 = vmatpush1.msra.mxu0 0.0
    %854 = vmatprep.subr.mxu0 0.0
    %855 = vmatpush1.msra.mxu0 0.0
    %856 = vmatprep.subr.mxu0 0.0
    %857 = vmatpush1.msra.mxu0 0.0
    %858 = vmatprep.subr.mxu0 0.0
    %859 = vmatpush1.msra.mxu0 0.0
    %860 = vmatprep.subr.mxu0 0.0
    %861 = vmatpush1.msra.mxu0 0.0
    %862 = vmatprep.subr.mxu0 0.0
    %863 = vmatpush1.msra.mxu0 0.0
    %864 = vmatprep.subr.mxu0 0.0
    %865 = vmatpush1.msra.mxu0 %v137
    %866 = vmatprep.subr.mxu0 0.0
    %867 = vmatpush1.msra.mxu0 %v136
    %868 = vmatprep.subr.mxu0 0.0
    %869 = vmatpush1.msra.mxu0 %v135
    %870 = vmatprep.subr.mxu0 0.0
    %871 = vmatpush1.msra.mxu0 %v134
    %872 = vmatprep.subr.mxu0 0.0
    %873 = vmatpush2.msra.mxu0 0.0
    %874 = vmatprep.subr.mxu0 0.0
    %875 = vmatpush2.msra.mxu0 0.0
    %876 = vmatprep.subr.mxu0 0.0
    %877 = vmatpush2.msra.mxu0 0.0
    %878 = vmatprep.subr.mxu0 0.0
    %879 = vmatpush2.msra.mxu0 0.0
    %880 = vmatprep.subr.mxu0 0.0
    %881 = vmatpush2.msra.mxu0 0.0
    %882 = vmatprep.subr.mxu0 0.0
    %883 = vmatpush2.msra.mxu0 0.0
    %884 = vmatprep.subr.mxu0 0.0
    %885 = vmatpush2.msra.mxu0 0.0
    %886 = vmatprep.subr.mxu0 0.0
    %887 = vmatpush2.msra.mxu0 0.0
    %888 = vmatprep.subr.mxu0 0.0
    %889 = vmatpush2.msra.mxu0 0.0
    %890 = vmatprep.subr.mxu0 0.0
    %891 = vmatpush2.msra.mxu0 0.0
    %892 = vmatprep.subr.mxu0 0.0
    %893 = vmatpush2.msra.mxu0 0.0
    %894 = vmatprep.subr.mxu0 0.0
    %895 = vmatpush2.msra.mxu0 0.0
    %896 = vmatprep.subr.mxu0 0.0
    %897 = vmatpush2.msra.mxu0 0.0
    %898 = vmatprep.subr.mxu0 0.0
    %899 = vmatpush2.msra.mxu0 0.0
    %900 = vmatprep.subr.mxu0 0.0
    %901 = vmatpush2.msra.mxu0 0.0
    %902 = vmatprep.subr.mxu0 0.0
    %903 = vmatpush2.msra.mxu0 0.0
    %904 = vmatprep.mubr.f32.mxu0 0.0
    %905 = vmatmul.mubr.f32.gmra.mxu0 %v838
    %v906 = vpop.f32.mrf.mxu0
    %v907 = vadd.f32 %v374, %v906
    %v908 = vpop.f32.mrf.mxu0
    %909 = vdwg.mxu0
    %v910 = vmul.f32 %v462, %v467
    %v911 = vadd.f32 %v910, %v907
    %v912 = vmul.f32 %v470, %v453
    %v913 = vsub.f32 %v911, %v912
    %vm914 = vcmp.gt.f32.partialorder %v913, %v453
    %v915 = vsel %vm914, 1, 0
    %v916 = vcvt.s32.f32 %v915
    %v918 = vsel %vm274, %v916, 0
    %920 = vmatprep.subr.mxu0 0.0
    %921 = vmatpush1.msra.mxu0 0.0
    %922 = vmatprep.subr.mxu0 0.0
    %923 = vmatpush1.msra.mxu0 0.0
    %924 = vmatprep.subr.mxu0 0.0
    %925 = vmatpush1.msra.mxu0 0.0
    %926 = vmatprep.subr.mxu0 0.0
    %927 = vmatpush1.msra.mxu0 0.0
    %928 = vmatprep.subr.mxu0 0.0
    %929 = vmatpush1.msra.mxu0 0.0
    %930 = vmatprep.subr.mxu0 0.0
    %931 = vmatpush1.msra.mxu0 0.0
    %932 = vmatprep.subr.mxu0 0.0
    %933 = vmatpush1.msra.mxu0 0.0
    %934 = vmatprep.subr.mxu0 0.0
    %935 = vmatpush1.msra.mxu0 0.0
    %936 = vmatprep.subr.mxu0 0.0
    %937 = vmatpush1.msra.mxu0 0.0
    %938 = vmatprep.subr.mxu0 0.0
    %939 = vmatpush1.msra.mxu0 0.0
    %940 = vmatprep.subr.mxu0 0.0
    %941 = vmatpush1.msra.mxu0 0.0
    %942 = vmatprep.subr.mxu0 0.0
    %943 = vmatpush1.msra.mxu0 0.0
    %944 = vmatprep.subr.mxu0 0.0
    %945 = vmatpush1.msra.mxu0 %v148
    %946 = vmatprep.subr.mxu0 0.0
    %947 = vmatpush1.msra.mxu0 %v147
    %948 = vmatprep.subr.mxu0 0.0
    %949 = vmatpush1.msra.mxu0 %v146
    %950 = vmatprep.subr.mxu0 0.0
    %951 = vmatpush1.msra.mxu0 %v145
    %952 = vmatprep.subr.mxu0 0.0
    %953 = vmatpush2.msra.mxu0 0.0
    %954 = vmatprep.subr.mxu0 0.0
    %955 = vmatpush2.msra.mxu0 0.0
    %956 = vmatprep.subr.mxu0 0.0
    %957 = vmatpush2.msra.mxu0 0.0
    %958 = vmatprep.subr.mxu0 0.0
    %959 = vmatpush2.msra.mxu0 0.0
    %960 = vmatprep.subr.mxu0 0.0
    %961 = vmatpush2.msra.mxu0 0.0
    %962 = vmatprep.subr.mxu0 0.0
    %963 = vmatpush2.msra.mxu0 0.0
    %964 = vmatprep.subr.mxu0 0.0
    %965 = vmatpush2.msra.mxu0 0.0
    %966 = vmatprep.subr.mxu0 0.0
    %967 = vmatpush2.msra.mxu0 0.0
    %968 = vmatprep.subr.mxu0 0.0
    %969 = vmatpush2.msra.mxu0 0.0
    %970 = vmatprep.subr.mxu0 0.0
    %971 = vmatpush2.msra.mxu0 0.0
    %972 = vmatprep.subr.mxu0 0.0
    %973 = vmatpush2.msra.mxu0 0.0
    %974 = vmatprep.subr.mxu0 0.0
    %975 = vmatpush2.msra.mxu0 0.0
    %976 = vmatprep.subr.mxu0 0.0
    %977 = vmatpush2.msra.mxu0 0.0
    %978 = vmatprep.subr.mxu0 0.0
    %979 = vmatpush2.msra.mxu0 0.0
    %980 = vmatprep.subr.mxu0 0.0
    %981 = vmatpush2.msra.mxu0 0.0
    %982 = vmatprep.subr.mxu0 0.0
    %983 = vmatpush2.msra.mxu0 0.0
    %984 = vmatprep.mubr.f32.mxu0 0.0
    %985 = vmatmul.mubr.f32.gmra.mxu0 %v918
    %v986 = vpop.f32.mrf.mxu0
    %v987 = vadd.f32 %v475, %v986
    %v988 = vpop.f32.mrf.mxu0
    %989 = vdwg.mxu0
    %v990 = vmul.f32 %v563, %v568
    %v991 = vadd.f32 %v990, %v987
    %v992 = vmul.f32 %v571, %v554
    %v993 = vsub.f32 %v991, %v992
    %vm994 = vcmp.gt.f32.partialorder %v993, %v554
    %v995 = vsel %vm994, 1, 0
    %v996 = vcvt.s32.f32 %v995
    %v998 = vsel %vm274, %v996, 0
    %1000 = vmatprep.subr.mxu0 0.0
    %1001 = vmatpush1.msra.mxu0 0.0
    %1002 = vmatprep.subr.mxu0 0.0
    %1003 = vmatpush1.msra.mxu0 0.0
    %1004 = vmatprep.subr.mxu0 0.0
    %1005 = vmatpush1.msra.mxu0 0.0
    %1006 = vmatprep.subr.mxu0 0.0
    %1007 = vmatpush1.msra.mxu0 0.0
    %1008 = vmatprep.subr.mxu0 0.0
    %1009 = vmatpush1.msra.mxu0 0.0
    %1010 = vmatprep.subr.mxu0 0.0
    %1011 = vmatpush1.msra.mxu0 0.0
    %1012 = vmatprep.subr.mxu0 0.0
    %1013 = vmatpush1.msra.mxu0 0.0
    %1014 = vmatprep.subr.mxu0 0.0
    %1015 = vmatpush1.msra.mxu0 0.0
    %1016 = vmatprep.subr.mxu0 0.0
    %1017 = vmatpush1.msra.mxu0 0.0
    %1018 = vmatprep.subr.mxu0 0.0
    %1019 = vmatpush1.msra.mxu0 0.0
    %1020 = vmatprep.subr.mxu0 0.0
    %1021 = vmatpush1.msra.mxu0 0.0
    %1022 = vmatprep.subr.mxu0 0.0
    %1023 = vmatpush1.msra.mxu0 0.0
    %1024 = vmatprep.subr.mxu0 0.0
    %1025 = vmatpush1.msra.mxu0 %v159
    %1026 = vmatprep.subr.mxu0 0.0
    %1027 = vmatpush1.msra.mxu0 %v158
    %1028 = vmatprep.subr.mxu0 0.0
    %1029 = vmatpush1.msra.mxu0 %v157
    %1030 = vmatprep.subr.mxu0 0.0
    %1031 = vmatpush1.msra.mxu0 %v156
    %1032 = vmatprep.subr.mxu0 0.0
    %1033 = vmatpush2.msra.mxu0 0.0
    %1034 = vmatprep.subr.mxu0 0.0
    %1035 = vmatpush2.msra.mxu0 0.0
    %1036 = vmatprep.subr.mxu0 0.0
    %1037 = vmatpush2.msra.mxu0 0.0
    %1038 = vmatprep.subr.mxu0 0.0
    %1039 = vmatpush2.msra.mxu0 0.0
    %1040 = vmatprep.subr.mxu0 0.0
    %1041 = vmatpush2.msra.mxu0 0.0
    %1042 = vmatprep.subr.mxu0 0.0
    %1043 = vmatpush2.msra.mxu0 0.0
    %1044 = vmatprep.subr.mxu0 0.0
    %1045 = vmatpush2.msra.mxu0 0.0
    %1046 = vmatprep.subr.mxu0 0.0
    %1047 = vmatpush2.msra.mxu0 0.0
    %1048 = vmatprep.subr.mxu0 0.0
    %1049 = vmatpush2.msra.mxu0 0.0
    %1050 = vmatprep.subr.mxu0 0.0
    %1051 = vmatpush2.msra.mxu0 0.0
    %1052 = vmatprep.subr.mxu0 0.0
    %1053 = vmatpush2.msra.mxu0 0.0
    %1054 = vmatprep.subr.mxu0 0.0
    %1055 = vmatpush2.msra.mxu0 0.0
    %1056 = vmatprep.subr.mxu0 0.0
    %1057 = vmatpush2.msra.mxu0 0.0
    %1058 = vmatprep.subr.mxu0 0.0
    %1059 = vmatpush2.msra.mxu0 0.0
    %1060 = vmatprep.subr.mxu0 0.0
    %1061 = vmatpush2.msra.mxu0 0.0
    %1062 = vmatprep.subr.mxu0 0.0
    %1063 = vmatpush2.msra.mxu0 0.0
    %1064 = vmatprep.mubr.f32.mxu0 0.0
    %1065 = vmatmul.mubr.f32.gmra.mxu0 %v998
    %v1066 = vpop.f32.mrf.mxu0
    %v1067 = vadd.f32 %v576, %v1066
    %v1068 = vpop.f32.mrf.mxu0
    %1069 = vdwg.mxu0
    %v1070 = vmul.f32 %v664, %v669
    %v1071 = vadd.f32 %v1070, %v1067
    %v1072 = vmul.f32 %v672, %v655
    %v1073 = vsub.f32 %v1071, %v1072
    %vm1074 = vcmp.gt.f32.partialorder %v1073, %v655
    %v1075 = vsel %vm1074, 1, 0
    %v1076 = vcvt.s32.f32 %v1075
    %s1077 = scalar_lea.vmem %s15, 8
    %1078 = vst.msk [vmem:[%s1077] sm:$0xff] %vm673, %v1076
    %s1079 = scalar_lea.vmem [#allocation2], 16
    %v1080 = vld [vmem:[%s1079] sm:$0xff]
    %v1082 = vsel %vm172, %v1080, 0
    %1084 = vmatprep.subr.mxu0 0.0
    %1085 = vmatpush1.msra.mxu0 0.0
    %1086 = vmatprep.subr.mxu0 0.0
    %1087 = vmatpush1.msra.mxu0 0.0
    %1088 = vmatprep.subr.mxu0 0.0
    %1089 = vmatpush1.msra.mxu0 0.0
    %1090 = vmatprep.subr.mxu0 0.0
    %1091 = vmatpush1.msra.mxu0 0.0
    %1092 = vmatprep.subr.mxu0 0.0
    %1093 = vmatpush1.msra.mxu0 0.0
    %1094 = vmatprep.subr.mxu0 0.0
    %1095 = vmatpush1.msra.mxu0 0.0
    %1096 = vmatprep.subr.mxu0 0.0
    %1097 = vmatpush1.msra.mxu0 0.0
    %1098 = vmatprep.subr.mxu0 0.0
    %1099 = vmatpush1.msra.mxu0 0.0
    %1100 = vmatprep.subr.mxu0 0.0
    %1101 = vmatpush1.msra.mxu0 0.0
    %1102 = vmatprep.subr.mxu0 0.0
    %1103 = vmatpush1.msra.mxu0 0.0
    %1104 = vmatprep.subr.mxu0 0.0
    %1105 = vmatpush1.msra.mxu0 0.0
    %1106 = vmatprep.subr.mxu0 0.0
    %1107 = vmatpush1.msra.mxu0 0.0
    %1108 = vmatprep.subr.mxu0 0.0
    %1109 = vmatpush1.msra.mxu0 0.0
    %1110 = vmatprep.subr.mxu0 0.0
    %1111 = vmatpush1.msra.mxu0 0.0
    %1112 = vmatprep.subr.mxu0 0.0
    %1113 = vmatpush1.msra.mxu0 %v117
    %1114 = vmatprep.subr.mxu0 0.0
    %1115 = vmatpush1.msra.mxu0 %v116
    %1116 = vmatprep.subr.mxu0 0.0
    %1117 = vmatpush2.msra.mxu0 0.0
    %1118 = vmatprep.subr.mxu0 0.0
    %1119 = vmatpush2.msra.mxu0 0.0
    %1120 = vmatprep.subr.mxu0 0.0
    %1121 = vmatpush2.msra.mxu0 0.0
    %1122 = vmatprep.subr.mxu0 0.0
    %1123 = vmatpush2.msra.mxu0 0.0
    %1124 = vmatprep.subr.mxu0 0.0
    %1125 = vmatpush2.msra.mxu0 0.0
    %1126 = vmatprep.subr.mxu0 0.0
    %1127 = vmatpush2.msra.mxu0 0.0
    %1128 = vmatprep.subr.mxu0 0.0
    %1129 = vmatpush2.msra.mxu0 0.0
    %1130 = vmatprep.subr.mxu0 0.0
    %1131 = vmatpush2.msra.mxu0 0.0
    %1132 = vmatprep.subr.mxu0 0.0
    %1133 = vmatpush2.msra.mxu0 0.0
    %1134 = vmatprep.subr.mxu0 0.0
    %1135 = vmatpush2.msra.mxu0 0.0
    %1136 = vmatprep.subr.mxu0 0.0
    %1137 = vmatpush2.msra.mxu0 0.0
    %1138 = vmatprep.subr.mxu0 0.0
    %1139 = vmatpush2.msra.mxu0 0.0
    %1140 = vmatprep.subr.mxu0 0.0
    %1141 = vmatpush2.msra.mxu0 0.0
    %1142 = vmatprep.subr.mxu0 0.0
    %1143 = vmatpush2.msra.mxu0 0.0
    %1144 = vmatprep.subr.mxu0 0.0
    %1145 = vmatpush2.msra.mxu0 0.0
    %1146 = vmatprep.subr.mxu0 0.0
    %1147 = vmatpush2.msra.mxu0 0.0
    %1148 = vmatprep.mubr.f32.mxu0 0.0
    %1149 = vmatmul.mubr.f32.gmra.mxu0 %v1082
    %v1150 = vpop.f32.mrf.mxu0
    %v1151 = vadd.f32 %v170, %v1150
    %v1152 = vpop.f32.mrf.mxu0
    %1153 = vdwg.mxu0
    %v1154 = vmul.f32 %v259, %v753
    %v1155 = vadd.f32 %v1154, %v1151
    %v1156 = vmul.f32 %v756, %v250
    %v1157 = vsub.f32 %v1155, %v1156
    %vm1158 = vcmp.gt.f32.partialorder %v1157, %v250
    %v1159 = vsel %vm1158, 1, 0
    %v1160 = vcvt.s32.f32 %v1159
    %v1162 = vsel %vm274, %v1160, 0
    %1164 = vmatprep.subr.mxu0 0.0
    %1165 = vmatpush1.msra.mxu0 0.0
    %1166 = vmatprep.subr.mxu0 0.0
    %1167 = vmatpush1.msra.mxu0 0.0
    %1168 = vmatprep.subr.mxu0 0.0
    %1169 = vmatpush1.msra.mxu0 0.0
    %1170 = vmatprep.subr.mxu0 0.0
    %1171 = vmatpush1.msra.mxu0 0.0
    %1172 = vmatprep.subr.mxu0 0.0
    %1173 = vmatpush1.msra.mxu0 0.0
    %1174 = vmatprep.subr.mxu0 0.0
    %1175 = vmatpush1.msra.mxu0 0.0
    %1176 = vmatprep.subr.mxu0 0.0
    %1177 = vmatpush1.msra.mxu0 0.0
    %1178 = vmatprep.subr.mxu0 0.0
    %1179 = vmatpush1.msra.mxu0 0.0
    %1180 = vmatprep.subr.mxu0 0.0
    %1181 = vmatpush1.msra.mxu0 0.0
    %1182 = vmatprep.subr.mxu0 0.0
    %1183 = vmatpush1.msra.mxu0 0.0
    %1184 = vmatprep.subr.mxu0 0.0
    %1185 = vmatpush1.msra.mxu0 0.0
    %1186 = vmatprep.subr.mxu0 0.0
    %1187 = vmatpush1.msra.mxu0 0.0
    %1188 = vmatprep.subr.mxu0 0.0
    %1189 = vmatpush1.msra.mxu0 %v126
    %1190 = vmatprep.subr.mxu0 0.0
    %1191 = vmatpush1.msra.mxu0 %v125
    %1192 = vmatprep.subr.mxu0 0.0
    %1193 = vmatpush1.msra.mxu0 %v124
    %1194 = vmatprep.subr.mxu0 0.0
    %1195 = vmatpush1.msra.mxu0 %v123
    %1196 = vmatprep.subr.mxu0 0.0
    %1197 = vmatpush2.msra.mxu0 0.0
    %1198 = vmatprep.subr.mxu0 0.0
    %1199 = vmatpush2.msra.mxu0 0.0
    %1200 = vmatprep.subr.mxu0 0.0
    %1201 = vmatpush2.msra.mxu0 0.0
    %1202 = vmatprep.subr.mxu0 0.0
    %1203 = vmatpush2.msra.mxu0 0.0
    %1204 = vmatprep.subr.mxu0 0.0
    %1205 = vmatpush2.msra.mxu0 0.0
    %1206 = vmatprep.subr.mxu0 0.0
    %1207 = vmatpush2.msra.mxu0 0.0
    %1208 = vmatprep.subr.mxu0 0.0
    %1209 = vmatpush2.msra.mxu0 0.0
    %1210 = vmatprep.subr.mxu0 0.0
    %1211 = vmatpush2.msra.mxu0 0.0
    %1212 = vmatprep.subr.mxu0 0.0
    %1213 = vmatpush2.msra.mxu0 0.0
    %1214 = vmatprep.subr.mxu0 0.0
    %1215 = vmatpush2.msra.mxu0 0.0
    %1216 = vmatprep.subr.mxu0 0.0
    %1217 = vmatpush2.msra.mxu0 0.0
    %1218 = vmatprep.subr.mxu0 0.0
    %1219 = vmatpush2.msra.mxu0 0.0
    %1220 = vmatprep.subr.mxu0 0.0
    %1221 = vmatpush2.msra.mxu0 0.0
    %1222 = vmatprep.subr.mxu0 0.0
    %1223 = vmatpush2.msra.mxu0 0.0
    %1224 = vmatprep.subr.mxu0 0.0
    %1225 = vmatpush2.msra.mxu0 0.0
    %1226 = vmatprep.subr.mxu0 0.0
    %1227 = vmatpush2.msra.mxu0 0.0
    %1228 = vmatprep.mubr.f32.mxu0 0.0
    %1229 = vmatmul.mubr.f32.gmra.mxu0 %v1162
    %v1230 = vpop.f32.mrf.mxu0
    %v1231 = vadd.f32 %v272, %v1230
    %v1232 = vpop.f32.mrf.mxu0
    %1233 = vdwg.mxu0
    %v1234 = vmul.f32 %v361, %v833
    %v1235 = vadd.f32 %v1234, %v1231
    %v1236 = vmul.f32 %v836, %v352
    %v1237 = vsub.f32 %v1235, %v1236
    %vm1238 = vcmp.gt.f32.partialorder %v1237, %v352
    %v1239 = vsel %vm1238, 1, 0
    %v1240 = vcvt.s32.f32 %v1239
    %v1242 = vsel %vm274, %v1240, 0
    %1244 = vmatprep.subr.mxu0 0.0
    %1245 = vmatpush1.msra.mxu0 0.0
    %1246 = vmatprep.subr.mxu0 0.0
    %1247 = vmatpush1.msra.mxu0 0.0
    %1248 = vmatprep.subr.mxu0 0.0
    %1249 = vmatpush1.msra.mxu0 0.0
    %1250 = vmatprep.subr.mxu0 0.0
    %1251 = vmatpush1.msra.mxu0 0.0
    %1252 = vmatprep.subr.mxu0 0.0
    %1253 = vmatpush1.msra.mxu0 0.0
    %1254 = vmatprep.subr.mxu0 0.0
    %1255 = vmatpush1.msra.mxu0 0.0
    %1256 = vmatprep.subr.mxu0 0.0
    %1257 = vmatpush1.msra.mxu0 0.0
    %1258 = vmatprep.subr.mxu0 0.0
    %1259 = vmatpush1.msra.mxu0 0.0
    %1260 = vmatprep.subr.mxu0 0.0
    %1261 = vmatpush1.msra.mxu0 0.0
    %1262 = vmatprep.subr.mxu0 0.0
    %1263 = vmatpush1.msra.mxu0 0.0
    %1264 = vmatprep.subr.mxu0 0.0
    %1265 = vmatpush1.msra.mxu0 0.0
    %1266 = vmatprep.subr.mxu0 0.0
    %1267 = vmatpush1.msra.mxu0 0.0
    %1268 = vmatprep.subr.mxu0 0.0
    %1269 = vmatpush1.msra.mxu0 %v137
    %1270 = vmatprep.subr.mxu0 0.0
    %1271 = vmatpush1.msra.mxu0 %v136
    %1272 = vmatprep.subr.mxu0 0.0
    %1273 = vmatpush1.msra.mxu0 %v135
    %1274 = vmatprep.subr.mxu0 0.0
    %1275 = vmatpush1.msra.mxu0 %v134
    %1276 = vmatprep.subr.mxu0 0.0
    %1277 = vmatpush2.msra.mxu0 0.0
    %1278 = vmatprep.subr.mxu0 0.0
    %1279 = vmatpush2.msra.mxu0 0.0
    %1280 = vmatprep.subr.mxu0 0.0
    %1281 = vmatpush2.msra.mxu0 0.0
    %1282 = vmatprep.subr.mxu0 0.0
    %1283 = vmatpush2.msra.mxu0 0.0
    %1284 = vmatprep.subr.mxu0 0.0
    %1285 = vmatpush2.msra.mxu0 0.0
    %1286 = vmatprep.subr.mxu0 0.0
    %1287 = vmatpush2.msra.mxu0 0.0
    %1288 = vmatprep.subr.mxu0 0.0
    %1289 = vmatpush2.msra.mxu0 0.0
    %1290 = vmatprep.subr.mxu0 0.0
    %1291 = vmatpush2.msra.mxu0 0.0
    %1292 = vmatprep.subr.mxu0 0.0
    %1293 = vmatpush2.msra.mxu0 0.0
    %1294 = vmatprep.subr.mxu0 0.0
    %1295 = vmatpush2.msra.mxu0 0.0
    %1296 = vmatprep.subr.mxu0 0.0
    %1297 = vmatpush2.msra.mxu0 0.0
    %1298 = vmatprep.subr.mxu0 0.0
    %1299 = vmatpush2.msra.mxu0 0.0
    %1300 = vmatprep.subr.mxu0 0.0
    %1301 = vmatpush2.msra.mxu0 0.0
    %1302 = vmatprep.subr.mxu0 0.0
    %1303 = vmatpush2.msra.mxu0 0.0
    %1304 = vmatprep.subr.mxu0 0.0
    %1305 = vmatpush2.msra.mxu0 0.0
    %1306 = vmatprep.subr.mxu0 0.0
    %1307 = vmatpush2.msra.mxu0 0.0
    %1308 = vmatprep.mubr.f32.mxu0 0.0
    %1309 = vmatmul.mubr.f32.gmra.mxu0 %v1242
    %v1310 = vpop.f32.mrf.mxu0
    %v1311 = vadd.f32 %v374, %v1310
    %v1312 = vpop.f32.mrf.mxu0
    %1313 = vdwg.mxu0
    %v1314 = vmul.f32 %v462, %v913
    %v1315 = vadd.f32 %v1314, %v1311
    %v1316 = vmul.f32 %v916, %v453
    %v1317 = vsub.f32 %v1315, %v1316
    %vm1318 = vcmp.gt.f32.partialorder %v1317, %v453
    %v1319 = vsel %vm1318, 1, 0
    %v1320 = vcvt.s32.f32 %v1319
    %v1322 = vsel %vm274, %v1320, 0
    %1324 = vmatprep.subr.mxu0 0.0
    %1325 = vmatpush1.msra.mxu0 0.0
    %1326 = vmatprep.subr.mxu0 0.0
    %1327 = vmatpush1.msra.mxu0 0.0
    %1328 = vmatprep.subr.mxu0 0.0
    %1329 = vmatpush1.msra.mxu0 0.0
    %1330 = vmatprep.subr.mxu0 0.0
    %1331 = vmatpush1.msra.mxu0 0.0
    %1332 = vmatprep.subr.mxu0 0.0
    %1333 = vmatpush1.msra.mxu0 0.0
    %1334 = vmatprep.subr.mxu0 0.0
    %1335 = vmatpush1.msra.mxu0 0.0
    %1336 = vmatprep.subr.mxu0 0.0
    %1337 = vmatpush1.msra.mxu0 0.0
    %1338 = vmatprep.subr.mxu0 0.0
    %1339 = vmatpush1.msra.mxu0 0.0
    %1340 = vmatprep.subr.mxu0 0.0
    %1341 = vmatpush1.msra.mxu0 0.0
    %1342 = vmatprep.subr.mxu0 0.0
    %1343 = vmatpush1.msra.mxu0 0.0
    %1344 = vmatprep.subr.mxu0 0.0
    %1345 = vmatpush1.msra.mxu0 0.0
    %1346 = vmatprep.subr.mxu0 0.0
    %1347 = vmatpush1.msra.mxu0 0.0
    %1348 = vmatprep.subr.mxu0 0.0
    %1349 = vmatpush1.msra.mxu0 %v148
    %1350 = vmatprep.subr.mxu0 0.0
    %1351 = vmatpush1.msra.mxu0 %v147
    %1352 = vmatprep.subr.mxu0 0.0
    %1353 = vmatpush1.msra.mxu0 %v146
    %1354 = vmatprep.subr.mxu0 0.0
    %1355 = vmatpush1.msra.mxu0 %v145
    %1356 = vmatprep.subr.mxu0 0.0
    %1357 = vmatpush2.msra.mxu0 0.0
    %1358 = vmatprep.subr.mxu0 0.0
    %1359 = vmatpush2.msra.mxu0 0.0
    %1360 = vmatprep.subr.mxu0 0.0
    %1361 = vmatpush2.msra.mxu0 0.0
    %1362 = vmatprep.subr.mxu0 0.0
    %1363 = vmatpush2.msra.mxu0 0.0
    %1364 = vmatprep.subr.mxu0 0.0
    %1365 = vmatpush2.msra.mxu0 0.0
    %1366 = vmatprep.subr.mxu0 0.0
    %1367 = vmatpush2.msra.mxu0 0.0
    %1368 = vmatprep.subr.mxu0 0.0
    %1369 = vmatpush2.msra.mxu0 0.0
    %1370 = vmatprep.subr.mxu0 0.0
    %1371 = vmatpush2.msra.mxu0 0.0
    %1372 = vmatprep.subr.mxu0 0.0
    %1373 = vmatpush2.msra.mxu0 0.0
    %1374 = vmatprep.subr.mxu0 0.0
    %1375 = vmatpush2.msra.mxu0 0.0
    %1376 = vmatprep.subr.mxu0 0.0
    %1377 = vmatpush2.msra.mxu0 0.0
    %1378 = vmatprep.subr.mxu0 0.0
    %1379 = vmatpush2.msra.mxu0 0.0
    %1380 = vmatprep.subr.mxu0 0.0
    %1381 = vmatpush2.msra.mxu0 0.0
    %1382 = vmatprep.subr.mxu0 0.0
    %1383 = vmatpush2.msra.mxu0 0.0
    %1384 = vmatprep.subr.mxu0 0.0
    %1385 = vmatpush2.msra.mxu0 0.0
    %1386 = vmatprep.subr.mxu0 0.0
    %1387 = vmatpush2.msra.mxu0 0.0
    %1388 = vmatprep.mubr.f32.mxu0 0.0
    %1389 = vmatmul.mubr.f32.gmra.mxu0 %v1322
    %v1390 = vpop.f32.mrf.mxu0
    %v1391 = vadd.f32 %v475, %v1390
    %v1392 = vpop.f32.mrf.mxu0
    %1393 = vdwg.mxu0
    %v1394 = vmul.f32 %v563, %v993
    %v1395 = vadd.f32 %v1394, %v1391
    %v1396 = vmul.f32 %v996, %v554
    %v1397 = vsub.f32 %v1395, %v1396
    %vm1398 = vcmp.gt.f32.partialorder %v1397, %v554
    %v1399 = vsel %vm1398, 1, 0
    %v1400 = vcvt.s32.f32 %v1399
    %v1402 = vsel %vm274, %v1400, 0
    %1404 = vmatprep.subr.mxu0 0.0
    %1405 = vmatpush1.msra.mxu0 0.0
    %1406 = vmatprep.subr.mxu0 0.0
    %1407 = vmatpush1.msra.mxu0 0.0
    %1408 = vmatprep.subr.mxu0 0.0
    %1409 = vmatpush1.msra.mxu0 0.0
    %1410 = vmatprep.subr.mxu0 0.0
    %1411 = vmatpush1.msra.mxu0 0.0
    %1412 = vmatprep.subr.mxu0 0.0
    %1413 = vmatpush1.msra.mxu0 0.0
    %1414 = vmatprep.subr.mxu0 0.0
    %1415 = vmatpush1.msra.mxu0 0.0
    %1416 = vmatprep.subr.mxu0 0.0
    %1417 = vmatpush1.msra.mxu0 0.0
    %1418 = vmatprep.subr.mxu0 0.0
    %1419 = vmatpush1.msra.mxu0 0.0
    %1420 = vmatprep.subr.mxu0 0.0
    %1421 = vmatpush1.msra.mxu0 0.0
    %1422 = vmatprep.subr.mxu0 0.0
    %1423 = vmatpush1.msra.mxu0 0.0
    %1424 = vmatprep.subr.mxu0 0.0
    %1425 = vmatpush1.msra.mxu0 0.0
    %1426 = vmatprep.subr.mxu0 0.0
    %1427 = vmatpush1.msra.mxu0 0.0
    %1428 = vmatprep.subr.mxu0 0.0
    %1429 = vmatpush1.msra.mxu0 %v159
    %1430 = vmatprep.subr.mxu0 0.0
    %1431 = vmatpush1.msra.mxu0 %v158
    %1432 = vmatprep.subr.mxu0 0.0
    %1433 = vmatpush1.msra.mxu0 %v157
    %1434 = vmatprep.subr.mxu0 0.0
    %1435 = vmatpush1.msra.mxu0 %v156
    %1436 = vmatprep.subr.mxu0 0.0
    %1437 = vmatpush2.msra.mxu0 0.0
    %1438 = vmatprep.subr.mxu0 0.0
    %1439 = vmatpush2.msra.mxu0 0.0
    %1440 = vmatprep.subr.mxu0 0.0
    %1441 = vmatpush2.msra.mxu0 0.0
    %1442 = vmatprep.subr.mxu0 0.0
    %1443 = vmatpush2.msra.mxu0 0.0
    %1444 = vmatprep.subr.mxu0 0.0
    %1445 = vmatpush2.msra.mxu0 0.0
    %1446 = vmatprep.subr.mxu0 0.0
    %1447 = vmatpush2.msra.mxu0 0.0
    %1448 = vmatprep.subr.mxu0 0.0
    %1449 = vmatpush2.msra.mxu0 0.0
    %1450 = vmatprep.subr.mxu0 0.0
    %1451 = vmatpush2.msra.mxu0 0.0
    %1452 = vmatprep.subr.mxu0 0.0
    %1453 = vmatpush2.msra.mxu0 0.0
    %1454 = vmatprep.subr.mxu0 0.0
    %1455 = vmatpush2.msra.mxu0 0.0
    %1456 = vmatprep.subr.mxu0 0.0
    %1457 = vmatpush2.msra.mxu0 0.0
    %1458 = vmatprep.subr.mxu0 0.0
    %1459 = vmatpush2.msra.mxu0 0.0
    %1460 = vmatprep.subr.mxu0 0.0
    %1461 = vmatpush2.msra.mxu0 0.0
    %1462 = vmatprep.subr.mxu0 0.0
    %1463 = vmatpush2.msra.mxu0 0.0
    %1464 = vmatprep.subr.mxu0 0.0
    %1465 = vmatpush2.msra.mxu0 0.0
    %1466 = vmatprep.subr.mxu0 0.0
    %1467 = vmatpush2.msra.mxu0 0.0
    %1468 = vmatprep.mubr.f32.mxu0 0.0
    %1469 = vmatmul.mubr.f32.gmra.mxu0 %v1402
    %v1470 = vpop.f32.mrf.mxu0
    %v1471 = vadd.f32 %v576, %v1470
    %v1472 = vpop.f32.mrf.mxu0
    %1473 = vdwg.mxu0
    %v1474 = vmul.f32 %v664, %v1073
    %v1475 = vadd.f32 %v1474, %v1471
    %v1476 = vmul.f32 %v1076, %v655
    %v1477 = vsub.f32 %v1475, %v1476
    %vm1478 = vcmp.gt.f32.partialorder %v1477, %v655
    %v1479 = vsel %vm1478, 1, 0
    %v1480 = vcvt.s32.f32 %v1479
    %s1481 = scalar_lea.vmem %s15, 16
    %1482 = vst.msk [vmem:[%s1481] sm:$0xff] %vm673, %v1480
    %s1483 = scalar_lea.vmem [#allocation2], 24
    %v1484 = vld [vmem:[%s1483] sm:$0xff]
    %v1486 = vsel %vm172, %v1484, 0
    %1488 = vmatprep.subr.mxu0 0.0
    %1489 = vmatpush1.msra.mxu0 0.0
    %1490 = vmatprep.subr.mxu0 0.0
    %1491 = vmatpush1.msra.mxu0 0.0
    %1492 = vmatprep.subr.mxu0 0.0
    %1493 = vmatpush1.msra.mxu0 0.0
    %1494 = vmatprep.subr.mxu0 0.0
    %1495 = vmatpush1.msra.mxu0 0.0
    %1496 = vmatprep.subr.mxu0 0.0
    %1497 = vmatpush1.msra.mxu0 0.0
    %1498 = vmatprep.subr.mxu0 0.0
    %1499 = vmatpush1.msra.mxu0 0.0
    %1500 = vmatprep.subr.mxu0 0.0
    %1501 = vmatpush1.msra.mxu0 0.0
    %1502 = vmatprep.subr.mxu0 0.0
    %1503 = vmatpush1.msra.mxu0 0.0
    %1504 = vmatprep.subr.mxu0 0.0
    %1505 = vmatpush1.msra.mxu0 0.0
    %1506 = vmatprep.subr.mxu0 0.0
    %1507 = vmatpush1.msra.mxu0 0.0
    %1508 = vmatprep.subr.mxu0 0.0
    %1509 = vmatpush1.msra.mxu0 0.0
    %1510 = vmatprep.subr.mxu0 0.0
    %1511 = vmatpush1.msra.mxu0 0.0
    %1512 = vmatprep.subr.mxu0 0.0
    %1513 = vmatpush1.msra.mxu0 0.0
    %1514 = vmatprep.subr.mxu0 0.0
    %1515 = vmatpush1.msra.mxu0 0.0
    %1516 = vmatprep.subr.mxu0 0.0
    %1517 = vmatpush1.msra.mxu0 %v117
    %1518 = vmatprep.subr.mxu0 0.0
    %1519 = vmatpush1.msra.mxu0 %v116
    %1520 = vmatprep.subr.mxu0 0.0
    %1521 = vmatpush2.msra.mxu0 0.0
    %1522 = vmatprep.subr.mxu0 0.0
    %1523 = vmatpush2.msra.mxu0 0.0
    %1524 = vmatprep.subr.mxu0 0.0
    %1525 = vmatpush2.msra.mxu0 0.0
    %1526 = vmatprep.subr.mxu0 0.0
    %1527 = vmatpush2.msra.mxu0 0.0
    %1528 = vmatprep.subr.mxu0 0.0
    %1529 = vmatpush2.msra.mxu0 0.0
    %1530 = vmatprep.subr.mxu0 0.0
    %1531 = vmatpush2.msra.mxu0 0.0
    %1532 = vmatprep.subr.mxu0 0.0
    %1533 = vmatpush2.msra.mxu0 0.0
    %1534 = vmatprep.subr.mxu0 0.0
    %1535 = vmatpush2.msra.mxu0 0.0
    %1536 = vmatprep.subr.mxu0 0.0
    %1537 = vmatpush2.msra.mxu0 0.0
    %1538 = vmatprep.subr.mxu0 0.0
    %1539 = vmatpush2.msra.mxu0 0.0
    %1540 = vmatprep.subr.mxu0 0.0
    %1541 = vmatpush2.msra.mxu0 0.0
    %1542 = vmatprep.subr.mxu0 0.0
    %1543 = vmatpush2.msra.mxu0 0.0
    %1544 = vmatprep.subr.mxu0 0.0
    %1545 = vmatpush2.msra.mxu0 0.0
    %1546 = vmatprep.subr.mxu0 0.0
    %1547 = vmatpush2.msra.mxu0 0.0
    %1548 = vmatprep.subr.mxu0 0.0
    %1549 = vmatpush2.msra.mxu0 0.0
    %1550 = vmatprep.subr.mxu0 0.0
    %1551 = vmatpush2.msra.mxu0 0.0
    %1552 = vmatprep.mubr.f32.mxu0 0.0
    %1553 = vmatmul.mubr.f32.gmra.mxu0 %v1486
    %v1554 = vpop.f32.mrf.mxu0
    %v1555 = vadd.f32 %v170, %v1554
    %v1556 = vpop.f32.mrf.mxu0
    %1557 = vdwg.mxu0
    %v1558 = vmul.f32 %v259, %v1157
    %v1559 = vadd.f32 %v1558, %v1555
    %v1560 = vmul.f32 %v1160, %v250
    %v1561 = vsub.f32 %v1559, %v1560
    %vm1562 = vcmp.gt.f32.partialorder %v1561, %v250
    %v1563 = vsel %vm1562, 1, 0
    %v1564 = vcvt.s32.f32 %v1563
    %v1566 = vsel %vm274, %v1564, 0
    %1568 = vmatprep.subr.mxu0 0.0
    %1569 = vmatpush1.msra.mxu0 0.0
    %1570 = vmatprep.subr.mxu0 0.0
    %1571 = vmatpush1.msra.mxu0 0.0
    %1572 = vmatprep.subr.mxu0 0.0
    %1573 = vmatpush1.msra.mxu0 0.0
    %1574 = vmatprep.subr.mxu0 0.0
    %1575 = vmatpush1.msra.mxu0 0.0
    %1576 = vmatprep.subr.mxu0 0.0
    %1577 = vmatpush1.msra.mxu0 0.0
    %1578 = vmatprep.subr.mxu0 0.0
    %1579 = vmatpush1.msra.mxu0 0.0
    %1580 = vmatprep.subr.mxu0 0.0
    %1581 = vmatpush1.msra.mxu0 0.0
    %1582 = vmatprep.subr.mxu0 0.0
    %1583 = vmatpush1.msra.mxu0 0.0
    %1584 = vmatprep.subr.mxu0 0.0
    %1585 = vmatpush1.msra.mxu0 0.0
    %1586 = vmatprep.subr.mxu0 0.0
    %1587 = vmatpush1.msra.mxu0 0.0
    %1588 = vmatprep.subr.mxu0 0.0
    %1589 = vmatpush1.msra.mxu0 0.0
    %1590 = vmatprep.subr.mxu0 0.0
    %1591 = vmatpush1.msra.mxu0 0.0
    %1592 = vmatprep.subr.mxu0 0.0
    %1593 = vmatpush1.msra.mxu0 %v126
    %1594 = vmatprep.subr.mxu0 0.0
    %1595 = vmatpush1.msra.mxu0 %v125
    %1596 = vmatprep.subr.mxu0 0.0
    %1597 = vmatpush1.msra.mxu0 %v124
    %1598 = vmatprep.subr.mxu0 0.0
    %1599 = vmatpush1.msra.mxu0 %v123
    %1600 = vmatprep.subr.mxu0 0.0
    %1601 = vmatpush2.msra.mxu0 0.0
    %1602 = vmatprep.subr.mxu0 0.0
    %1603 = vmatpush2.msra.mxu0 0.0
    %1604 = vmatprep.subr.mxu0 0.0
    %1605 = vmatpush2.msra.mxu0 0.0
    %1606 = vmatprep.subr.mxu0 0.0
    %1607 = vmatpush2.msra.mxu0 0.0
    %1608 = vmatprep.subr.mxu0 0.0
    %1609 = vmatpush2.msra.mxu0 0.0
    %1610 = vmatprep.subr.mxu0 0.0
    %1611 = vmatpush2.msra.mxu0 0.0
    %1612 = vmatprep.subr.mxu0 0.0
    %1613 = vmatpush2.msra.mxu0 0.0
    %1614 = vmatprep.subr.mxu0 0.0
    %1615 = vmatpush2.msra.mxu0 0.0
    %1616 = vmatprep.subr.mxu0 0.0
    %1617 = vmatpush2.msra.mxu0 0.0
    %1618 = vmatprep.subr.mxu0 0.0
    %1619 = vmatpush2.msra.mxu0 0.0
    %1620 = vmatprep.subr.mxu0 0.0
    %1621 = vmatpush2.msra.mxu0 0.0
    %1622 = vmatprep.subr.mxu0 0.0
    %1623 = vmatpush2.msra.mxu0 0.0
    %1624 = vmatprep.subr.mxu0 0.0
    %1625 = vmatpush2.msra.mxu0 0.0
    %1626 = vmatprep.subr.mxu0 0.0
    %1627 = vmatpush2.msra.mxu0 0.0
    %1628 = vmatprep.subr.mxu0 0.0
    %1629 = vmatpush2.msra.mxu0 0.0
    %1630 = vmatprep.subr.mxu0 0.0
    %1631 = vmatpush2.msra.mxu0 0.0
    %1632 = vmatprep.mubr.f32.mxu0 0.0
    %1633 = vmatmul.mubr.f32.gmra.mxu0 %v1566
    %v1634 = vpop.f32.mrf.mxu0
    %v1635 = vadd.f32 %v272, %v1634
    %v1636 = vpop.f32.mrf.mxu0
    %1637 = vdwg.mxu0
    %v1638 = vmul.f32 %v361, %v1237
    %v1639 = vadd.f32 %v1638, %v1635
    %v1640 = vmul.f32 %v1240, %v352
    %v1641 = vsub.f32 %v1639, %v1640
    %vm1642 = vcmp.gt.f32.partialorder %v1641, %v352
    %v1643 = vsel %vm1642, 1, 0
    %v1644 = vcvt.s32.f32 %v1643
    %v1646 = vsel %vm274, %v1644, 0
    %1648 = vmatprep.subr.mxu0 0.0
    %1649 = vmatpush1.msra.mxu0 0.0
    %1650 = vmatprep.subr.mxu0 0.0
    %1651 = vmatpush1.msra.mxu0 0.0
    %1652 = vmatprep.subr.mxu0 0.0
    %1653 = vmatpush1.msra.mxu0 0.0
    %1654 = vmatprep.subr.mxu0 0.0
    %1655 = vmatpush1.msra.mxu0 0.0
    %1656 = vmatprep.subr.mxu0 0.0
    %1657 = vmatpush1.msra.mxu0 0.0
    %1658 = vmatprep.subr.mxu0 0.0
    %1659 = vmatpush1.msra.mxu0 0.0
    %1660 = vmatprep.subr.mxu0 0.0
    %1661 = vmatpush1.msra.mxu0 0.0
    %1662 = vmatprep.subr.mxu0 0.0
    %1663 = vmatpush1.msra.mxu0 0.0
    %1664 = vmatprep.subr.mxu0 0.0
    %1665 = vmatpush1.msra.mxu0 0.0
    %1666 = vmatprep.subr.mxu0 0.0
    %1667 = vmatpush1.msra.mxu0 0.0
    %1668 = vmatprep.subr.mxu0 0.0
    %1669 = vmatpush1.msra.mxu0 0.0
    %1670 = vmatprep.subr.mxu0 0.0
    %1671 = vmatpush1.msra.mxu0 0.0
    %1672 = vmatprep.subr.mxu0 0.0
    %1673 = vmatpush1.msra.mxu0 %v137
    %1674 = vmatprep.subr.mxu0 0.0
    %1675 = vmatpush1.msra.mxu0 %v136
    %1676 = vmatprep.subr.mxu0 0.0
    %1677 = vmatpush1.msra.mxu0 %v135
    %1678 = vmatprep.subr.mxu0 0.0
    %1679 = vmatpush1.msra.mxu0 %v134
    %1680 = vmatprep.subr.mxu0 0.0
    %1681 = vmatpush2.msra.mxu0 0.0
    %1682 = vmatprep.subr.mxu0 0.0
    %1683 = vmatpush2.msra.mxu0 0.0
    %1684 = vmatprep.subr.mxu0 0.0
    %1685 = vmatpush2.msra.mxu0 0.0
    %1686 = vmatprep.subr.mxu0 0.0
    %1687 = vmatpush2.msra.mxu0 0.0
    %1688 = vmatprep.subr.mxu0 0.0
    %1689 = vmatpush2.msra.mxu0 0.0
    %1690 = vmatprep.subr.mxu0 0.0
    %1691 = vmatpush2.msra.mxu0 0.0
    %1692 = vmatprep.subr.mxu0 0.0
    %1693 = vmatpush2.msra.mxu0 0.0
    %1694 = vmatprep.subr.mxu0 0.0
    %1695 = vmatpush2.msra.mxu0 0.0
    %1696 = vmatprep.subr.mxu0 0.0
    %1697 = vmatpush2.msra.mxu0 0.0
    %1698 = vmatprep.subr.mxu0 0.0
    %1699 = vmatpush2.msra.mxu0 0.0
    %1700 = vmatprep.subr.mxu0 0.0
    %1701 = vmatpush2.msra.mxu0 0.0
    %1702 = vmatprep.subr.mxu0 0.0
    %1703 = vmatpush2.msra.mxu0 0.0
    %1704 = vmatprep.subr.mxu0 0.0
    %1705 = vmatpush2.msra.mxu0 0.0
    %1706 = vmatprep.subr.mxu0 0.0
    %1707 = vmatpush2.msra.mxu0 0.0
    %1708 = vmatprep.subr.mxu0 0.0
    %1709 = vmatpush2.msra.mxu0 0.0
    %1710 = vmatprep.subr.mxu0 0.0
    %1711 = vmatpush2.msra.mxu0 0.0
    %1712 = vmatprep.mubr.f32.mxu0 0.0
    %1713 = vmatmul.mubr.f32.gmra.mxu0 %v1646
    %v1714 = vpop.f32.mrf.mxu0
    %v1715 = vadd.f32 %v374, %v1714
    %v1716 = vpop.f32.mrf.mxu0
    %1717 = vdwg.mxu0
    %v1718 = vmul.f32 %v462, %v1317
    %v1719 = vadd.f32 %v1718, %v1715
    %v1720 = vmul.f32 %v1320, %v453
    %v1721 = vsub.f32 %v1719, %v1720
    %vm1722 = vcmp.gt.f32.partialorder %v1721, %v453
    %v1723 = vsel %vm1722, 1, 0
    %v1724 = vcvt.s32.f32 %v1723
    %v1726 = vsel %vm274, %v1724, 0
    %1728 = vmatprep.subr.mxu0 0.0
    %1729 = vmatpush1.msra.mxu0 0.0
    %1730 = vmatprep.subr.mxu0 0.0
    %1731 = vmatpush1.msra.mxu0 0.0
    %1732 = vmatprep.subr.mxu0 0.0
    %1733 = vmatpush1.msra.mxu0 0.0
    %1734 = vmatprep.subr.mxu0 0.0
    %1735 = vmatpush1.msra.mxu0 0.0
    %1736 = vmatprep.subr.mxu0 0.0
    %1737 = vmatpush1.msra.mxu0 0.0
    %1738 = vmatprep.subr.mxu0 0.0
    %1739 = vmatpush1.msra.mxu0 0.0
    %1740 = vmatprep.subr.mxu0 0.0
    %1741 = vmatpush1.msra.mxu0 0.0
    %1742 = vmatprep.subr.mxu0 0.0
    %1743 = vmatpush1.msra.mxu0 0.0
    %1744 = vmatprep.subr.mxu0 0.0
    %1745 = vmatpush1.msra.mxu0 0.0
    %1746 = vmatprep.subr.mxu0 0.0
    %1747 = vmatpush1.msra.mxu0 0.0
    %1748 = vmatprep.subr.mxu0 0.0
    %1749 = vmatpush1.msra.mxu0 0.0
    %1750 = vmatprep.subr.mxu0 0.0
    %1751 = vmatpush1.msra.mxu0 0.0
    %1752 = vmatprep.subr.mxu0 0.0
    %1753 = vmatpush1.msra.mxu0 %v148
    %1754 = vmatprep.subr.mxu0 0.0
    %1755 = vmatpush1.msra.mxu0 %v147
    %1756 = vmatprep.subr.mxu0 0.0
    %1757 = vmatpush1.msra.mxu0 %v146
    %1758 = vmatprep.subr.mxu0 0.0
    %1759 = vmatpush1.msra.mxu0 %v145
    %1760 = vmatprep.subr.mxu0 0.0
    %1761 = vmatpush2.msra.mxu0 0.0
    %1762 = vmatprep.subr.mxu0 0.0
    %1763 = vmatpush2.msra.mxu0 0.0
    %1764 = vmatprep.subr.mxu0 0.0
    %1765 = vmatpush2.msra.mxu0 0.0
    %1766 = vmatprep.subr.mxu0 0.0
    %1767 = vmatpush2.msra.mxu0 0.0
    %1768 = vmatprep.subr.mxu0 0.0
    %1769 = vmatpush2.msra.mxu0 0.0
    %1770 = vmatprep.subr.mxu0 0.0
    %1771 = vmatpush2.msra.mxu0 0.0
    %1772 = vmatprep.subr.mxu0 0.0
    %1773 = vmatpush2.msra.mxu0 0.0
    %1774 = vmatprep.subr.mxu0 0.0
    %1775 = vmatpush2.msra.mxu0 0.0
    %1776 = vmatprep.subr.mxu0 0.0
    %1777 = vmatpush2.msra.mxu0 0.0
    %1778 = vmatprep.subr.mxu0 0.0
    %1779 = vmatpush2.msra.mxu0 0.0
    %1780 = vmatprep.subr.mxu0 0.0
    %1781 = vmatpush2.msra.mxu0 0.0
    %1782 = vmatprep.subr.mxu0 0.0
    %1783 = vmatpush2.msra.mxu0 0.0
    %1784 = vmatprep.subr.mxu0 0.0
    %1785 = vmatpush2.msra.mxu0 0.0
    %1786 = vmatprep.subr.mxu0 0.0
    %1787 = vmatpush2.msra.mxu0 0.0
    %1788 = vmatprep.subr.mxu0 0.0
    %1789 = vmatpush2.msra.mxu0 0.0
    %1790 = vmatprep.subr.mxu0 0.0
    %1791 = vmatpush2.msra.mxu0 0.0
    %1792 = vmatprep.mubr.f32.mxu0 0.0
    %1793 = vmatmul.mubr.f32.gmra.mxu0 %v1726
    %v1794 = vpop.f32.mrf.mxu0
    %v1795 = vadd.f32 %v475, %v1794
    %v1796 = vpop.f32.mrf.mxu0
    %1797 = vdwg.mxu0
    %v1798 = vmul.f32 %v563, %v1397
    %v1799 = vadd.f32 %v1798, %v1795
    %v1800 = vmul.f32 %v1400, %v554
    %v1801 = vsub.f32 %v1799, %v1800
    %vm1802 = vcmp.gt.f32.partialorder %v1801, %v554
    %v1803 = vsel %vm1802, 1, 0
    %v1804 = vcvt.s32.f32 %v1803
    %v1806 = vsel %vm274, %v1804, 0
    %1808 = vmatprep.subr.mxu0 0.0
    %1809 = vmatpush1.msra.mxu0 0.0
    %1810 = vmatprep.subr.mxu0 0.0
    %1811 = vmatpush1.msra.mxu0 0.0
    %1812 = vmatprep.subr.mxu0 0.0
    %1813 = vmatpush1.msra.mxu0 0.0
    %1814 = vmatprep.subr.mxu0 0.0
    %1815 = vmatpush1.msra.mxu0 0.0
    %1816 = vmatprep.subr.mxu0 0.0
    %1817 = vmatpush1.msra.mxu0 0.0
    %1818 = vmatprep.subr.mxu0 0.0
    %1819 = vmatpush1.msra.mxu0 0.0
    %1820 = vmatprep.subr.mxu0 0.0
    %1821 = vmatpush1.msra.mxu0 0.0
    %1822 = vmatprep.subr.mxu0 0.0
    %1823 = vmatpush1.msra.mxu0 0.0
    %1824 = vmatprep.subr.mxu0 0.0
    %1825 = vmatpush1.msra.mxu0 0.0
    %1826 = vmatprep.subr.mxu0 0.0
    %1827 = vmatpush1.msra.mxu0 0.0
    %1828 = vmatprep.subr.mxu0 0.0
    %1829 = vmatpush1.msra.mxu0 0.0
    %1830 = vmatprep.subr.mxu0 0.0
    %1831 = vmatpush1.msra.mxu0 0.0
    %1832 = vmatprep.subr.mxu0 0.0
    %1833 = vmatpush1.msra.mxu0 %v159
    %1834 = vmatprep.subr.mxu0 0.0
    %1835 = vmatpush1.msra.mxu0 %v158
    %1836 = vmatprep.subr.mxu0 0.0
    %1837 = vmatpush1.msra.mxu0 %v157
    %1838 = vmatprep.subr.mxu0 0.0
    %1839 = vmatpush1.msra.mxu0 %v156
    %1840 = vmatprep.subr.mxu0 0.0
    %1841 = vmatpush2.msra.mxu0 0.0
    %1842 = vmatprep.subr.mxu0 0.0
    %1843 = vmatpush2.msra.mxu0 0.0
    %1844 = vmatprep.subr.mxu0 0.0
    %1845 = vmatpush2.msra.mxu0 0.0
    %1846 = vmatprep.subr.mxu0 0.0
    %1847 = vmatpush2.msra.mxu0 0.0
    %1848 = vmatprep.subr.mxu0 0.0
    %1849 = vmatpush2.msra.mxu0 0.0
    %1850 = vmatprep.subr.mxu0 0.0
    %1851 = vmatpush2.msra.mxu0 0.0
    %1852 = vmatprep.subr.mxu0 0.0
    %1853 = vmatpush2.msra.mxu0 0.0
    %1854 = vmatprep.subr.mxu0 0.0
    %1855 = vmatpush2.msra.mxu0 0.0
    %1856 = vmatprep.subr.mxu0 0.0
    %1857 = vmatpush2.msra.mxu0 0.0
    %1858 = vmatprep.subr.mxu0 0.0
    %1859 = vmatpush2.msra.mxu0 0.0
    %1860 = vmatprep.subr.mxu0 0.0
    %1861 = vmatpush2.msra.mxu0 0.0
    %1862 = vmatprep.subr.mxu0 0.0
    %1863 = vmatpush2.msra.mxu0 0.0
    %1864 = vmatprep.subr.mxu0 0.0
    %1865 = vmatpush2.msra.mxu0 0.0
    %1866 = vmatprep.subr.mxu0 0.0
    %1867 = vmatpush2.msra.mxu0 0.0
    %1868 = vmatprep.subr.mxu0 0.0
    %1869 = vmatpush2.msra.mxu0 0.0
    %1870 = vmatprep.subr.mxu0 0.0
    %1871 = vmatpush2.msra.mxu0 0.0
    %1872 = vmatprep.mubr.f32.mxu0 0.0
    %1873 = vmatmul.mubr.f32.gmra.mxu0 %v1806
    %v1874 = vpop.f32.mrf.mxu0
    %v1875 = vadd.f32 %v576, %v1874
    %v1876 = vpop.f32.mrf.mxu0
    %1877 = vdwg.mxu0
    %v1878 = vmul.f32 %v664, %v1477
    %v1879 = vadd.f32 %v1878, %v1875
    %v1880 = vmul.f32 %v1480, %v655
    %v1881 = vsub.f32 %v1879, %v1880
    %vm1882 = vcmp.gt.f32.partialorder %v1881, %v655
    %v1883 = vsel %vm1882, 1, 0
    %v1884 = vcvt.s32.f32 %v1883
    %s1885 = scalar_lea.vmem %s15, 24
    %1886 = vst.msk [vmem:[%s1885] sm:$0xff] %vm673, %v1884
    %s1887 = scalar_lea.vmem [#allocation2], 32
    %v1888 = vld [vmem:[%s1887] sm:$0xff]
    %v1890 = vsel %vm172, %v1888, 0
    %1892 = vmatprep.subr.mxu0 0.0
    %1893 = vmatpush1.msra.mxu0 0.0
    %1894 = vmatprep.subr.mxu0 0.0
    %1895 = vmatpush1.msra.mxu0 0.0
    %1896 = vmatprep.subr.mxu0 0.0
    %1897 = vmatpush1.msra.mxu0 0.0
    %1898 = vmatprep.subr.mxu0 0.0
    %1899 = vmatpush1.msra.mxu0 0.0
    %1900 = vmatprep.subr.mxu0 0.0
    %1901 = vmatpush1.msra.mxu0 0.0
    %1902 = vmatprep.subr.mxu0 0.0
    %1903 = vmatpush1.msra.mxu0 0.0
    %1904 = vmatprep.subr.mxu0 0.0
    %1905 = vmatpush1.msra.mxu0 0.0
    %1906 = vmatprep.subr.mxu0 0.0
    %1907 = vmatpush1.msra.mxu0 0.0
    %1908 = vmatprep.subr.mxu0 0.0
    %1909 = vmatpush1.msra.mxu0 0.0
    %1910 = vmatprep.subr.mxu0 0.0
    %1911 = vmatpush1.msra.mxu0 0.0
    %1912 = vmatprep.subr.mxu0 0.0
    %1913 = vmatpush1.msra.mxu0 0.0
    %1914 = vmatprep.subr.mxu0 0.0
    %1915 = vmatpush1.msra.mxu0 0.0
    %1916 = vmatprep.subr.mxu0 0.0
    %1917 = vmatpush1.msra.mxu0 0.0
    %1918 = vmatprep.subr.mxu0 0.0
    %1919 = vmatpush1.msra.mxu0 0.0
    %1920 = vmatprep.subr.mxu0 0.0
    %1921 = vmatpush1.msra.mxu0 %v117
    %1922 = vmatprep.subr.mxu0 0.0
    %1923 = vmatpush1.msra.mxu0 %v116
    %1924 = vmatprep.subr.mxu0 0.0
    %1925 = vmatpush2.msra.mxu0 0.0
    %1926 = vmatprep.subr.mxu0 0.0
    %1927 = vmatpush2.msra.mxu0 0.0
    %1928 = vmatprep.subr.mxu0 0.0
    %1929 = vmatpush2.msra.mxu0 0.0
    %1930 = vmatprep.subr.mxu0 0.0
    %1931 = vmatpush2.msra.mxu0 0.0
    %1932 = vmatprep.subr.mxu0 0.0
    %1933 = vmatpush2.msra.mxu0 0.0
    %1934 = vmatprep.subr.mxu0 0.0
    %1935 = vmatpush2.msra.mxu0 0.0
    %1936 = vmatprep.subr.mxu0 0.0
    %1937 = vmatpush2.msra.mxu0 0.0
    %1938 = vmatprep.subr.mxu0 0.0
    %1939 = vmatpush2.msra.mxu0 0.0
    %1940 = vmatprep.subr.mxu0 0.0
    %1941 = vmatpush2.msra.mxu0 0.0
    %1942 = vmatprep.subr.mxu0 0.0
    %1943 = vmatpush2.msra.mxu0 0.0
    %1944 = vmatprep.subr.mxu0 0.0
    %1945 = vmatpush2.msra.mxu0 0.0
    %1946 = vmatprep.subr.mxu0 0.0
    %1947 = vmatpush2.msra.mxu0 0.0
    %1948 = vmatprep.subr.mxu0 0.0
    %1949 = vmatpush2.msra.mxu0 0.0
    %1950 = vmatprep.subr.mxu0 0.0
    %1951 = vmatpush2.msra.mxu0 0.0
    %1952 = vmatprep.subr.mxu0 0.0
    %1953 = vmatpush2.msra.mxu0 0.0
    %1954 = vmatprep.subr.mxu0 0.0
    %1955 = vmatpush2.msra.mxu0 0.0
    %1956 = vmatprep.mubr.f32.mxu0 0.0
    %1957 = vmatmul.mubr.f32.gmra.mxu0 %v1890
    %v1958 = vpop.f32.mrf.mxu0
    %v1959 = vadd.f32 %v170, %v1958
    %v1960 = vpop.f32.mrf.mxu0
    %1961 = vdwg.mxu0
    %v1962 = vmul.f32 %v259, %v1561
    %v1963 = vadd.f32 %v1962, %v1959
    %v1964 = vmul.f32 %v1564, %v250
    %v1965 = vsub.f32 %v1963, %v1964
    %vm1966 = vcmp.gt.f32.partialorder %v1965, %v250
    %v1967 = vsel %vm1966, 1, 0
    %v1968 = vcvt.s32.f32 %v1967
    %v1970 = vsel %vm274, %v1968, 0
    %1972 = vmatprep.subr.mxu0 0.0
    %1973 = vmatpush1.msra.mxu0 0.0
    %1974 = vmatprep.subr.mxu0 0.0
    %1975 = vmatpush1.msra.mxu0 0.0
    %1976 = vmatprep.subr.mxu0 0.0
    %1977 = vmatpush1.msra.mxu0 0.0
    %1978 = vmatprep.subr.mxu0 0.0
    %1979 = vmatpush1.msra.mxu0 0.0
    %1980 = vmatprep.subr.mxu0 0.0
    %1981 = vmatpush1.msra.mxu0 0.0
    %1982 = vmatprep.subr.mxu0 0.0
    %1983 = vmatpush1.msra.mxu0 0.0
    %1984 = vmatprep.subr.mxu0 0.0
    %1985 = vmatpush1.msra.mxu0 0.0
    %1986 = vmatprep.subr.mxu0 0.0
    %1987 = vmatpush1.msra.mxu0 0.0
    %1988 = vmatprep.subr.mxu0 0.0
    %1989 = vmatpush1.msra.mxu0 0.0
    %1990 = vmatprep.subr.mxu0 0.0
    %1991 = vmatpush1.msra.mxu0 0.0
    %1992 = vmatprep.subr.mxu0 0.0
    %1993 = vmatpush1.msra.mxu0 0.0
    %1994 = vmatprep.subr.mxu0 0.0
    %1995 = vmatpush1.msra.mxu0 0.0
    %1996 = vmatprep.subr.mxu0 0.0
    %1997 = vmatpush1.msra.mxu0 %v126
    %1998 = vmatprep.subr.mxu0 0.0
    %1999 = vmatpush1.msra.mxu0 %v125
    %2000 = vmatprep.subr.mxu0 0.0
    %2001 = vmatpush1.msra.mxu0 %v124
    %2002 = vmatprep.subr.mxu0 0.0
    %2003 = vmatpush1.msra.mxu0 %v123
    %2004 = vmatprep.subr.mxu0 0.0
    %2005 = vmatpush2.msra.mxu0 0.0
    %2006 = vmatprep.subr.mxu0 0.0
    %2007 = vmatpush2.msra.mxu0 0.0
    %2008 = vmatprep.subr.mxu0 0.0
    %2009 = vmatpush2.msra.mxu0 0.0
    %2010 = vmatprep.subr.mxu0 0.0
    %2011 = vmatpush2.msra.mxu0 0.0
    %2012 = vmatprep.subr.mxu0 0.0
    %2013 = vmatpush2.msra.mxu0 0.0
    %2014 = vmatprep.subr.mxu0 0.0
    %2015 = vmatpush2.msra.mxu0 0.0
    %2016 = vmatprep.subr.mxu0 0.0
    %2017 = vmatpush2.msra.mxu0 0.0
    %2018 = vmatprep.subr.mxu0 0.0
    %2019 = vmatpush2.msra.mxu0 0.0
    %2020 = vmatprep.subr.mxu0 0.0
    %2021 = vmatpush2.msra.mxu0 0.0
    %2022 = vmatprep.subr.mxu0 0.0
    %2023 = vmatpush2.msra.mxu0 0.0
    %2024 = vmatprep.subr.mxu0 0.0
    %2025 = vmatpush2.msra.mxu0 0.0
    %2026 = vmatprep.subr.mxu0 0.0
    %2027 = vmatpush2.msra.mxu0 0.0
    %2028 = vmatprep.subr.mxu0 0.0
    %2029 = vmatpush2.msra.mxu0 0.0
    %2030 = vmatprep.subr.mxu0 0.0
    %2031 = vmatpush2.msra.mxu0 0.0
    %2032 = vmatprep.subr.mxu0 0.0
    %2033 = vmatpush2.msra.mxu0 0.0
    %2034 = vmatprep.subr.mxu0 0.0
    %2035 = vmatpush2.msra.mxu0 0.0
    %2036 = vmatprep.mubr.f32.mxu0 0.0
    %2037 = vmatmul.mubr.f32.gmra.mxu0 %v1970
    %v2038 = vpop.f32.mrf.mxu0
    %v2039 = vadd.f32 %v272, %v2038
    %v2040 = vpop.f32.mrf.mxu0
    %2041 = vdwg.mxu0
    %v2042 = vmul.f32 %v361, %v1641
    %v2043 = vadd.f32 %v2042, %v2039
    %v2044 = vmul.f32 %v1644, %v352
    %v2045 = vsub.f32 %v2043, %v2044
    %vm2046 = vcmp.gt.f32.partialorder %v2045, %v352
    %v2047 = vsel %vm2046, 1, 0
    %v2048 = vcvt.s32.f32 %v2047
    %v2050 = vsel %vm274, %v2048, 0
    %2052 = vmatprep.subr.mxu0 0.0
    %2053 = vmatpush1.msra.mxu0 0.0
    %2054 = vmatprep.subr.mxu0 0.0
    %2055 = vmatpush1.msra.mxu0 0.0
    %2056 = vmatprep.subr.mxu0 0.0
    %2057 = vmatpush1.msra.mxu0 0.0
    %2058 = vmatprep.subr.mxu0 0.0
    %2059 = vmatpush1.msra.mxu0 0.0
    %2060 = vmatprep.subr.mxu0 0.0
    %2061 = vmatpush1.msra.mxu0 0.0
    %2062 = vmatprep.subr.mxu0 0.0
    %2063 = vmatpush1.msra.mxu0 0.0
    %2064 = vmatprep.subr.mxu0 0.0
    %2065 = vmatpush1.msra.mxu0 0.0
    %2066 = vmatprep.subr.mxu0 0.0
    %2067 = vmatpush1.msra.mxu0 0.0
    %2068 = vmatprep.subr.mxu0 0.0
    %2069 = vmatpush1.msra.mxu0 0.0
    %2070 = vmatprep.subr.mxu0 0.0
    %2071 = vmatpush1.msra.mxu0 0.0
    %2072 = vmatprep.subr.mxu0 0.0
    %2073 = vmatpush1.msra.mxu0 0.0
    %2074 = vmatprep.subr.mxu0 0.0
    %2075 = vmatpush1.msra.mxu0 0.0
    %2076 = vmatprep.subr.mxu0 0.0
    %2077 = vmatpush1.msra.mxu0 %v137
    %2078 = vmatprep.subr.mxu0 0.0
    %2079 = vmatpush1.msra.mxu0 %v136
    %2080 = vmatprep.subr.mxu0 0.0
    %2081 = vmatpush1.msra.mxu0 %v135
    %2082 = vmatprep.subr.mxu0 0.0
    %2083 = vmatpush1.msra.mxu0 %v134
    %2084 = vmatprep.subr.mxu0 0.0
    %2085 = vmatpush2.msra.mxu0 0.0
    %2086 = vmatprep.subr.mxu0 0.0
    %2087 = vmatpush2.msra.mxu0 0.0
    %2088 = vmatprep.subr.mxu0 0.0
    %2089 = vmatpush2.msra.mxu0 0.0
    %2090 = vmatprep.subr.mxu0 0.0
    %2091 = vmatpush2.msra.mxu0 0.0
    %2092 = vmatprep.subr.mxu0 0.0
    %2093 = vmatpush2.msra.mxu0 0.0
    %2094 = vmatprep.subr.mxu0 0.0
    %2095 = vmatpush2.msra.mxu0 0.0
    %2096 = vmatprep.subr.mxu0 0.0
    %2097 = vmatpush2.msra.mxu0 0.0
    %2098 = vmatprep.subr.mxu0 0.0
    %2099 = vmatpush2.msra.mxu0 0.0
    %2100 = vmatprep.subr.mxu0 0.0
    %2101 = vmatpush2.msra.mxu0 0.0
    %2102 = vmatprep.subr.mxu0 0.0
    %2103 = vmatpush2.msra.mxu0 0.0
    %2104 = vmatprep.subr.mxu0 0.0
    %2105 = vmatpush2.msra.mxu0 0.0
    %2106 = vmatprep.subr.mxu0 0.0
    %2107 = vmatpush2.msra.mxu0 0.0
    %2108 = vmatprep.subr.mxu0 0.0
    %2109 = vmatpush2.msra.mxu0 0.0
    %2110 = vmatprep.subr.mxu0 0.0
    %2111 = vmatpush2.msra.mxu0 0.0
    %2112 = vmatprep.subr.mxu0 0.0
    %2113 = vmatpush2.msra.mxu0 0.0
    %2114 = vmatprep.subr.mxu0 0.0
    %2115 = vmatpush2.msra.mxu0 0.0
    %2116 = vmatprep.mubr.f32.mxu0 0.0
    %2117 = vmatmul.mubr.f32.gmra.mxu0 %v2050
    %v2118 = vpop.f32.mrf.mxu0
    %v2119 = vadd.f32 %v374, %v2118
    %v2120 = vpop.f32.mrf.mxu0
    %2121 = vdwg.mxu0
    %v2122 = vmul.f32 %v462, %v1721
    %v2123 = vadd.f32 %v2122, %v2119
    %v2124 = vmul.f32 %v1724, %v453
    %v2125 = vsub.f32 %v2123, %v2124
    %vm2126 = vcmp.gt.f32.partialorder %v2125, %v453
    %v2127 = vsel %vm2126, 1, 0
    %v2128 = vcvt.s32.f32 %v2127
    %v2130 = vsel %vm274, %v2128, 0
    %2132 = vmatprep.subr.mxu0 0.0
    %2133 = vmatpush1.msra.mxu0 0.0
    %2134 = vmatprep.subr.mxu0 0.0
    %2135 = vmatpush1.msra.mxu0 0.0
    %2136 = vmatprep.subr.mxu0 0.0
    %2137 = vmatpush1.msra.mxu0 0.0
    %2138 = vmatprep.subr.mxu0 0.0
    %2139 = vmatpush1.msra.mxu0 0.0
    %2140 = vmatprep.subr.mxu0 0.0
    %2141 = vmatpush1.msra.mxu0 0.0
    %2142 = vmatprep.subr.mxu0 0.0
    %2143 = vmatpush1.msra.mxu0 0.0
    %2144 = vmatprep.subr.mxu0 0.0
    %2145 = vmatpush1.msra.mxu0 0.0
    %2146 = vmatprep.subr.mxu0 0.0
    %2147 = vmatpush1.msra.mxu0 0.0
    %2148 = vmatprep.subr.mxu0 0.0
    %2149 = vmatpush1.msra.mxu0 0.0
    %2150 = vmatprep.subr.mxu0 0.0
    %2151 = vmatpush1.msra.mxu0 0.0
    %2152 = vmatprep.subr.mxu0 0.0
    %2153 = vmatpush1.msra.mxu0 0.0
    %2154 = vmatprep.subr.mxu0 0.0
    %2155 = vmatpush1.msra.mxu0 0.0
    %2156 = vmatprep.subr.mxu0 0.0
    %2157 = vmatpush1.msra.mxu0 %v148
    %2158 = vmatprep.subr.mxu0 0.0
    %2159 = vmatpush1.msra.mxu0 %v147
    %2160 = vmatprep.subr.mxu0 0.0
    %2161 = vmatpush1.msra.mxu0 %v146
    %2162 = vmatprep.subr.mxu0 0.0
    %2163 = vmatpush1.msra.mxu0 %v145
    %2164 = vmatprep.subr.mxu0 0.0
    %2165 = vmatpush2.msra.mxu0 0.0
    %2166 = vmatprep.subr.mxu0 0.0
    %2167 = vmatpush2.msra.mxu0 0.0
    %2168 = vmatprep.subr.mxu0 0.0
    %2169 = vmatpush2.msra.mxu0 0.0
    %2170 = vmatprep.subr.mxu0 0.0
    %2171 = vmatpush2.msra.mxu0 0.0
    %2172 = vmatprep.subr.mxu0 0.0
    %2173 = vmatpush2.msra.mxu0 0.0
    %2174 = vmatprep.subr.mxu0 0.0
    %2175 = vmatpush2.msra.mxu0 0.0
    %2176 = vmatprep.subr.mxu0 0.0
    %2177 = vmatpush2.msra.mxu0 0.0
    %2178 = vmatprep.subr.mxu0 0.0
    %2179 = vmatpush2.msra.mxu0 0.0
    %2180 = vmatprep.subr.mxu0 0.0
    %2181 = vmatpush2.msra.mxu0 0.0
    %2182 = vmatprep.subr.mxu0 0.0
    %2183 = vmatpush2.msra.mxu0 0.0
    %2184 = vmatprep.subr.mxu0 0.0
    %2185 = vmatpush2.msra.mxu0 0.0
    %2186 = vmatprep.subr.mxu0 0.0
    %2187 = vmatpush2.msra.mxu0 0.0
    %2188 = vmatprep.subr.mxu0 0.0
    %2189 = vmatpush2.msra.mxu0 0.0
    %2190 = vmatprep.subr.mxu0 0.0
    %2191 = vmatpush2.msra.mxu0 0.0
    %2192 = vmatprep.subr.mxu0 0.0
    %2193 = vmatpush2.msra.mxu0 0.0
    %2194 = vmatprep.subr.mxu0 0.0
    %2195 = vmatpush2.msra.mxu0 0.0
    %2196 = vmatprep.mubr.f32.mxu0 0.0
    %2197 = vmatmul.mubr.f32.gmra.mxu0 %v2130
    %v2198 = vpop.f32.mrf.mxu0
    %v2199 = vadd.f32 %v475, %v2198
    %v2200 = vpop.f32.mrf.mxu0
    %2201 = vdwg.mxu0
    %v2202 = vmul.f32 %v563, %v1801
    %v2203 = vadd.f32 %v2202, %v2199
    %v2204 = vmul.f32 %v1804, %v554
    %v2205 = vsub.f32 %v2203, %v2204
    %vm2206 = vcmp.gt.f32.partialorder %v2205, %v554
    %v2207 = vsel %vm2206, 1, 0
    %v2208 = vcvt.s32.f32 %v2207
    %v2210 = vsel %vm274, %v2208, 0
    %2212 = vmatprep.subr.mxu0 0.0
    %2213 = vmatpush1.msra.mxu0 0.0
    %2214 = vmatprep.subr.mxu0 0.0
    %2215 = vmatpush1.msra.mxu0 0.0
    %2216 = vmatprep.subr.mxu0 0.0
    %2217 = vmatpush1.msra.mxu0 0.0
    %2218 = vmatprep.subr.mxu0 0.0
    %2219 = vmatpush1.msra.mxu0 0.0
    %2220 = vmatprep.subr.mxu0 0.0
    %2221 = vmatpush1.msra.mxu0 0.0
    %2222 = vmatprep.subr.mxu0 0.0
    %2223 = vmatpush1.msra.mxu0 0.0
    %2224 = vmatprep.subr.mxu0 0.0
    %2225 = vmatpush1.msra.mxu0 0.0
    %2226 = vmatprep.subr.mxu0 0.0
    %2227 = vmatpush1.msra.mxu0 0.0
    %2228 = vmatprep.subr.mxu0 0.0
    %2229 = vmatpush1.msra.mxu0 0.0
    %2230 = vmatprep.subr.mxu0 0.0
    %2231 = vmatpush1.msra.mxu0 0.0
    %2232 = vmatprep.subr.mxu0 0.0
    %2233 = vmatpush1.msra.mxu0 0.0
    %2234 = vmatprep.subr.mxu0 0.0
    %2235 = vmatpush1.msra.mxu0 0.0
    %2236 = vmatprep.subr.mxu0 0.0
    %2237 = vmatpush1.msra.mxu0 %v159
    %2238 = vmatprep.subr.mxu0 0.0
    %2239 = vmatpush1.msra.mxu0 %v158
    %2240 = vmatprep.subr.mxu0 0.0
    %2241 = vmatpush1.msra.mxu0 %v157
    %2242 = vmatprep.subr.mxu0 0.0
    %2243 = vmatpush1.msra.mxu0 %v156
    %2244 = vmatprep.subr.mxu0 0.0
    %2245 = vmatpush2.msra.mxu0 0.0
    %2246 = vmatprep.subr.mxu0 0.0
    %2247 = vmatpush2.msra.mxu0 0.0
    %2248 = vmatprep.subr.mxu0 0.0
    %2249 = vmatpush2.msra.mxu0 0.0
    %2250 = vmatprep.subr.mxu0 0.0
    %2251 = vmatpush2.msra.mxu0 0.0
    %2252 = vmatprep.subr.mxu0 0.0
    %2253 = vmatpush2.msra.mxu0 0.0
    %2254 = vmatprep.subr.mxu0 0.0
    %2255 = vmatpush2.msra.mxu0 0.0
    %2256 = vmatprep.subr.mxu0 0.0
    %2257 = vmatpush2.msra.mxu0 0.0
    %2258 = vmatprep.subr.mxu0 0.0
    %2259 = vmatpush2.msra.mxu0 0.0
    %2260 = vmatprep.subr.mxu0 0.0
    %2261 = vmatpush2.msra.mxu0 0.0
    %2262 = vmatprep.subr.mxu0 0.0
    %2263 = vmatpush2.msra.mxu0 0.0
    %2264 = vmatprep.subr.mxu0 0.0
    %2265 = vmatpush2.msra.mxu0 0.0
    %2266 = vmatprep.subr.mxu0 0.0
    %2267 = vmatpush2.msra.mxu0 0.0
    %2268 = vmatprep.subr.mxu0 0.0
    %2269 = vmatpush2.msra.mxu0 0.0
    %2270 = vmatprep.subr.mxu0 0.0
    %2271 = vmatpush2.msra.mxu0 0.0
    %2272 = vmatprep.subr.mxu0 0.0
    %2273 = vmatpush2.msra.mxu0 0.0
    %2274 = vmatprep.subr.mxu0 0.0
    %2275 = vmatpush2.msra.mxu0 0.0
    %2276 = vmatprep.mubr.f32.mxu0 0.0
    %2277 = vmatmul.mubr.f32.gmra.mxu0 %v2210
    %v2278 = vpop.f32.mrf.mxu0
    %v2279 = vadd.f32 %v576, %v2278
    %v2280 = vpop.f32.mrf.mxu0
    %2281 = vdwg.mxu0
    %v2282 = vmul.f32 %v664, %v1881
    %v2283 = vadd.f32 %v2282, %v2279
    %v2284 = vmul.f32 %v1884, %v655
    %v2285 = vsub.f32 %v2283, %v2284
    %vm2286 = vcmp.gt.f32.partialorder %v2285, %v655
    %v2287 = vsel %vm2286, 1, 0
    %v2288 = vcvt.s32.f32 %v2287
    %s2289 = scalar_lea.vmem %s15, 32
    %2290 = vst.msk [vmem:[%s2289] sm:$0xff] %vm673, %v2288
    %s2291 = scalar_lea.vmem [#allocation2], 40
    %v2292 = vld [vmem:[%s2291] sm:$0xff]
    %v2294 = vsel %vm172, %v2292, 0
    %2296 = vmatprep.subr.mxu0 0.0
    %2297 = vmatpush1.msra.mxu0 0.0
    %2298 = vmatprep.subr.mxu0 0.0
    %2299 = vmatpush1.msra.mxu0 0.0
    %2300 = vmatprep.subr.mxu0 0.0
    %2301 = vmatpush1.msra.mxu0 0.0
    %2302 = vmatprep.subr.mxu0 0.0
    %2303 = vmatpush1.msra.mxu0 0.0
    %2304 = vmatprep.subr.mxu0 0.0
    %2305 = vmatpush1.msra.mxu0 0.0
    %2306 = vmatprep.subr.mxu0 0.0
    %2307 = vmatpush1.msra.mxu0 0.0
    %2308 = vmatprep.subr.mxu0 0.0
    %2309 = vmatpush1.msra.mxu0 0.0
    %2310 = vmatprep.subr.mxu0 0.0
    %2311 = vmatpush1.msra.mxu0 0.0
    %2312 = vmatprep.subr.mxu0 0.0
    %2313 = vmatpush1.msra.mxu0 0.0
    %2314 = vmatprep.subr.mxu0 0.0
    %2315 = vmatpush1.msra.mxu0 0.0
    %2316 = vmatprep.subr.mxu0 0.0
    %2317 = vmatpush1.msra.mxu0 0.0
    %2318 = vmatprep.subr.mxu0 0.0
    %2319 = vmatpush1.msra.mxu0 0.0
    %2320 = vmatprep.subr.mxu0 0.0
    %2321 = vmatpush1.msra.mxu0 0.0
    %2322 = vmatprep.subr.mxu0 0.0
    %2323 = vmatpush1.msra.mxu0 0.0
    %2324 = vmatprep.subr.mxu0 0.0
    %2325 = vmatpush1.msra.mxu0 %v117
    %2326 = vmatprep.subr.mxu0 0.0
    %2327 = vmatpush1.msra.mxu0 %v116
    %2328 = vmatprep.subr.mxu0 0.0
    %2329 = vmatpush2.msra.mxu0 0.0
    %2330 = vmatprep.subr.mxu0 0.0
    %2331 = vmatpush2.msra.mxu0 0.0
    %2332 = vmatprep.subr.mxu0 0.0
    %2333 = vmatpush2.msra.mxu0 0.0
    %2334 = vmatprep.subr.mxu0 0.0
    %2335 = vmatpush2.msra.mxu0 0.0
    %2336 = vmatprep.subr.mxu0 0.0
    %2337 = vmatpush2.msra.mxu0 0.0
    %2338 = vmatprep.subr.mxu0 0.0
    %2339 = vmatpush2.msra.mxu0 0.0
    %2340 = vmatprep.subr.mxu0 0.0
    %2341 = vmatpush2.msra.mxu0 0.0
    %2342 = vmatprep.subr.mxu0 0.0
    %2343 = vmatpush2.msra.mxu0 0.0
    %2344 = vmatprep.subr.mxu0 0.0
    %2345 = vmatpush2.msra.mxu0 0.0
    %2346 = vmatprep.subr.mxu0 0.0
    %2347 = vmatpush2.msra.mxu0 0.0
    %2348 = vmatprep.subr.mxu0 0.0
    %2349 = vmatpush2.msra.mxu0 0.0
    %2350 = vmatprep.subr.mxu0 0.0
    %2351 = vmatpush2.msra.mxu0 0.0
    %2352 = vmatprep.subr.mxu0 0.0
    %2353 = vmatpush2.msra.mxu0 0.0
    %2354 = vmatprep.subr.mxu0 0.0
    %2355 = vmatpush2.msra.mxu0 0.0
    %2356 = vmatprep.subr.mxu0 0.0
    %2357 = vmatpush2.msra.mxu0 0.0
    %2358 = vmatprep.subr.mxu0 0.0
    %2359 = vmatpush2.msra.mxu0 0.0
    %2360 = vmatprep.mubr.f32.mxu0 0.0
    %2361 = vmatmul.mubr.f32.gmra.mxu0 %v2294
    %v2362 = vpop.f32.mrf.mxu0
    %v2363 = vadd.f32 %v170, %v2362
    %v2364 = vpop.f32.mrf.mxu0
    %2365 = vdwg.mxu0
    %v2366 = vmul.f32 %v259, %v1965
    %v2367 = vadd.f32 %v2366, %v2363
    %v2368 = vmul.f32 %v1968, %v250
    %v2369 = vsub.f32 %v2367, %v2368
    %vm2370 = vcmp.gt.f32.partialorder %v2369, %v250
    %v2371 = vsel %vm2370, 1, 0
    %v2372 = vcvt.s32.f32 %v2371
    %v2374 = vsel %vm274, %v2372, 0
    %2376 = vmatprep.subr.mxu0 0.0
    %2377 = vmatpush1.msra.mxu0 0.0
    %2378 = vmatprep.subr.mxu0 0.0
    %2379 = vmatpush1.msra.mxu0 0.0
    %2380 = vmatprep.subr.mxu0 0.0
    %2381 = vmatpush1.msra.mxu0 0.0
    %2382 = vmatprep.subr.mxu0 0.0
    %2383 = vmatpush1.msra.mxu0 0.0
    %2384 = vmatprep.subr.mxu0 0.0
    %2385 = vmatpush1.msra.mxu0 0.0
    %2386 = vmatprep.subr.mxu0 0.0
    %2387 = vmatpush1.msra.mxu0 0.0
    %2388 = vmatprep.subr.mxu0 0.0
    %2389 = vmatpush1.msra.mxu0 0.0
    %2390 = vmatprep.subr.mxu0 0.0
    %2391 = vmatpush1.msra.mxu0 0.0
    %2392 = vmatprep.subr.mxu0 0.0
    %2393 = vmatpush1.msra.mxu0 0.0
    %2394 = vmatprep.subr.mxu0 0.0
    %2395 = vmatpush1.msra.mxu0 0.0
    %2396 = vmatprep.subr.mxu0 0.0
    %2397 = vmatpush1.msra.mxu0 0.0
    %2398 = vmatprep.subr.mxu0 0.0
    %2399 = vmatpush1.msra.mxu0 0.0
    %2400 = vmatprep.subr.mxu0 0.0
    %2401 = vmatpush1.msra.mxu0 %v126
    %2402 = vmatprep.subr.mxu0 0.0
    %2403 = vmatpush1.msra.mxu0 %v125
    %2404 = vmatprep.subr.mxu0 0.0
    %2405 = vmatpush1.msra.mxu0 %v124
    %2406 = vmatprep.subr.mxu0 0.0
    %2407 = vmatpush1.msra.mxu0 %v123
    %2408 = vmatprep.subr.mxu0 0.0
    %2409 = vmatpush2.msra.mxu0 0.0
    %2410 = vmatprep.subr.mxu0 0.0
    %2411 = vmatpush2.msra.mxu0 0.0
    %2412 = vmatprep.subr.mxu0 0.0
    %2413 = vmatpush2.msra.mxu0 0.0
    %2414 = vmatprep.subr.mxu0 0.0
    %2415 = vmatpush2.msra.mxu0 0.0
    %2416 = vmatprep.subr.mxu0 0.0
    %2417 = vmatpush2.msra.mxu0 0.0
    %2418 = vmatprep.subr.mxu0 0.0
    %2419 = vmatpush2.msra.mxu0 0.0
    %2420 = vmatprep.subr.mxu0 0.0
    %2421 = vmatpush2.msra.mxu0 0.0
    %2422 = vmatprep.subr.mxu0 0.0
    %2423 = vmatpush2.msra.mxu0 0.0
    %2424 = vmatprep.subr.mxu0 0.0
    %2425 = vmatpush2.msra.mxu0 0.0
    %2426 = vmatprep.subr.mxu0 0.0
    %2427 = vmatpush2.msra.mxu0 0.0
    %2428 = vmatprep.subr.mxu0 0.0
    %2429 = vmatpush2.msra.mxu0 0.0
    %2430 = vmatprep.subr.mxu0 0.0
    %2431 = vmatpush2.msra.mxu0 0.0
    %2432 = vmatprep.subr.mxu0 0.0
    %2433 = vmatpush2.msra.mxu0 0.0
    %2434 = vmatprep.subr.mxu0 0.0
    %2435 = vmatpush2.msra.mxu0 0.0
    %2436 = vmatprep.subr.mxu0 0.0
    %2437 = vmatpush2.msra.mxu0 0.0
    %2438 = vmatprep.subr.mxu0 0.0
    %2439 = vmatpush2.msra.mxu0 0.0
    %2440 = vmatprep.mubr.f32.mxu0 0.0
    %2441 = vmatmul.mubr.f32.gmra.mxu0 %v2374
    %v2442 = vpop.f32.mrf.mxu0
    %v2443 = vadd.f32 %v272, %v2442
    %v2444 = vpop.f32.mrf.mxu0
    %2445 = vdwg.mxu0
    %v2446 = vmul.f32 %v361, %v2045
    %v2447 = vadd.f32 %v2446, %v2443
    %v2448 = vmul.f32 %v2048, %v352
    %v2449 = vsub.f32 %v2447, %v2448
    %vm2450 = vcmp.gt.f32.partialorder %v2449, %v352
    %v2451 = vsel %vm2450, 1, 0
    %v2452 = vcvt.s32.f32 %v2451
    %v2454 = vsel %vm274, %v2452, 0
    %2456 = vmatprep.subr.mxu0 0.0
    %2457 = vmatpush1.msra.mxu0 0.0
    %2458 = vmatprep.subr.mxu0 0.0
    %2459 = vmatpush1.msra.mxu0 0.0
    %2460 = vmatprep.subr.mxu0 0.0
    %2461 = vmatpush1.msra.mxu0 0.0
    %2462 = vmatprep.subr.mxu0 0.0
    %2463 = vmatpush1.msra.mxu0 0.0
    %2464 = vmatprep.subr.mxu0 0.0
    %2465 = vmatpush1.msra.mxu0 0.0
    %2466 = vmatprep.subr.mxu0 0.0
    %2467 = vmatpush1.msra.mxu0 0.0
    %2468 = vmatprep.subr.mxu0 0.0
    %2469 = vmatpush1.msra.mxu0 0.0
    %2470 = vmatprep.subr.mxu0 0.0
    %2471 = vmatpush1.msra.mxu0 0.0
    %2472 = vmatprep.subr.mxu0 0.0
    %2473 = vmatpush1.msra.mxu0 0.0
    %2474 = vmatprep.subr.mxu0 0.0
    %2475 = vmatpush1.msra.mxu0 0.0
    %2476 = vmatprep.subr.mxu0 0.0
    %2477 = vmatpush1.msra.mxu0 0.0
    %2478 = vmatprep.subr.mxu0 0.0
    %2479 = vmatpush1.msra.mxu0 0.0
    %2480 = vmatprep.subr.mxu0 0.0
    %2481 = vmatpush1.msra.mxu0 %v137
    %2482 = vmatprep.subr.mxu0 0.0
    %2483 = vmatpush1.msra.mxu0 %v136
    %2484 = vmatprep.subr.mxu0 0.0
    %2485 = vmatpush1.msra.mxu0 %v135
    %2486 = vmatprep.subr.mxu0 0.0
    %2487 = vmatpush1.msra.mxu0 %v134
    %2488 = vmatprep.subr.mxu0 0.0
    %2489 = vmatpush2.msra.mxu0 0.0
    %2490 = vmatprep.subr.mxu0 0.0
    %2491 = vmatpush2.msra.mxu0 0.0
    %2492 = vmatprep.subr.mxu0 0.0
    %2493 = vmatpush2.msra.mxu0 0.0
    %2494 = vmatprep.subr.mxu0 0.0
    %2495 = vmatpush2.msra.mxu0 0.0
    %2496 = vmatprep.subr.mxu0 0.0
    %2497 = vmatpush2.msra.mxu0 0.0
    %2498 = vmatprep.subr.mxu0 0.0
    %2499 = vmatpush2.msra.mxu0 0.0
    %2500 = vmatprep.subr.mxu0 0.0
    %2501 = vmatpush2.msra.mxu0 0.0
    %2502 = vmatprep.subr.mxu0 0.0
    %2503 = vmatpush2.msra.mxu0 0.0
    %2504 = vmatprep.subr.mxu0 0.0
    %2505 = vmatpush2.msra.mxu0 0.0
    %2506 = vmatprep.subr.mxu0 0.0
    %2507 = vmatpush2.msra.mxu0 0.0
    %2508 = vmatprep.subr.mxu0 0.0
    %2509 = vmatpush2.msra.mxu0 0.0
    %2510 = vmatprep.subr.mxu0 0.0
    %2511 = vmatpush2.msra.mxu0 0.0
    %2512 = vmatprep.subr.mxu0 0.0
    %2513 = vmatpush2.msra.mxu0 0.0
    %2514 = vmatprep.subr.mxu0 0.0
    %2515 = vmatpush2.msra.mxu0 0.0
    %2516 = vmatprep.subr.mxu0 0.0
    %2517 = vmatpush2.msra.mxu0 0.0
    %2518 = vmatprep.subr.mxu0 0.0
    %2519 = vmatpush2.msra.mxu0 0.0
    %2520 = vmatprep.mubr.f32.mxu0 0.0
    %2521 = vmatmul.mubr.f32.gmra.mxu0 %v2454
    %v2522 = vpop.f32.mrf.mxu0
    %v2523 = vadd.f32 %v374, %v2522
    %v2524 = vpop.f32.mrf.mxu0
    %2525 = vdwg.mxu0
    %v2526 = vmul.f32 %v462, %v2125
    %v2527 = vadd.f32 %v2526, %v2523
    %v2528 = vmul.f32 %v2128, %v453
    %v2529 = vsub.f32 %v2527, %v2528
    %vm2530 = vcmp.gt.f32.partialorder %v2529, %v453
    %v2531 = vsel %vm2530, 1, 0
    %v2532 = vcvt.s32.f32 %v2531
    %v2534 = vsel %vm274, %v2532, 0
    %2536 = vmatprep.subr.mxu0 0.0
    %2537 = vmatpush1.msra.mxu0 0.0
    %2538 = vmatprep.subr.mxu0 0.0
    %2539 = vmatpush1.msra.mxu0 0.0
    %2540 = vmatprep.subr.mxu0 0.0
    %2541 = vmatpush1.msra.mxu0 0.0
    %2542 = vmatprep.subr.mxu0 0.0
    %2543 = vmatpush1.msra.mxu0 0.0
    %2544 = vmatprep.subr.mxu0 0.0
    %2545 = vmatpush1.msra.mxu0 0.0
    %2546 = vmatprep.subr.mxu0 0.0
    %2547 = vmatpush1.msra.mxu0 0.0
    %2548 = vmatprep.subr.mxu0 0.0
    %2549 = vmatpush1.msra.mxu0 0.0
    %2550 = vmatprep.subr.mxu0 0.0
    %2551 = vmatpush1.msra.mxu0 0.0
    %2552 = vmatprep.subr.mxu0 0.0
    %2553 = vmatpush1.msra.mxu0 0.0
    %2554 = vmatprep.subr.mxu0 0.0
    %2555 = vmatpush1.msra.mxu0 0.0
    %2556 = vmatprep.subr.mxu0 0.0
    %2557 = vmatpush1.msra.mxu0 0.0
    %2558 = vmatprep.subr.mxu0 0.0
    %2559 = vmatpush1.msra.mxu0 0.0
    %2560 = vmatprep.subr.mxu0 0.0
    %2561 = vmatpush1.msra.mxu0 %v148
    %2562 = vmatprep.subr.mxu0 0.0
    %2563 = vmatpush1.msra.mxu0 %v147
    %2564 = vmatprep.subr.mxu0 0.0
    %2565 = vmatpush1.msra.mxu0 %v146
    %2566 = vmatprep.subr.mxu0 0.0
    %2567 = vmatpush1.msra.mxu0 %v145
    %2568 = vmatprep.subr.mxu0 0.0
    %2569 = vmatpush2.msra.mxu0 0.0
    %2570 = vmatprep.subr.mxu0 0.0
    %2571 = vmatpush2.msra.mxu0 0.0
    %2572 = vmatprep.subr.mxu0 0.0
    %2573 = vmatpush2.msra.mxu0 0.0
    %2574 = vmatprep.subr.mxu0 0.0
    %2575 = vmatpush2.msra.mxu0 0.0
    %2576 = vmatprep.subr.mxu0 0.0
    %2577 = vmatpush2.msra.mxu0 0.0
    %2578 = vmatprep.subr.mxu0 0.0
    %2579 = vmatpush2.msra.mxu0 0.0
    %2580 = vmatprep.subr.mxu0 0.0
    %2581 = vmatpush2.msra.mxu0 0.0
    %2582 = vmatprep.subr.mxu0 0.0
    %2583 = vmatpush2.msra.mxu0 0.0
    %2584 = vmatprep.subr.mxu0 0.0
    %2585 = vmatpush2.msra.mxu0 0.0
    %2586 = vmatprep.subr.mxu0 0.0
    %2587 = vmatpush2.msra.mxu0 0.0
    %2588 = vmatprep.subr.mxu0 0.0
    %2589 = vmatpush2.msra.mxu0 0.0
    %2590 = vmatprep.subr.mxu0 0.0
    %2591 = vmatpush2.msra.mxu0 0.0
    %2592 = vmatprep.subr.mxu0 0.0
    %2593 = vmatpush2.msra.mxu0 0.0
    %2594 = vmatprep.subr.mxu0 0.0
    %2595 = vmatpush2.msra.mxu0 0.0
    %2596 = vmatprep.subr.mxu0 0.0
    %2597 = vmatpush2.msra.mxu0 0.0
    %2598 = vmatprep.subr.mxu0 0.0
    %2599 = vmatpush2.msra.mxu0 0.0
    %2600 = vmatprep.mubr.f32.mxu0 0.0
    %2601 = vmatmul.mubr.f32.gmra.mxu0 %v2534
    %v2602 = vpop.f32.mrf.mxu0
    %v2603 = vadd.f32 %v475, %v2602
    %v2604 = vpop.f32.mrf.mxu0
    %2605 = vdwg.mxu0
    %v2606 = vmul.f32 %v563, %v2205
    %v2607 = vadd.f32 %v2606, %v2603
    %v2608 = vmul.f32 %v2208, %v554
    %v2609 = vsub.f32 %v2607, %v2608
    %vm2610 = vcmp.gt.f32.partialorder %v2609, %v554
    %v2611 = vsel %vm2610, 1, 0
    %v2612 = vcvt.s32.f32 %v2611
    %v2614 = vsel %vm274, %v2612, 0
    %2616 = vmatprep.subr.mxu0 0.0
    %2617 = vmatpush1.msra.mxu0 0.0
    %2618 = vmatprep.subr.mxu0 0.0
    %2619 = vmatpush1.msra.mxu0 0.0
    %2620 = vmatprep.subr.mxu0 0.0
    %2621 = vmatpush1.msra.mxu0 0.0
    %2622 = vmatprep.subr.mxu0 0.0
    %2623 = vmatpush1.msra.mxu0 0.0
    %2624 = vmatprep.subr.mxu0 0.0
    %2625 = vmatpush1.msra.mxu0 0.0
    %2626 = vmatprep.subr.mxu0 0.0
    %2627 = vmatpush1.msra.mxu0 0.0
    %2628 = vmatprep.subr.mxu0 0.0
    %2629 = vmatpush1.msra.mxu0 0.0
    %2630 = vmatprep.subr.mxu0 0.0
    %2631 = vmatpush1.msra.mxu0 0.0
    %2632 = vmatprep.subr.mxu0 0.0
    %2633 = vmatpush1.msra.mxu0 0.0
    %2634 = vmatprep.subr.mxu0 0.0
    %2635 = vmatpush1.msra.mxu0 0.0
    %2636 = vmatprep.subr.mxu0 0.0
    %2637 = vmatpush1.msra.mxu0 0.0
    %2638 = vmatprep.subr.mxu0 0.0
    %2639 = vmatpush1.msra.mxu0 0.0
    %2640 = vmatprep.subr.mxu0 0.0
    %2641 = vmatpush1.msra.mxu0 %v159
    %2642 = vmatprep.subr.mxu0 0.0
    %2643 = vmatpush1.msra.mxu0 %v158
    %2644 = vmatprep.subr.mxu0 0.0
    %2645 = vmatpush1.msra.mxu0 %v157
    %2646 = vmatprep.subr.mxu0 0.0
    %2647 = vmatpush1.msra.mxu0 %v156
    %2648 = vmatprep.subr.mxu0 0.0
    %2649 = vmatpush2.msra.mxu0 0.0
    %2650 = vmatprep.subr.mxu0 0.0
    %2651 = vmatpush2.msra.mxu0 0.0
    %2652 = vmatprep.subr.mxu0 0.0
    %2653 = vmatpush2.msra.mxu0 0.0
    %2654 = vmatprep.subr.mxu0 0.0
    %2655 = vmatpush2.msra.mxu0 0.0
    %2656 = vmatprep.subr.mxu0 0.0
    %2657 = vmatpush2.msra.mxu0 0.0
    %2658 = vmatprep.subr.mxu0 0.0
    %2659 = vmatpush2.msra.mxu0 0.0
    %2660 = vmatprep.subr.mxu0 0.0
    %2661 = vmatpush2.msra.mxu0 0.0
    %2662 = vmatprep.subr.mxu0 0.0
    %2663 = vmatpush2.msra.mxu0 0.0
    %2664 = vmatprep.subr.mxu0 0.0
    %2665 = vmatpush2.msra.mxu0 0.0
    %2666 = vmatprep.subr.mxu0 0.0
    %2667 = vmatpush2.msra.mxu0 0.0
    %2668 = vmatprep.subr.mxu0 0.0
    %2669 = vmatpush2.msra.mxu0 0.0
    %2670 = vmatprep.subr.mxu0 0.0
    %2671 = vmatpush2.msra.mxu0 0.0
    %2672 = vmatprep.subr.mxu0 0.0
    %2673 = vmatpush2.msra.mxu0 0.0
    %2674 = vmatprep.subr.mxu0 0.0
    %2675 = vmatpush2.msra.mxu0 0.0
    %2676 = vmatprep.subr.mxu0 0.0
    %2677 = vmatpush2.msra.mxu0 0.0
    %2678 = vmatprep.subr.mxu0 0.0
    %2679 = vmatpush2.msra.mxu0 0.0
    %2680 = vmatprep.mubr.f32.mxu0 0.0
    %2681 = vmatmul.mubr.f32.gmra.mxu0 %v2614
    %v2682 = vpop.f32.mrf.mxu0
    %v2683 = vadd.f32 %v576, %v2682
    %v2684 = vpop.f32.mrf.mxu0
    %2685 = vdwg.mxu0
    %v2686 = vmul.f32 %v664, %v2285
    %v2687 = vadd.f32 %v2686, %v2683
    %v2688 = vmul.f32 %v2288, %v655
    %v2689 = vsub.f32 %v2687, %v2688
    %vm2690 = vcmp.gt.f32.partialorder %v2689, %v655
    %v2691 = vsel %vm2690, 1, 0
    %v2692 = vcvt.s32.f32 %v2691
    %s2693 = scalar_lea.vmem %s15, 40
    %2694 = vst.msk [vmem:[%s2693] sm:$0xff] %vm673, %v2692
    %s2695 = scalar_lea.vmem [#allocation2], 48
    %v2696 = vld [vmem:[%s2695] sm:$0xff]
    %v2698 = vsel %vm172, %v2696, 0
    %2700 = vmatprep.subr.mxu0 0.0
    %2701 = vmatpush1.msra.mxu0 0.0
    %2702 = vmatprep.subr.mxu0 0.0
    %2703 = vmatpush1.msra.mxu0 0.0
    %2704 = vmatprep.subr.mxu0 0.0
    %2705 = vmatpush1.msra.mxu0 0.0
    %2706 = vmatprep.subr.mxu0 0.0
    %2707 = vmatpush1.msra.mxu0 0.0
    %2708 = vmatprep.subr.mxu0 0.0
    %2709 = vmatpush1.msra.mxu0 0.0
    %2710 = vmatprep.subr.mxu0 0.0
    %2711 = vmatpush1.msra.mxu0 0.0
    %2712 = vmatprep.subr.mxu0 0.0
    %2713 = vmatpush1.msra.mxu0 0.0
    %2714 = vmatprep.subr.mxu0 0.0
    %2715 = vmatpush1.msra.mxu0 0.0
    %2716 = vmatprep.subr.mxu0 0.0
    %2717 = vmatpush1.msra.mxu0 0.0
    %2718 = vmatprep.subr.mxu0 0.0
    %2719 = vmatpush1.msra.mxu0 0.0
    %2720 = vmatprep.subr.mxu0 0.0
    %2721 = vmatpush1.msra.mxu0 0.0
    %2722 = vmatprep.subr.mxu0 0.0
    %2723 = vmatpush1.msra.mxu0 0.0
    %2724 = vmatprep.subr.mxu0 0.0
    %2725 = vmatpush1.msra.mxu0 0.0
    %2726 = vmatprep.subr.mxu0 0.0
    %2727 = vmatpush1.msra.mxu0 0.0
    %2728 = vmatprep.subr.mxu0 0.0
    %2729 = vmatpush1.msra.mxu0 %v117
    %2730 = vmatprep.subr.mxu0 0.0
    %2731 = vmatpush1.msra.mxu0 %v116
    %2732 = vmatprep.subr.mxu0 0.0
    %2733 = vmatpush2.msra.mxu0 0.0
    %2734 = vmatprep.subr.mxu0 0.0
    %2735 = vmatpush2.msra.mxu0 0.0
    %2736 = vmatprep.subr.mxu0 0.0
    %2737 = vmatpush2.msra.mxu0 0.0
    %2738 = vmatprep.subr.mxu0 0.0
    %2739 = vmatpush2.msra.mxu0 0.0
    %2740 = vmatprep.subr.mxu0 0.0
    %2741 = vmatpush2.msra.mxu0 0.0
    %2742 = vmatprep.subr.mxu0 0.0
    %2743 = vmatpush2.msra.mxu0 0.0
    %2744 = vmatprep.subr.mxu0 0.0
    %2745 = vmatpush2.msra.mxu0 0.0
    %2746 = vmatprep.subr.mxu0 0.0
    %2747 = vmatpush2.msra.mxu0 0.0
    %2748 = vmatprep.subr.mxu0 0.0
    %2749 = vmatpush2.msra.mxu0 0.0
    %2750 = vmatprep.subr.mxu0 0.0
    %2751 = vmatpush2.msra.mxu0 0.0
    %2752 = vmatprep.subr.mxu0 0.0
    %2753 = vmatpush2.msra.mxu0 0.0
    %2754 = vmatprep.subr.mxu0 0.0
    %2755 = vmatpush2.msra.mxu0 0.0
    %2756 = vmatprep.subr.mxu0 0.0
    %2757 = vmatpush2.msra.mxu0 0.0
    %2758 = vmatprep.subr.mxu0 0.0
    %2759 = vmatpush2.msra.mxu0 0.0
    %2760 = vmatprep.subr.mxu0 0.0
    %2761 = vmatpush2.msra.mxu0 0.0
    %2762 = vmatprep.subr.mxu0 0.0
    %2763 = vmatpush2.msra.mxu0 0.0
    %2764 = vmatprep.mubr.f32.mxu0 0.0
    %2765 = vmatmul.mubr.f32.gmra.mxu0 %v2698
    %v2766 = vpop.f32.mrf.mxu0
    %v2767 = vadd.f32 %v170, %v2766
    %v2768 = vpop.f32.mrf.mxu0
    %2769 = vdwg.mxu0
    %v2770 = vmul.f32 %v259, %v2369
    %v2771 = vadd.f32 %v2770, %v2767
    %v2772 = vmul.f32 %v2372, %v250
    %v2773 = vsub.f32 %v2771, %v2772
    %vm2774 = vcmp.gt.f32.partialorder %v2773, %v250
    %v2775 = vsel %vm2774, 1, 0
    %v2776 = vcvt.s32.f32 %v2775
    %v2778 = vsel %vm274, %v2776, 0
    %2780 = vmatprep.subr.mxu0 0.0
    %2781 = vmatpush1.msra.mxu0 0.0
    %2782 = vmatprep.subr.mxu0 0.0
    %2783 = vmatpush1.msra.mxu0 0.0
    %2784 = vmatprep.subr.mxu0 0.0
    %2785 = vmatpush1.msra.mxu0 0.0
    %2786 = vmatprep.subr.mxu0 0.0
    %2787 = vmatpush1.msra.mxu0 0.0
    %2788 = vmatprep.subr.mxu0 0.0
    %2789 = vmatpush1.msra.mxu0 0.0
    %2790 = vmatprep.subr.mxu0 0.0
    %2791 = vmatpush1.msra.mxu0 0.0
    %2792 = vmatprep.subr.mxu0 0.0
    %2793 = vmatpush1.msra.mxu0 0.0
    %2794 = vmatprep.subr.mxu0 0.0
    %2795 = vmatpush1.msra.mxu0 0.0
    %2796 = vmatprep.subr.mxu0 0.0
    %2797 = vmatpush1.msra.mxu0 0.0
    %2798 = vmatprep.subr.mxu0 0.0
    %2799 = vmatpush1.msra.mxu0 0.0
    %2800 = vmatprep.subr.mxu0 0.0
    %2801 = vmatpush1.msra.mxu0 0.0
    %2802 = vmatprep.subr.mxu0 0.0
    %2803 = vmatpush1.msra.mxu0 0.0
    %2804 = vmatprep.subr.mxu0 0.0
    %2805 = vmatpush1.msra.mxu0 %v126
    %2806 = vmatprep.subr.mxu0 0.0
    %2807 = vmatpush1.msra.mxu0 %v125
    %2808 = vmatprep.subr.mxu0 0.0
    %2809 = vmatpush1.msra.mxu0 %v124
    %2810 = vmatprep.subr.mxu0 0.0
    %2811 = vmatpush1.msra.mxu0 %v123
    %2812 = vmatprep.subr.mxu0 0.0
    %2813 = vmatpush2.msra.mxu0 0.0
    %2814 = vmatprep.subr.mxu0 0.0
    %2815 = vmatpush2.msra.mxu0 0.0
    %2816 = vmatprep.subr.mxu0 0.0
    %2817 = vmatpush2.msra.mxu0 0.0
    %2818 = vmatprep.subr.mxu0 0.0
    %2819 = vmatpush2.msra.mxu0 0.0
    %2820 = vmatprep.subr.mxu0 0.0
    %2821 = vmatpush2.msra.mxu0 0.0
    %2822 = vmatprep.subr.mxu0 0.0
    %2823 = vmatpush2.msra.mxu0 0.0
    %2824 = vmatprep.subr.mxu0 0.0
    %2825 = vmatpush2.msra.mxu0 0.0
    %2826 = vmatprep.subr.mxu0 0.0
    %2827 = vmatpush2.msra.mxu0 0.0
    %2828 = vmatprep.subr.mxu0 0.0
    %2829 = vmatpush2.msra.mxu0 0.0
    %2830 = vmatprep.subr.mxu0 0.0
    %2831 = vmatpush2.msra.mxu0 0.0
    %2832 = vmatprep.subr.mxu0 0.0
    %2833 = vmatpush2.msra.mxu0 0.0
    %2834 = vmatprep.subr.mxu0 0.0
    %2835 = vmatpush2.msra.mxu0 0.0
    %2836 = vmatprep.subr.mxu0 0.0
    %2837 = vmatpush2.msra.mxu0 0.0
    %2838 = vmatprep.subr.mxu0 0.0
    %2839 = vmatpush2.msra.mxu0 0.0
    %2840 = vmatprep.subr.mxu0 0.0
    %2841 = vmatpush2.msra.mxu0 0.0
    %2842 = vmatprep.subr.mxu0 0.0
    %2843 = vmatpush2.msra.mxu0 0.0
    %2844 = vmatprep.mubr.f32.mxu0 0.0
    %2845 = vmatmul.mubr.f32.gmra.mxu0 %v2778
    %v2846 = vpop.f32.mrf.mxu0
    %v2847 = vadd.f32 %v272, %v2846
    %v2848 = vpop.f32.mrf.mxu0
    %2849 = vdwg.mxu0
    %v2850 = vmul.f32 %v361, %v2449
    %v2851 = vadd.f32 %v2850, %v2847
    %v2852 = vmul.f32 %v2452, %v352
    %v2853 = vsub.f32 %v2851, %v2852
    %vm2854 = vcmp.gt.f32.partialorder %v2853, %v352
    %v2855 = vsel %vm2854, 1, 0
    %v2856 = vcvt.s32.f32 %v2855
    %v2858 = vsel %vm274, %v2856, 0
    %2860 = vmatprep.subr.mxu0 0.0
    %2861 = vmatpush1.msra.mxu0 0.0
    %2862 = vmatprep.subr.mxu0 0.0
    %2863 = vmatpush1.msra.mxu0 0.0
    %2864 = vmatprep.subr.mxu0 0.0
    %2865 = vmatpush1.msra.mxu0 0.0
    %2866 = vmatprep.subr.mxu0 0.0
    %2867 = vmatpush1.msra.mxu0 0.0
    %2868 = vmatprep.subr.mxu0 0.0
    %2869 = vmatpush1.msra.mxu0 0.0
    %2870 = vmatprep.subr.mxu0 0.0
    %2871 = vmatpush1.msra.mxu0 0.0
    %2872 = vmatprep.subr.mxu0 0.0
    %2873 = vmatpush1.msra.mxu0 0.0
    %2874 = vmatprep.subr.mxu0 0.0
    %2875 = vmatpush1.msra.mxu0 0.0
    %2876 = vmatprep.subr.mxu0 0.0
    %2877 = vmatpush1.msra.mxu0 0.0
    %2878 = vmatprep.subr.mxu0 0.0
    %2879 = vmatpush1.msra.mxu0 0.0
    %2880 = vmatprep.subr.mxu0 0.0
    %2881 = vmatpush1.msra.mxu0 0.0
    %2882 = vmatprep.subr.mxu0 0.0
    %2883 = vmatpush1.msra.mxu0 0.0
    %2884 = vmatprep.subr.mxu0 0.0
    %2885 = vmatpush1.msra.mxu0 %v137
    %2886 = vmatprep.subr.mxu0 0.0
    %2887 = vmatpush1.msra.mxu0 %v136
    %2888 = vmatprep.subr.mxu0 0.0
    %2889 = vmatpush1.msra.mxu0 %v135
    %2890 = vmatprep.subr.mxu0 0.0
    %2891 = vmatpush1.msra.mxu0 %v134
    %2892 = vmatprep.subr.mxu0 0.0
    %2893 = vmatpush2.msra.mxu0 0.0
    %2894 = vmatprep.subr.mxu0 0.0
    %2895 = vmatpush2.msra.mxu0 0.0
    %2896 = vmatprep.subr.mxu0 0.0
    %2897 = vmatpush2.msra.mxu0 0.0
    %2898 = vmatprep.subr.mxu0 0.0
    %2899 = vmatpush2.msra.mxu0 0.0
    %2900 = vmatprep.subr.mxu0 0.0
    %2901 = vmatpush2.msra.mxu0 0.0
    %2902 = vmatprep.subr.mxu0 0.0
    %2903 = vmatpush2.msra.mxu0 0.0
    %2904 = vmatprep.subr.mxu0 0.0
    %2905 = vmatpush2.msra.mxu0 0.0
    %2906 = vmatprep.subr.mxu0 0.0
    %2907 = vmatpush2.msra.mxu0 0.0
    %2908 = vmatprep.subr.mxu0 0.0
    %2909 = vmatpush2.msra.mxu0 0.0
    %2910 = vmatprep.subr.mxu0 0.0
    %2911 = vmatpush2.msra.mxu0 0.0
    %2912 = vmatprep.subr.mxu0 0.0
    %2913 = vmatpush2.msra.mxu0 0.0
    %2914 = vmatprep.subr.mxu0 0.0
    %2915 = vmatpush2.msra.mxu0 0.0
    %2916 = vmatprep.subr.mxu0 0.0
    %2917 = vmatpush2.msra.mxu0 0.0
    %2918 = vmatprep.subr.mxu0 0.0
    %2919 = vmatpush2.msra.mxu0 0.0
    %2920 = vmatprep.subr.mxu0 0.0
    %2921 = vmatpush2.msra.mxu0 0.0
    %2922 = vmatprep.subr.mxu0 0.0
    %2923 = vmatpush2.msra.mxu0 0.0
    %2924 = vmatprep.mubr.f32.mxu0 0.0
    %2925 = vmatmul.mubr.f32.gmra.mxu0 %v2858
    %v2926 = vpop.f32.mrf.mxu0
    %v2927 = vadd.f32 %v374, %v2926
    %v2928 = vpop.f32.mrf.mxu0
    %2929 = vdwg.mxu0
    %v2930 = vmul.f32 %v462, %v2529
    %v2931 = vadd.f32 %v2930, %v2927
    %v2932 = vmul.f32 %v2532, %v453
    %v2933 = vsub.f32 %v2931, %v2932
    %vm2934 = vcmp.gt.f32.partialorder %v2933, %v453
    %v2935 = vsel %vm2934, 1, 0
    %v2936 = vcvt.s32.f32 %v2935
    %v2938 = vsel %vm274, %v2936, 0
    %2940 = vmatprep.subr.mxu0 0.0
    %2941 = vmatpush1.msra.mxu0 0.0
    %2942 = vmatprep.subr.mxu0 0.0
    %2943 = vmatpush1.msra.mxu0 0.0
    %2944 = vmatprep.subr.mxu0 0.0
    %2945 = vmatpush1.msra.mxu0 0.0
    %2946 = vmatprep.subr.mxu0 0.0
    %2947 = vmatpush1.msra.mxu0 0.0
    %2948 = vmatprep.subr.mxu0 0.0
    %2949 = vmatpush1.msra.mxu0 0.0
    %2950 = vmatprep.subr.mxu0 0.0
    %2951 = vmatpush1.msra.mxu0 0.0
    %2952 = vmatprep.subr.mxu0 0.0
    %2953 = vmatpush1.msra.mxu0 0.0
    %2954 = vmatprep.subr.mxu0 0.0
    %2955 = vmatpush1.msra.mxu0 0.0
    %2956 = vmatprep.subr.mxu0 0.0
    %2957 = vmatpush1.msra.mxu0 0.0
    %2958 = vmatprep.subr.mxu0 0.0
    %2959 = vmatpush1.msra.mxu0 0.0
    %2960 = vmatprep.subr.mxu0 0.0
    %2961 = vmatpush1.msra.mxu0 0.0
    %2962 = vmatprep.subr.mxu0 0.0
    %2963 = vmatpush1.msra.mxu0 0.0
    %2964 = vmatprep.subr.mxu0 0.0
    %2965 = vmatpush1.msra.mxu0 %v148
    %2966 = vmatprep.subr.mxu0 0.0
    %2967 = vmatpush1.msra.mxu0 %v147
    %2968 = vmatprep.subr.mxu0 0.0
    %2969 = vmatpush1.msra.mxu0 %v146
    %2970 = vmatprep.subr.mxu0 0.0
    %2971 = vmatpush1.msra.mxu0 %v145
    %2972 = vmatprep.subr.mxu0 0.0
    %2973 = vmatpush2.msra.mxu0 0.0
    %2974 = vmatprep.subr.mxu0 0.0
    %2975 = vmatpush2.msra.mxu0 0.0
    %2976 = vmatprep.subr.mxu0 0.0
    %2977 = vmatpush2.msra.mxu0 0.0
    %2978 = vmatprep.subr.mxu0 0.0
    %2979 = vmatpush2.msra.mxu0 0.0
    %2980 = vmatprep.subr.mxu0 0.0
    %2981 = vmatpush2.msra.mxu0 0.0
    %2982 = vmatprep.subr.mxu0 0.0
    %2983 = vmatpush2.msra.mxu0 0.0
    %2984 = vmatprep.subr.mxu0 0.0
    %2985 = vmatpush2.msra.mxu0 0.0
    %2986 = vmatprep.subr.mxu0 0.0
    %2987 = vmatpush2.msra.mxu0 0.0
    %2988 = vmatprep.subr.mxu0 0.0
    %2989 = vmatpush2.msra.mxu0 0.0
    %2990 = vmatprep.subr.mxu0 0.0
    %2991 = vmatpush2.msra.mxu0 0.0
    %2992 = vmatprep.subr.mxu0 0.0
    %2993 = vmatpush2.msra.mxu0 0.0
    %2994 = vmatprep.subr.mxu0 0.0
    %2995 = vmatpush2.msra.mxu0 0.0
    %2996 = vmatprep.subr.mxu0 0.0
    %2997 = vmatpush2.msra.mxu0 0.0
    %2998 = vmatprep.subr.mxu0 0.0
    %2999 = vmatpush2.msra.mxu0 0.0
    %3000 = vmatprep.subr.mxu0 0.0
    %3001 = vmatpush2.msra.mxu0 0.0
    %3002 = vmatprep.subr.mxu0 0.0
    %3003 = vmatpush2.msra.mxu0 0.0
    %3004 = vmatprep.mubr.f32.mxu0 0.0
    %3005 = vmatmul.mubr.f32.gmra.mxu0 %v2938
    %v3006 = vpop.f32.mrf.mxu0
    %v3007 = vadd.f32 %v475, %v3006
    %v3008 = vpop.f32.mrf.mxu0
    %3009 = vdwg.mxu0
    %v3010 = vmul.f32 %v563, %v2609
    %v3011 = vadd.f32 %v3010, %v3007
    %v3012 = vmul.f32 %v2612, %v554
    %v3013 = vsub.f32 %v3011, %v3012
    %vm3014 = vcmp.gt.f32.partialorder %v3013, %v554
    %v3015 = vsel %vm3014, 1, 0
    %v3016 = vcvt.s32.f32 %v3015
    %v3018 = vsel %vm274, %v3016, 0
    %3020 = vmatprep.subr.mxu0 0.0
    %3021 = vmatpush1.msra.mxu0 0.0
    %3022 = vmatprep.subr.mxu0 0.0
    %3023 = vmatpush1.msra.mxu0 0.0
    %3024 = vmatprep.subr.mxu0 0.0
    %3025 = vmatpush1.msra.mxu0 0.0
    %3026 = vmatprep.subr.mxu0 0.0
    %3027 = vmatpush1.msra.mxu0 0.0
    %3028 = vmatprep.subr.mxu0 0.0
    %3029 = vmatpush1.msra.mxu0 0.0
    %3030 = vmatprep.subr.mxu0 0.0
    %3031 = vmatpush1.msra.mxu0 0.0
    %3032 = vmatprep.subr.mxu0 0.0
    %3033 = vmatpush1.msra.mxu0 0.0
    %3034 = vmatprep.subr.mxu0 0.0
    %3035 = vmatpush1.msra.mxu0 0.0
    %3036 = vmatprep.subr.mxu0 0.0
    %3037 = vmatpush1.msra.mxu0 0.0
    %3038 = vmatprep.subr.mxu0 0.0
    %3039 = vmatpush1.msra.mxu0 0.0
    %3040 = vmatprep.subr.mxu0 0.0
    %3041 = vmatpush1.msra.mxu0 0.0
    %3042 = vmatprep.subr.mxu0 0.0
    %3043 = vmatpush1.msra.mxu0 0.0
    %3044 = vmatprep.subr.mxu0 0.0
    %3045 = vmatpush1.msra.mxu0 %v159
    %3046 = vmatprep.subr.mxu0 0.0
    %3047 = vmatpush1.msra.mxu0 %v158
    %3048 = vmatprep.subr.mxu0 0.0
    %3049 = vmatpush1.msra.mxu0 %v157
    %3050 = vmatprep.subr.mxu0 0.0
    %3051 = vmatpush1.msra.mxu0 %v156
    %3052 = vmatprep.subr.mxu0 0.0
    %3053 = vmatpush2.msra.mxu0 0.0
    %3054 = vmatprep.subr.mxu0 0.0
    %3055 = vmatpush2.msra.mxu0 0.0
    %3056 = vmatprep.subr.mxu0 0.0
    %3057 = vmatpush2.msra.mxu0 0.0
    %3058 = vmatprep.subr.mxu0 0.0
    %3059 = vmatpush2.msra.mxu0 0.0
    %3060 = vmatprep.subr.mxu0 0.0
    %3061 = vmatpush2.msra.mxu0 0.0
    %3062 = vmatprep.subr.mxu0 0.0
    %3063 = vmatpush2.msra.mxu0 0.0
    %3064 = vmatprep.subr.mxu0 0.0
    %3065 = vmatpush2.msra.mxu0 0.0
    %3066 = vmatprep.subr.mxu0 0.0
    %3067 = vmatpush2.msra.mxu0 0.0
    %3068 = vmatprep.subr.mxu0 0.0
    %3069 = vmatpush2.msra.mxu0 0.0
    %3070 = vmatprep.subr.mxu0 0.0
    %3071 = vmatpush2.msra.mxu0 0.0
    %3072 = vmatprep.subr.mxu0 0.0
    %3073 = vmatpush2.msra.mxu0 0.0
    %3074 = vmatprep.subr.mxu0 0.0
    %3075 = vmatpush2.msra.mxu0 0.0
    %3076 = vmatprep.subr.mxu0 0.0
    %3077 = vmatpush2.msra.mxu0 0.0
    %3078 = vmatprep.subr.mxu0 0.0
    %3079 = vmatpush2.msra.mxu0 0.0
    %3080 = vmatprep.subr.mxu0 0.0
    %3081 = vmatpush2.msra.mxu0 0.0
    %3082 = vmatprep.subr.mxu0 0.0
    %3083 = vmatpush2.msra.mxu0 0.0
    %3084 = vmatprep.mubr.f32.mxu0 0.0
    %3085 = vmatmul.mubr.f32.gmra.mxu0 %v3018
    %v3086 = vpop.f32.mrf.mxu0
    %v3087 = vadd.f32 %v576, %v3086
    %v3088 = vpop.f32.mrf.mxu0
    %3089 = vdwg.mxu0
    %v3090 = vmul.f32 %v664, %v2689
    %v3091 = vadd.f32 %v3090, %v3087
    %v3092 = vmul.f32 %v2692, %v655
    %v3093 = vsub.f32 %v3091, %v3092
    %vm3094 = vcmp.gt.f32.partialorder %v3093, %v655
    %v3095 = vsel %vm3094, 1, 0
    %v3096 = vcvt.s32.f32 %v3095
    %s3097 = scalar_lea.vmem %s15, 48
    %3098 = vst.msk [vmem:[%s3097] sm:$0xff] %vm673, %v3096
    %s3099 = scalar_lea.vmem [#allocation2], 56
    %v3100 = vld [vmem:[%s3099] sm:$0xff]
    %v3102 = vsel %vm172, %v3100, 0
    %3104 = vmatprep.subr.mxu0 0.0
    %3105 = vmatpush1.msra.mxu0 0.0
    %3106 = vmatprep.subr.mxu0 0.0
    %3107 = vmatpush1.msra.mxu0 0.0
    %3108 = vmatprep.subr.mxu0 0.0
    %3109 = vmatpush1.msra.mxu0 0.0
    %3110 = vmatprep.subr.mxu0 0.0
    %3111 = vmatpush1.msra.mxu0 0.0
    %3112 = vmatprep.subr.mxu0 0.0
    %3113 = vmatpush1.msra.mxu0 0.0
    %3114 = vmatprep.subr.mxu0 0.0
    %3115 = vmatpush1.msra.mxu0 0.0
    %3116 = vmatprep.subr.mxu0 0.0
    %3117 = vmatpush1.msra.mxu0 0.0
    %3118 = vmatprep.subr.mxu0 0.0
    %3119 = vmatpush1.msra.mxu0 0.0
    %3120 = vmatprep.subr.mxu0 0.0
    %3121 = vmatpush1.msra.mxu0 0.0
    %3122 = vmatprep.subr.mxu0 0.0
    %3123 = vmatpush1.msra.mxu0 0.0
    %3124 = vmatprep.subr.mxu0 0.0
    %3125 = vmatpush1.msra.mxu0 0.0
    %3126 = vmatprep.subr.mxu0 0.0
    %3127 = vmatpush1.msra.mxu0 0.0
    %3128 = vmatprep.subr.mxu0 0.0
    %3129 = vmatpush1.msra.mxu0 0.0
    %3130 = vmatprep.subr.mxu0 0.0
    %3131 = vmatpush1.msra.mxu0 0.0
    %3132 = vmatprep.subr.mxu0 0.0
    %3133 = vmatpush1.msra.mxu0 %v117
    %3134 = vmatprep.subr.mxu0 0.0
    %3135 = vmatpush1.msra.mxu0 %v116
    %3136 = vmatprep.subr.mxu0 0.0
    %3137 = vmatpush2.msra.mxu0 0.0
    %3138 = vmatprep.subr.mxu0 0.0
    %3139 = vmatpush2.msra.mxu0 0.0
    %3140 = vmatprep.subr.mxu0 0.0
    %3141 = vmatpush2.msra.mxu0 0.0
    %3142 = vmatprep.subr.mxu0 0.0
    %3143 = vmatpush2.msra.mxu0 0.0
    %3144 = vmatprep.subr.mxu0 0.0
    %3145 = vmatpush2.msra.mxu0 0.0
    %3146 = vmatprep.subr.mxu0 0.0
    %3147 = vmatpush2.msra.mxu0 0.0
    %3148 = vmatprep.subr.mxu0 0.0
    %3149 = vmatpush2.msra.mxu0 0.0
    %3150 = vmatprep.subr.mxu0 0.0
    %3151 = vmatpush2.msra.mxu0 0.0
    %3152 = vmatprep.subr.mxu0 0.0
    %3153 = vmatpush2.msra.mxu0 0.0
    %3154 = vmatprep.subr.mxu0 0.0
    %3155 = vmatpush2.msra.mxu0 0.0
    %3156 = vmatprep.subr.mxu0 0.0
    %3157 = vmatpush2.msra.mxu0 0.0
    %3158 = vmatprep.subr.mxu0 0.0
    %3159 = vmatpush2.msra.mxu0 0.0
    %3160 = vmatprep.subr.mxu0 0.0
    %3161 = vmatpush2.msra.mxu0 0.0
    %3162 = vmatprep.subr.mxu0 0.0
    %3163 = vmatpush2.msra.mxu0 0.0
    %3164 = vmatprep.subr.mxu0 0.0
    %3165 = vmatpush2.msra.mxu0 0.0
    %3166 = vmatprep.subr.mxu0 0.0
    %3167 = vmatpush2.msra.mxu0 0.0
    %3168 = vmatprep.mubr.f32.mxu0 0.0
    %3169 = vmatmul.mubr.f32.gmra.mxu0 %v3102
    %v3170 = vpop.f32.mrf.mxu0
    %v3171 = vadd.f32 %v170, %v3170
    %v3172 = vpop.f32.mrf.mxu0
    %3173 = vdwg.mxu0
    %v3174 = vmul.f32 %v259, %v2773
    %v3175 = vadd.f32 %v3174, %v3171
    %v3176 = vmul.f32 %v2776, %v250
    %v3177 = vsub.f32 %v3175, %v3176
    %vm3178 = vcmp.gt.f32.partialorder %v3177, %v250
    %v3179 = vsel %vm3178, 1, 0
    %v3180 = vcvt.s32.f32 %v3179
    %v3182 = vsel %vm274, %v3180, 0
    %3184 = vmatprep.subr.mxu0 0.0
    %3185 = vmatpush1.msra.mxu0 0.0
    %3186 = vmatprep.subr.mxu0 0.0
    %3187 = vmatpush1.msra.mxu0 0.0
    %3188 = vmatprep.subr.mxu0 0.0
    %3189 = vmatpush1.msra.mxu0 0.0
    %3190 = vmatprep.subr.mxu0 0.0
    %3191 = vmatpush1.msra.mxu0 0.0
    %3192 = vmatprep.subr.mxu0 0.0
    %3193 = vmatpush1.msra.mxu0 0.0
    %3194 = vmatprep.subr.mxu0 0.0
    %3195 = vmatpush1.msra.mxu0 0.0
    %3196 = vmatprep.subr.mxu0 0.0
    %3197 = vmatpush1.msra.mxu0 0.0
    %3198 = vmatprep.subr.mxu0 0.0
    %3199 = vmatpush1.msra.mxu0 0.0
    %3200 = vmatprep.subr.mxu0 0.0
    %3201 = vmatpush1.msra.mxu0 0.0
    %3202 = vmatprep.subr.mxu0 0.0
    %3203 = vmatpush1.msra.mxu0 0.0
    %3204 = vmatprep.subr.mxu0 0.0
    %3205 = vmatpush1.msra.mxu0 0.0
    %3206 = vmatprep.subr.mxu0 0.0
    %3207 = vmatpush1.msra.mxu0 0.0
    %3208 = vmatprep.subr.mxu0 0.0
    %3209 = vmatpush1.msra.mxu0 %v126
    %3210 = vmatprep.subr.mxu0 0.0
    %3211 = vmatpush1.msra.mxu0 %v125
    %3212 = vmatprep.subr.mxu0 0.0
    %3213 = vmatpush1.msra.mxu0 %v124
    %3214 = vmatprep.subr.mxu0 0.0
    %3215 = vmatpush1.msra.mxu0 %v123
    %3216 = vmatprep.subr.mxu0 0.0
    %3217 = vmatpush2.msra.mxu0 0.0
    %3218 = vmatprep.subr.mxu0 0.0
    %3219 = vmatpush2.msra.mxu0 0.0
    %3220 = vmatprep.subr.mxu0 0.0
    %3221 = vmatpush2.msra.mxu0 0.0
    %3222 = vmatprep.subr.mxu0 0.0
    %3223 = vmatpush2.msra.mxu0 0.0
    %3224 = vmatprep.subr.mxu0 0.0
    %3225 = vmatpush2.msra.mxu0 0.0
    %3226 = vmatprep.subr.mxu0 0.0
    %3227 = vmatpush2.msra.mxu0 0.0
    %3228 = vmatprep.subr.mxu0 0.0
    %3229 = vmatpush2.msra.mxu0 0.0
    %3230 = vmatprep.subr.mxu0 0.0
    %3231 = vmatpush2.msra.mxu0 0.0
    %3232 = vmatprep.subr.mxu0 0.0
    %3233 = vmatpush2.msra.mxu0 0.0
    %3234 = vmatprep.subr.mxu0 0.0
    %3235 = vmatpush2.msra.mxu0 0.0
    %3236 = vmatprep.subr.mxu0 0.0
    %3237 = vmatpush2.msra.mxu0 0.0
    %3238 = vmatprep.subr.mxu0 0.0
    %3239 = vmatpush2.msra.mxu0 0.0
    %3240 = vmatprep.subr.mxu0 0.0
    %3241 = vmatpush2.msra.mxu0 0.0
    %3242 = vmatprep.subr.mxu0 0.0
    %3243 = vmatpush2.msra.mxu0 0.0
    %3244 = vmatprep.subr.mxu0 0.0
    %3245 = vmatpush2.msra.mxu0 0.0
    %3246 = vmatprep.subr.mxu0 0.0
    %3247 = vmatpush2.msra.mxu0 0.0
    %3248 = vmatprep.mubr.f32.mxu0 0.0
    %3249 = vmatmul.mubr.f32.gmra.mxu0 %v3182
    %v3250 = vpop.f32.mrf.mxu0
    %v3251 = vadd.f32 %v272, %v3250
    %v3252 = vpop.f32.mrf.mxu0
    %3253 = vdwg.mxu0
    %v3254 = vmul.f32 %v361, %v2853
    %v3255 = vadd.f32 %v3254, %v3251
    %v3256 = vmul.f32 %v2856, %v352
    %v3257 = vsub.f32 %v3255, %v3256
    %vm3258 = vcmp.gt.f32.partialorder %v3257, %v352
    %v3259 = vsel %vm3258, 1, 0
    %v3260 = vcvt.s32.f32 %v3259
    %v3262 = vsel %vm274, %v3260, 0
    %3264 = vmatprep.subr.mxu0 0.0
    %3265 = vmatpush1.msra.mxu0 0.0
    %3266 = vmatprep.subr.mxu0 0.0
    %3267 = vmatpush1.msra.mxu0 0.0
    %3268 = vmatprep.subr.mxu0 0.0
    %3269 = vmatpush1.msra.mxu0 0.0
    %3270 = vmatprep.subr.mxu0 0.0
    %3271 = vmatpush1.msra.mxu0 0.0
    %3272 = vmatprep.subr.mxu0 0.0
    %3273 = vmatpush1.msra.mxu0 0.0
    %3274 = vmatprep.subr.mxu0 0.0
    %3275 = vmatpush1.msra.mxu0 0.0
    %3276 = vmatprep.subr.mxu0 0.0
    %3277 = vmatpush1.msra.mxu0 0.0
    %3278 = vmatprep.subr.mxu0 0.0
    %3279 = vmatpush1.msra.mxu0 0.0
    %3280 = vmatprep.subr.mxu0 0.0
    %3281 = vmatpush1.msra.mxu0 0.0
    %3282 = vmatprep.subr.mxu0 0.0
    %3283 = vmatpush1.msra.mxu0 0.0
    %3284 = vmatprep.subr.mxu0 0.0
    %3285 = vmatpush1.msra.mxu0 0.0
    %3286 = vmatprep.subr.mxu0 0.0
    %3287 = vmatpush1.msra.mxu0 0.0
    %3288 = vmatprep.subr.mxu0 0.0
    %3289 = vmatpush1.msra.mxu0 %v137
    %3290 = vmatprep.subr.mxu0 0.0
    %3291 = vmatpush1.msra.mxu0 %v136
    %3292 = vmatprep.subr.mxu0 0.0
    %3293 = vmatpush1.msra.mxu0 %v135
    %3294 = vmatprep.subr.mxu0 0.0
    %3295 = vmatpush1.msra.mxu0 %v134
    %3296 = vmatprep.subr.mxu0 0.0
    %3297 = vmatpush2.msra.mxu0 0.0
    %3298 = vmatprep.subr.mxu0 0.0
    %3299 = vmatpush2.msra.mxu0 0.0
    %3300 = vmatprep.subr.mxu0 0.0
    %3301 = vmatpush2.msra.mxu0 0.0
    %3302 = vmatprep.subr.mxu0 0.0
    %3303 = vmatpush2.msra.mxu0 0.0
    %3304 = vmatprep.subr.mxu0 0.0
    %3305 = vmatpush2.msra.mxu0 0.0
    %3306 = vmatprep.subr.mxu0 0.0
    %3307 = vmatpush2.msra.mxu0 0.0
    %3308 = vmatprep.subr.mxu0 0.0
    %3309 = vmatpush2.msra.mxu0 0.0
    %3310 = vmatprep.subr.mxu0 0.0
    %3311 = vmatpush2.msra.mxu0 0.0
    %3312 = vmatprep.subr.mxu0 0.0
    %3313 = vmatpush2.msra.mxu0 0.0
    %3314 = vmatprep.subr.mxu0 0.0
    %3315 = vmatpush2.msra.mxu0 0.0
    %3316 = vmatprep.subr.mxu0 0.0
    %3317 = vmatpush2.msra.mxu0 0.0
    %3318 = vmatprep.subr.mxu0 0.0
    %3319 = vmatpush2.msra.mxu0 0.0
    %3320 = vmatprep.subr.mxu0 0.0
    %3321 = vmatpush2.msra.mxu0 0.0
    %3322 = vmatprep.subr.mxu0 0.0
    %3323 = vmatpush2.msra.mxu0 0.0
    %3324 = vmatprep.subr.mxu0 0.0
    %3325 = vmatpush2.msra.mxu0 0.0
    %3326 = vmatprep.subr.mxu0 0.0
    %3327 = vmatpush2.msra.mxu0 0.0
    %3328 = vmatprep.mubr.f32.mxu0 0.0
    %3329 = vmatmul.mubr.f32.gmra.mxu0 %v3262
    %v3330 = vpop.f32.mrf.mxu0
    %v3331 = vadd.f32 %v374, %v3330
    %v3332 = vpop.f32.mrf.mxu0
    %3333 = vdwg.mxu0
    %v3334 = vmul.f32 %v462, %v2933
    %v3335 = vadd.f32 %v3334, %v3331
    %v3336 = vmul.f32 %v2936, %v453
    %v3337 = vsub.f32 %v3335, %v3336
    %vm3338 = vcmp.gt.f32.partialorder %v3337, %v453
    %v3339 = vsel %vm3338, 1, 0
    %v3340 = vcvt.s32.f32 %v3339
    %v3342 = vsel %vm274, %v3340, 0
    %3344 = vmatprep.subr.mxu0 0.0
    %3345 = vmatpush1.msra.mxu0 0.0
    %3346 = vmatprep.subr.mxu0 0.0
    %3347 = vmatpush1.msra.mxu0 0.0
    %3348 = vmatprep.subr.mxu0 0.0
    %3349 = vmatpush1.msra.mxu0 0.0
    %3350 = vmatprep.subr.mxu0 0.0
    %3351 = vmatpush1.msra.mxu0 0.0
    %3352 = vmatprep.subr.mxu0 0.0
    %3353 = vmatpush1.msra.mxu0 0.0
    %3354 = vmatprep.subr.mxu0 0.0
    %3355 = vmatpush1.msra.mxu0 0.0
    %3356 = vmatprep.subr.mxu0 0.0
    %3357 = vmatpush1.msra.mxu0 0.0
    %3358 = vmatprep.subr.mxu0 0.0
    %3359 = vmatpush1.msra.mxu0 0.0
    %3360 = vmatprep.subr.mxu0 0.0
    %3361 = vmatpush1.msra.mxu0 0.0
    %3362 = vmatprep.subr.mxu0 0.0
    %3363 = vmatpush1.msra.mxu0 0.0
    %3364 = vmatprep.subr.mxu0 0.0
    %3365 = vmatpush1.msra.mxu0 0.0
    %3366 = vmatprep.subr.mxu0 0.0
    %3367 = vmatpush1.msra.mxu0 0.0
    %3368 = vmatprep.subr.mxu0 0.0
    %3369 = vmatpush1.msra.mxu0 %v148
    %3370 = vmatprep.subr.mxu0 0.0
    %3371 = vmatpush1.msra.mxu0 %v147
    %3372 = vmatprep.subr.mxu0 0.0
    %3373 = vmatpush1.msra.mxu0 %v146
    %3374 = vmatprep.subr.mxu0 0.0
    %3375 = vmatpush1.msra.mxu0 %v145
    %3376 = vmatprep.subr.mxu0 0.0
    %3377 = vmatpush2.msra.mxu0 0.0
    %3378 = vmatprep.subr.mxu0 0.0
    %3379 = vmatpush2.msra.mxu0 0.0
    %3380 = vmatprep.subr.mxu0 0.0
    %3381 = vmatpush2.msra.mxu0 0.0
    %3382 = vmatprep.subr.mxu0 0.0
    %3383 = vmatpush2.msra.mxu0 0.0
    %3384 = vmatprep.subr.mxu0 0.0
    %3385 = vmatpush2.msra.mxu0 0.0
    %3386 = vmatprep.subr.mxu0 0.0
    %3387 = vmatpush2.msra.mxu0 0.0
    %3388 = vmatprep.subr.mxu0 0.0
    %3389 = vmatpush2.msra.mxu0 0.0
    %3390 = vmatprep.subr.mxu0 0.0
    %3391 = vmatpush2.msra.mxu0 0.0
    %3392 = vmatprep.subr.mxu0 0.0
    %3393 = vmatpush2.msra.mxu0 0.0
    %3394 = vmatprep.subr.mxu0 0.0
    %3395 = vmatpush2.msra.mxu0 0.0
    %3396 = vmatprep.subr.mxu0 0.0
    %3397 = vmatpush2.msra.mxu0 0.0
    %3398 = vmatprep.subr.mxu0 0.0
    %3399 = vmatpush2.msra.mxu0 0.0
    %3400 = vmatprep.subr.mxu0 0.0
    %3401 = vmatpush2.msra.mxu0 0.0
    %3402 = vmatprep.subr.mxu0 0.0
    %3403 = vmatpush2.msra.mxu0 0.0
    %3404 = vmatprep.subr.mxu0 0.0
    %3405 = vmatpush2.msra.mxu0 0.0
    %3406 = vmatprep.subr.mxu0 0.0
    %3407 = vmatpush2.msra.mxu0 0.0
    %3408 = vmatprep.mubr.f32.mxu0 0.0
    %3409 = vmatmul.mubr.f32.gmra.mxu0 %v3342
    %v3410 = vpop.f32.mrf.mxu0
    %v3411 = vadd.f32 %v475, %v3410
    %v3412 = vpop.f32.mrf.mxu0
    %3413 = vdwg.mxu0
    %v3414 = vmul.f32 %v563, %v3013
    %v3415 = vadd.f32 %v3414, %v3411
    %v3416 = vmul.f32 %v3016, %v554
    %v3417 = vsub.f32 %v3415, %v3416
    %vm3418 = vcmp.gt.f32.partialorder %v3417, %v554
    %v3419 = vsel %vm3418, 1, 0
    %v3420 = vcvt.s32.f32 %v3419
    %v3422 = vsel %vm274, %v3420, 0
    %3424 = vmatprep.subr.mxu0 0.0
    %3425 = vmatpush1.msra.mxu0 0.0
    %3426 = vmatprep.subr.mxu0 0.0
    %3427 = vmatpush1.msra.mxu0 0.0
    %3428 = vmatprep.subr.mxu0 0.0
    %3429 = vmatpush1.msra.mxu0 0.0
    %3430 = vmatprep.subr.mxu0 0.0
    %3431 = vmatpush1.msra.mxu0 0.0
    %3432 = vmatprep.subr.mxu0 0.0
    %3433 = vmatpush1.msra.mxu0 0.0
    %3434 = vmatprep.subr.mxu0 0.0
    %3435 = vmatpush1.msra.mxu0 0.0
    %3436 = vmatprep.subr.mxu0 0.0
    %3437 = vmatpush1.msra.mxu0 0.0
    %3438 = vmatprep.subr.mxu0 0.0
    %3439 = vmatpush1.msra.mxu0 0.0
    %3440 = vmatprep.subr.mxu0 0.0
    %3441 = vmatpush1.msra.mxu0 0.0
    %3442 = vmatprep.subr.mxu0 0.0
    %3443 = vmatpush1.msra.mxu0 0.0
    %3444 = vmatprep.subr.mxu0 0.0
    %3445 = vmatpush1.msra.mxu0 0.0
    %3446 = vmatprep.subr.mxu0 0.0
    %3447 = vmatpush1.msra.mxu0 0.0
    %3448 = vmatprep.subr.mxu0 0.0
    %3449 = vmatpush1.msra.mxu0 %v159
    %3450 = vmatprep.subr.mxu0 0.0
    %3451 = vmatpush1.msra.mxu0 %v158
    %3452 = vmatprep.subr.mxu0 0.0
    %3453 = vmatpush1.msra.mxu0 %v157
    %3454 = vmatprep.subr.mxu0 0.0
    %3455 = vmatpush1.msra.mxu0 %v156
    %3456 = vmatprep.subr.mxu0 0.0
    %3457 = vmatpush2.msra.mxu0 0.0
    %3458 = vmatprep.subr.mxu0 0.0
    %3459 = vmatpush2.msra.mxu0 0.0
    %3460 = vmatprep.subr.mxu0 0.0
    %3461 = vmatpush2.msra.mxu0 0.0
    %3462 = vmatprep.subr.mxu0 0.0
    %3463 = vmatpush2.msra.mxu0 0.0
    %3464 = vmatprep.subr.mxu0 0.0
    %3465 = vmatpush2.msra.mxu0 0.0
    %3466 = vmatprep.subr.mxu0 0.0
    %3467 = vmatpush2.msra.mxu0 0.0
    %3468 = vmatprep.subr.mxu0 0.0
    %3469 = vmatpush2.msra.mxu0 0.0
    %3470 = vmatprep.subr.mxu0 0.0
    %3471 = vmatpush2.msra.mxu0 0.0
    %3472 = vmatprep.subr.mxu0 0.0
    %3473 = vmatpush2.msra.mxu0 0.0
    %3474 = vmatprep.subr.mxu0 0.0
    %3475 = vmatpush2.msra.mxu0 0.0
    %3476 = vmatprep.subr.mxu0 0.0
    %3477 = vmatpush2.msra.mxu0 0.0
    %3478 = vmatprep.subr.mxu0 0.0
    %3479 = vmatpush2.msra.mxu0 0.0
    %3480 = vmatprep.subr.mxu0 0.0
    %3481 = vmatpush2.msra.mxu0 0.0
    %3482 = vmatprep.subr.mxu0 0.0
    %3483 = vmatpush2.msra.mxu0 0.0
    %3484 = vmatprep.subr.mxu0 0.0
    %3485 = vmatpush2.msra.mxu0 0.0
    %3486 = vmatprep.subr.mxu0 0.0
    %3487 = vmatpush2.msra.mxu0 0.0
    %3488 = vmatprep.mubr.f32.mxu0 0.0
    %3489 = vmatmul.mubr.f32.gmra.mxu0 %v3422
    %v3490 = vpop.f32.mrf.mxu0
    %v3491 = vadd.f32 %v576, %v3490
    %v3492 = vpop.f32.mrf.mxu0
    %3493 = vdwg.mxu0
    %v3494 = vmul.f32 %v664, %v3093
    %v3495 = vadd.f32 %v3494, %v3491
    %v3496 = vmul.f32 %v3096, %v655
    %v3497 = vsub.f32 %v3495, %v3496
    %vm3498 = vcmp.gt.f32.partialorder %v3497, %v655
    %v3499 = vsel %vm3498, 1, 0
    %v3500 = vcvt.s32.f32 %v3499
    %s3501 = scalar_lea.vmem %s15, 56
    %3502 = vst.msk [vmem:[%s3501] sm:$0xff] %vm673, %v3500
    // Predicated region
    $region82: #{tpu_custom_call.1} parent=1 // pred_check
      _
    $region83: #{tpu_custom_call.1} parent=1 // pred_check_branch
      %3504 = sbr.rel (0) target = $region85
    $region84: #{tpu_custom_call.1} parent=1 // pred_region
      _
    $region85: #{tpu_custom_call.1} parent=1 // pred_fallthru
      _
    // Predicated region
    $region86: #{tpu_custom_call.1} parent=1 // pred_check
      _
    $region87: #{tpu_custom_call.1} parent=1 // pred_check_branch
      %3506 = sbr.rel (0) target = $region89
    $region88: #{tpu_custom_call.1} parent=1 // pred_region
      _
    $region89: #{tpu_custom_call.1} parent=1 // pred_fallthru
      _
    %3507 = vsyncpa [#allocation3], 1
    %3508 = vsyncpa [#allocation5], 1
    %3509 = vsyncpa [#allocation8], 1

</llo_original>
